<compile_context>
chip_gen: v6e
topology: v6e:2x2x1
jax: 0.10.0
libtpu: 0.0.40
codegen_flags: <defaults>
</compile_context>

<pallas_src>
import functools

import jax
import jax.numpy as jnp
import numpy as np
from jax import lax
from jax.experimental import pallas as pl
from jax.experimental.pallas import tpu as pltpu


def _round_up(n, m):
    return ((n + m - 1) // m) * m


def _embedding_kernel(offsets_ref, x_ref, table_ref, out_ref):
    """One grid step: gather F embedding rows for tile_b batch rows.

    offsets_ref: (F,)          int32  SMEM (scalar prefetch)
    x_ref:       (tile_b, F)   int32  raw per-field indices
    table_ref:   (V, D)        f32    full table, VMEM resident across steps
    out_ref:     (tile_b, F*D) f32    concatenated per-field embeddings
    """
    tile_b, num_fields = x_ref.shape
    vocab, embed_dim = table_ref.shape

    x = x_ref[...]                                              # (tile_b, F)
    table = table_ref[...]                                      # (V, D)
    col = lax.broadcasted_iota(jnp.int32, (tile_b, vocab), 1)   # (tile_b, V)

    # F is small & static -> unrolled. Per field: one-hot row selector of width
    # V (exactly one 1.0 per row), MXU-pick the row, write its 32-lane slice of
    # the 128-lane output tile. HIGHEST precision keeps the selection exact.
    for f in range(num_fields):
        idx_f = x[:, f:f + 1] + offsets_ref[f]                  # (tile_b, 1)
        sel = (col == idx_f).astype(table.dtype)                # (tile_b, V)
        emb = jnp.dot(sel, table,
                      preferred_element_type=jnp.float32,
                      precision=lax.Precision.HIGHEST)          # (tile_b, D)
        out_ref[:, f * embed_dim:(f + 1) * embed_dim] = emb.astype(out_ref.dtype)


@functools.partial(jax.jit, static_argnames=("tile_b", "flat_output"))
def features_embedding(x, table, offsets, *, tile_b=128, flat_output=False):
    """x: (B, F) int; table: (V, D) f32; offsets: (F,) int -> (B, F, D) f32.

    With flat_output=True returns (B, F*D) lane-dense (no trailing relayout),
    useful when the downstream consumer (FM / MLP) flattens anyway.
    """
    B, F = x.shape
    V, D = table.shape

    x = x.astype(jnp.int32)
    offsets = offsets.astype(jnp.int32)

    # Row-tile size: multiple of 8 sublanes, capped to the (padded) batch.
    tile_b = max(8, min(tile_b, _round_up(B, 8)))
    B_pad = _round_up(B, tile_b)
    if B_pad != B:
        # Tail rows use index 0 for every field; their outputs are sliced away.
        x = jnp.pad(x, ((0, B_pad - B), (0, 0)))

    out = pl.pallas_call(
        _embedding_kernel,
        out_shape=jax.ShapeDtypeStruct((B_pad, F * D), table.dtype),
        grid_spec=pltpu.PrefetchScalarGridSpec(
            # offsets land in SMEM before the grid runs; index_maps get the
            # prefetch ref as a trailing positional arg.
            num_scalar_prefetch=1,
            grid=(B_pad // tile_b,),
            in_specs=[
                # (tile_b, F) raw-index tile per grid step.
                pl.BlockSpec((tile_b, F), lambda i, offs: (i, 0)),
                # Full (V, D) table, constant index_map -> fetched once and kept
                # VMEM-resident; single-buffered (double-buffering a constant
                # block buys nothing and halves its VMEM footprint).
                pl.BlockSpec((V, D), lambda i, offs: (0, 0),
                             pipeline_mode=pl.Buffered(1)),
            ],
            # Lane-dense output: last dim F*D (=128 here) -> unmasked stores.
            out_specs=pl.BlockSpec((tile_b, F * D), lambda i, offs: (i, 0)),
        ),
        compiler_params=pltpu.CompilerParams(
            # Row tiles are independent -> shard the grid across v7x's 2
            # TensorCores; harmless (single TC) on v5e/v6e.
            dimension_semantics=("parallel",),
            # Per-step VMEM (~70 KiB at these shapes) fits every chip's scoped
            # default; set vmem_limit_bytes only when growing V (v5e: 16 MiB).
        ),
    )(offsets, x, table)

    out = out[:B]
    if flat_output:
        return out                      # (B, F*D), lane-dense, no relayout
    return out.reshape(B, F, D)         # PyTorch-equivalent (B, F, D)


if __name__ == "__main__":
    field_dims = (3, 4, 5, 6)          # per-field vocabulary sizes
    embed_dim = 32                     # num_fields * embed_dim = 128 (lane dense)
    batch = 512                        # grid=(4,) at tile_b=128 -> 2 steps per v7x TC
    num_fields = len(field_dims)
    vocab = int(sum(field_dims))       # 18

    key = jax.random.PRNGKey(0)
    k_w, k_x = jax.random.split(key)

    # torch.nn.init.xavier_uniform_ on a (vocab, embed_dim) weight.
    bound = float(np.sqrt(6.0 / (vocab + embed_dim)))
    table = jax.random.uniform(
        k_w, (vocab, embed_dim), dtype=jnp.float32, minval=-bound, maxval=bound
    )

    # Per-field categorical indices in [0, field_dims[f]).
    maxvals = jnp.array(field_dims, dtype=jnp.float32)
    x = (jax.random.uniform(k_x, (batch, num_fields)) * maxvals).astype(jnp.int32)

    # offsets = (0, *cumsum(field_dims)[:-1]) exactly as in the PyTorch __init__.
    offsets = jnp.array((0, *np.cumsum(field_dims)[:-1]), dtype=jnp.int32)

    out = features_embedding(x, table, offsets, tile_b=128)
    out = jax.block_until_ready(out)

    # Pure-JAX reference check (exact row selection -> tight tolerances).
    ref = jnp.take(table, x + offsets[None, :], axis=0)
    np.testing.assert_allclose(np.asarray(out), np.asarray(ref), rtol=1e-6, atol=1e-6)
    assert out.shape == (batch, num_fields, embed_dim)

    print("KERNEL_OK")
</pallas_src>

<mosaic_0001>
module attributes {stable_mosaic.version = 11 : i64} {
  func.func @_embedding_kernel(%arg0: i32, %arg1: memref<4xi32, #tpu.memory_space<smem>>, %arg2: memref<128x4xi32, #tpu.memory_space<vmem>>, %arg3: memref<18x32xf32, #tpu.memory_space<vmem>>, %arg4: memref<128x128xf32, #tpu.memory_space<vmem>>) attributes {dimension_semantics = [#tpu.dimension_semantics<parallel>], iteration_bounds = array<i64: 4>, scalar_prefetch = 1 : i64, scratch_operands = 0 : i64, tpu.core_type = #tpu.core_type<tc>, window_params = [{transform_indices = @transform_0, window_bounds = array<i64: 128, 4>}, {pipeline_mode = #tpu.pipeline_mode<synchronous>, transform_indices = @transform_1, window_bounds = array<i64: 18, 32>}, {transform_indices = @transform_2, window_bounds = array<i64: 128, 128>}]} {
    %c0 = arith.constant 0 : index
    %c0_0 = arith.constant 0 : index
    %0 = vector.load %arg2[%c0, %c0_0] : memref<128x4xi32, #tpu.memory_space<vmem>>, vector<128x4xi32>
    %c0_1 = arith.constant 0 : index
    %c0_2 = arith.constant 0 : index
    %1 = vector.load %arg3[%c0_1, %c0_2] : memref<18x32xf32, #tpu.memory_space<vmem>>, vector<18x32xf32>
    %2 = tpu.iota {dimensions = array<i32: 1>} : vector<128x18xi32>
    %3 = vector.extract_strided_slice %0 {offsets = [0, 0], sizes = [128, 1], strides = [1, 1]} : vector<128x4xi32> to vector<128x1xi32>
    %c0_3 = arith.constant 0 : index
    %4 = memref.load %arg1[%c0_3] : memref<4xi32, #tpu.memory_space<smem>>
    %5 = vector.broadcast %4 : i32 to vector<128x1xi32>
    %6 = arith.addi %3, %5 : vector<128x1xi32>
    %7 = vector.broadcast %6 : vector<128x1xi32> to vector<128x18xi32>
    %8 = arith.cmpi eq, %2, %7 : vector<128x18xi32>
    %9 = arith.extui %8 : vector<128x18xi1> to vector<128x18xi32>
    %10 = arith.sitofp %9 : vector<128x18xi32> to vector<128x18xf32>
    %cst = arith.constant dense<0.000000e+00> : vector<128x32xf32>
    %11 = tpu.matmul %10, %1, %cst {dimension_numbers = #tpu.dot_dimension_numbers<[1], [0], [0], [1], [0, 0, 1, 1], [], []>, precision = #tpu.contract_precision<fp32>} : vector<128x18xf32>, vector<18x32xf32>, vector<128x32xf32> -> vector<128x32xf32>
    %c0_4 = arith.constant 0 : index
    %c0_5 = arith.constant 0 : index
    %12 = vector.load %arg4[%c0_4, %c0_5] : memref<128x128xf32, #tpu.memory_space<vmem>>, vector<128x32xf32>
    tpu.vector_store %arg4[%c0_4, %c0_5], %11 {strides = array<i32>} : memref<128x128xf32, #tpu.memory_space<vmem>>, vector<128x32xf32>,
    %13 = vector.extract_strided_slice %0 {offsets = [0, 1], sizes = [128, 1], strides = [1, 1]} : vector<128x4xi32> to vector<128x1xi32>
    %c1 = arith.constant 1 : index
    %14 = memref.load %arg1[%c1] : memref<4xi32, #tpu.memory_space<smem>>
    %15 = vector.broadcast %14 : i32 to vector<128x1xi32>
    %16 = arith.addi %13, %15 : vector<128x1xi32>
    %17 = vector.broadcast %16 : vector<128x1xi32> to vector<128x18xi32>
    %18 = arith.cmpi eq, %2, %17 : vector<128x18xi32>
    %19 = arith.extui %18 : vector<128x18xi1> to vector<128x18xi32>
    %20 = arith.sitofp %19 : vector<128x18xi32> to vector<128x18xf32>
    %cst_6 = arith.constant dense<0.000000e+00> : vector<128x32xf32>
    %21 = tpu.matmul %20, %1, %cst_6 {dimension_numbers = #tpu.dot_dimension_numbers<[1], [0], [0], [1], [0, 0, 1, 1], [], []>, precision = #tpu.contract_precision<fp32>} : vector<128x18xf32>, vector<18x32xf32>, vector<128x32xf32> -> vector<128x32xf32>
    %c0_7 = arith.constant 0 : index
    %c32 = arith.constant 32 : index
    %22 = vector.load %arg4[%c0_7, %c32] : memref<128x128xf32, #tpu.memory_space<vmem>>, vector<128x32xf32>
    tpu.vector_store %arg4[%c0_7, %c32], %21 {strides = array<i32>} : memref<128x128xf32, #tpu.memory_space<vmem>>, vector<128x32xf32>,
    %23 = vector.extract_strided_slice %0 {offsets = [0, 2], sizes = [128, 1], strides = [1, 1]} : vector<128x4xi32> to vector<128x1xi32>
    %c2 = arith.constant 2 : index
    %24 = memref.load %arg1[%c2] : memref<4xi32, #tpu.memory_space<smem>>
    %25 = vector.broadcast %24 : i32 to vector<128x1xi32>
    %26 = arith.addi %23, %25 : vector<128x1xi32>
    %27 = vector.broadcast %26 : vector<128x1xi32> to vector<128x18xi32>
    %28 = arith.cmpi eq, %2, %27 : vector<128x18xi32>
    %29 = arith.extui %28 : vector<128x18xi1> to vector<128x18xi32>
    %30 = arith.sitofp %29 : vector<128x18xi32> to vector<128x18xf32>
    %cst_8 = arith.constant dense<0.000000e+00> : vector<128x32xf32>
    %31 = tpu.matmul %30, %1, %cst_8 {dimension_numbers = #tpu.dot_dimension_numbers<[1], [0], [0], [1], [0, 0, 1, 1], [], []>, precision = #tpu.contract_precision<fp32>} : vector<128x18xf32>, vector<18x32xf32>, vector<128x32xf32> -> vector<128x32xf32>
    %c0_9 = arith.constant 0 : index
    %c64 = arith.constant 64 : index
    %32 = vector.load %arg4[%c0_9, %c64] : memref<128x128xf32, #tpu.memory_space<vmem>>, vector<128x32xf32>
    tpu.vector_store %arg4[%c0_9, %c64], %31 {strides = array<i32>} : memref<128x128xf32, #tpu.memory_space<vmem>>, vector<128x32xf32>,
    %33 = vector.extract_strided_slice %0 {offsets = [0, 3], sizes = [128, 1], strides = [1, 1]} : vector<128x4xi32> to vector<128x1xi32>
    %c3 = arith.constant 3 : index
    %34 = memref.load %arg1[%c3] : memref<4xi32, #tpu.memory_space<smem>>
    %35 = vector.broadcast %34 : i32 to vector<128x1xi32>
    %36 = arith.addi %33, %35 : vector<128x1xi32>
    %37 = vector.broadcast %36 : vector<128x1xi32> to vector<128x18xi32>
    %38 = arith.cmpi eq, %2, %37 : vector<128x18xi32>
    %39 = arith.extui %38 : vector<128x18xi1> to vector<128x18xi32>
    %40 = arith.sitofp %39 : vector<128x18xi32> to vector<128x18xf32>
    %cst_10 = arith.constant dense<0.000000e+00> : vector<128x32xf32>
    %41 = tpu.matmul %40, %1, %cst_10 {dimension_numbers = #tpu.dot_dimension_numbers<[1], [0], [0], [1], [0, 0, 1, 1], [], []>, precision = #tpu.contract_precision<fp32>} : vector<128x18xf32>, vector<18x32xf32>, vector<128x32xf32> -> vector<128x32xf32>
    %c0_11 = arith.constant 0 : index
    %c96 = arith.constant 96 : index
    %42 = vector.load %arg4[%c0_11, %c96] : memref<128x128xf32, #tpu.memory_space<vmem>>, vector<128x32xf32>
    tpu.vector_store %arg4[%c0_11, %c96], %41 {strides = array<i32>} : memref<128x128xf32, #tpu.memory_space<vmem>>, vector<128x32xf32>,
    return
  }
  func.func @transform_0(%arg0: i32, %arg1: memref<4xi32, #tpu.memory_space<smem>>) -> (i32, i32) {
    %c0_i32 = arith.constant 0 : i32
    %c0_i32_0 = arith.constant 0 : i32
    return %arg0, %c0_i32 : i32, i32
  }
  func.func @transform_1(%arg0: i32, %arg1: memref<4xi32, #tpu.memory_space<smem>>) -> (i32, i32) {
    %c0_i32 = arith.constant 0 : i32
    %c0_i32_0 = arith.constant 0 : i32
    %c0_i32_1 = arith.constant 0 : i32
    return %c0_i32, %c0_i32_0 : i32, i32
  }
  func.func @transform_2(%arg0: i32, %arg1: memref<4xi32, #tpu.memory_space<smem>>) -> (i32, i32) {
    %c0_i32 = arith.constant 0 : i32
    %c0_i32_0 = arith.constant 0 : i32
    return %arg0, %c0_i32 : i32, i32
  }
}

</mosaic_0001>

<llo_original>
// kernel: features_embedding.1
$region0: #{features_embedding.1}
  #allocation0 [shape = 'u32[]', space=smem, size = 0x4, offset = 0x4, fixed_abs, tag = 'smem constant byte address 0x4 - core index']
  #allocation1 [shape = 'u32[144,128]{1,0:T(1,128)}', space=vmem, size = 0x12000, scoped, tag = 'internal scratch']
  #allocation2 [shape = 's32[1]{0}', space=sflag, size = 0x4, scoped, tag = 'scoped memory for features_embedding.1']
  #allocation3 [shape = 'u8[512]{0}', space=smem, size = 0x200, scoped, tag = 'prefetched SMEM operand 0']
  %s0 = inlined_call_operand.vmem [shape: s32[4], index: 0, kind: input, shape index: {}]
  %s1 = inlined_call_operand.vmem [shape: s32[512,4], index: 1, kind: input, shape index: {}]
  %s2 = inlined_call_operand.vmem [shape: f32[18,32], index: 2, kind: input, shape index: {}]
  %s3 = inlined_call_operand.vmem [shape: f32[512,128], index: 3, kind: output, shape index: {}]
  %s4 = sld [smem:[#allocation0]]
  $region41: #{features_embedding.1} parent=0
    _
  %s6 = ssub.s32 1, %s4
  %s7 = scalar_select 0, %s6, %s4
  %s8 = sshll.u32 %s0, 4
  %s9 = int_to_ptr.vmem [resolvable:$true] %s8
  %11 = dma.vmem_to_smem %s9, 16, [#allocation3], [#allocation2]
  %12 = dma.done [#allocation2], 16
  %13 = sfence
  loop: start=0, step=1, limit=6
  $region2: #{features_embedding.1} parent=0 // loop_pre_header
    _
  $region3: #{features_embedding.1} parent=0 // loop_header
    %s15 = sphi 0, %s19
    %p16 = scmp.ge.s32.totalorder %s15, 6
    %s25 = sphi 0, %s27
    %s28 = sphi 0, %s25
    %s29 = sphi 0, %s28
    %s45 = sphi 0, %s29
    %s49 = sphi 0, %s49
    %s51 = sphi 0, %s49
    %s52 = sphi 0, %s51
    %s66 = sphi 0, %s52
    %s72 = sphi 0, %s74
    %s75 = sphi 0, %s72
    %s76 = sphi 0, %s75
    %s92 = sphi 0, %s76
  $region4: #{features_embedding.1} parent=0 // loop_header_branch
    %18 = sbr.rel (%p16) target = $region8
  $region5: #{features_embedding.1} parent=0 // loop_body
    %s20 = ssub.s32 %s15, 1
    %s21 = ssub.s32 %s15, 2
    %s22 = sadd.s32 %s15, 1
    %s23 = ssub.s32 %s15, %s22
    %p24 = scmp.eq.s32.totalorder %s23, 0
    %s26 = sadd.s32 %s25, 1
    %s27 = scalar_select %p24, %s25, %s26
    %p30 = pneg %p24
    %p31 = scmp.eq.s32.totalorder %s15, 3
    %p32 = por %p30, %p31
    %p33 = scmp.ne.s32.totalorder %s25, %s28
    %p34 = scmp.eq.s32.totalorder %s15, 0
    %p35 = por %p33, %p34
    %p36 = scmp.ne.s32.totalorder %s25, %s28
    %p37 = scmp.eq.s32.totalorder %s20, 3
    %p38 = por %p36, %p37
    %p39 = scmp.ne.s32.totalorder %s28, %s29
    %p40 = scmp.eq.s32.totalorder %s20, 0
    %p41 = por %p39, %p40
    %p42 = scmp.ne.s32.totalorder %s28, %s29
    %p43 = scmp.eq.s32.totalorder %s21, 3
    %p44 = por %p42, %p43
    %p46 = scmp.ne.s32.totalorder %s29, %s45
    %p47 = scmp.eq.s32.totalorder %s21, 0
    %p48 = por %p46, %p47
    %s50 = sadd.s32 %s49, 1
    %p53 = scmp.eq.s32.totalorder %s15, 3
    %p54 = scmp.ne.s32.totalorder %s49, %s51
    %p55 = scmp.eq.s32.totalorder %s15, 0
    %p56 = por %p54, %p55
    %p57 = scmp.ne.s32.totalorder %s49, %s51
    %p58 = scmp.eq.s32.totalorder %s20, 3
    %p59 = por %p57, %p58
    %p60 = scmp.ne.s32.totalorder %s51, %s52
    %p61 = scmp.eq.s32.totalorder %s20, 0
    %p62 = por %p60, %p61
    %p63 = scmp.ne.s32.totalorder %s51, %s52
    %p64 = scmp.eq.s32.totalorder %s21, 3
    %p65 = por %p63, %p64
    %p67 = scmp.ne.s32.totalorder %s52, %s66
    %p68 = scmp.eq.s32.totalorder %s21, 0
    %p69 = por %p67, %p68
    %s70 = ssub.s32 %s15, %s22
    %p71 = scmp.eq.s32.totalorder %s70, 0
    %s73 = sadd.s32 %s72, 1
    %s74 = scalar_select %p71, %s72, %s73
    %p77 = pneg %p71
    %p78 = scmp.eq.s32.totalorder %s15, 3
    %p79 = por %p77, %p78
    %p80 = scmp.ne.s32.totalorder %s72, %s75
    %p81 = scmp.eq.s32.totalorder %s15, 0
    %p82 = por %p80, %p81
    %p83 = scmp.ne.s32.totalorder %s72, %s75
    %p84 = scmp.eq.s32.totalorder %s20, 3
    %p85 = por %p83, %p84
    %p86 = scmp.ne.s32.totalorder %s75, %s76
    %p87 = scmp.eq.s32.totalorder %s20, 0
    %p88 = por %p86, %p87
    %p89 = scmp.ne.s32.totalorder %s75, %s76
    %p90 = scmp.eq.s32.totalorder %s21, 3
    %p91 = por %p89, %p90
    %p93 = scmp.ne.s32.totalorder %s76, %s92
    %p94 = scmp.eq.s32.totalorder %s21, 0
    %p95 = por %p93, %p94
    %p96 = scmp.le.s32.totalorder 1, %s15
    %p97 = scmp.lt.s32.totalorder %s15, 5
    %p98 = pnand %p96, %p97
    %p99 = pneg %p98
    // Predicated region
    $region9: #{features_embedding.1} parent=5 // pred_check
      _
    $region10: #{features_embedding.1} parent=5 // pred_check_branch
      %101 = sbr.rel (%p98) target = $region12
    $region11: #{features_embedding.1} parent=5 // pred_region
      %s102 = ssub.s32 %s15, 1
      // Predicated region
      $region13: #{features_embedding.1} parent=11 // pred_check
        %p103 = pneg %p62
      $region14: #{features_embedding.1} parent=11 // pred_check_branch
        %105 = sbr.rel (%p103) target = $region16
      $region15: #{features_embedding.1} parent=11 // pred_region
        _
      $region16: #{features_embedding.1} parent=11 // pred_fallthru
        _
    $region12: #{features_embedding.1} parent=5 // pred_fallthru
      _
    %p106 = scmp.lt.s32.totalorder %s15, 4
    // Predicated region
    $region17: #{features_embedding.1} parent=5 // pred_check
      %p107 = pneg %p106
    $region18: #{features_embedding.1} parent=5 // pred_check_branch
      %109 = sbr.rel (%p107) target = $region20
    $region19: #{features_embedding.1} parent=5 // pred_region
      // Predicated region
      $region21: #{features_embedding.1} parent=19 // pred_check
        %p110 = pneg %p35
      $region22: #{features_embedding.1} parent=19 // pred_check_branch
        %112 = sbr.rel (%p110) target = $region24
      $region23: #{features_embedding.1} parent=19 // pred_region
        %s113 = smul.u32 16, %s15
        %p114 = scmp.lt.s32.totalorder %s113, 63
        %s115 = scalar_select %p114, %s113, 63
        %s116 = smul.addr %s115, 8
        %s117 = scalar_lea.vmem %s1, %s116
        %s118 = smul.u32 16, %s15
      $region24: #{features_embedding.1} parent=19 // pred_fallthru
        _
    $region20: #{features_embedding.1} parent=5 // pred_fallthru
      _
    %p119 = scmp.le.s32.totalorder 1, %s15
    %p120 = scmp.lt.s32.totalorder %s15, 5
    %p121 = pnand %p119, %p120
    %p122 = pneg %p121
    // Predicated region
    $region25: #{features_embedding.1} parent=5 // pred_check
      _
    $region26: #{features_embedding.1} parent=5 // pred_check_branch
      %124 = sbr.rel (%p121) target = $region28
    $region27: #{features_embedding.1} parent=5 // pred_region
      %s125 = ssub.s32 %s15, 1
      %s126 = smul.u32 16, %s20
      %p127 = scmp.lt.s32.totalorder %s126, 63
      %s128 = scalar_select %p127, %s126, 63
      %s129 = smul.addr %s128, 8
      %s130 = scalar_lea.vmem %s1, %s129
      %p131 = pneg %p41
      %p132 = pneg %p38
      %p133 = pneg %p62
      %p134 = pneg %p59
      %p135 = pneg %p88
      %p136 = pneg %p85
      %s137 = smul.u32 16, %s20
      %p138 = scmp.lt.s32.totalorder %s137, 63
      %s139 = scalar_select %p138, %s137, 63
      %s140 = smul.addr %s139, 8
      %s141 = scalar_lea.vmem %s3, %s140
      %s142 = smul.u32 16, %s20
      %p143 = scmp.lt.s32.totalorder %s142, 63
      %s144 = scalar_select %p143, %s142, 63
      %s145 = smul.addr %s144, 8
      %s146 = scalar_lea.vmem %s1, %s145
      %s147 = smul.u32 16, %s20
      %s148 = smul.u32 16, %s20
      %p149 = scmp.lt.s32.totalorder %s148, 63
      %s150 = scalar_select %p149, %s148, 63
      %s151 = smul.addr %s150, 8
      %s152 = scalar_lea.vmem %s3, %s151
      %s153 = smul.u32 16, %s20
      %v154 = vld [vmem:[%s146] sm:$0xff]
      %v155 = vld [vmem:[%s146 + $0x8] sm:$0xff]
      %v156 = vld [vmem:[%s146 + $0x10] sm:$0xff]
      %v157 = vld [vmem:[%s146 + $0x18] sm:$0xff]
      %v158 = vld [vmem:[%s146 + $0x20] sm:$0xff]
      %v159 = vld [vmem:[%s146 + $0x28] sm:$0xff]
      %v160 = vld [vmem:[%s146 + $0x30] sm:$0xff]
      %v161 = vld [vmem:[%s146 + $0x38] sm:$0xff]
      %v162 = vld [vmem:[%s146 + $0x40] sm:$0xff]
      %v163 = vld [vmem:[%s146 + $0x48] sm:$0xff]
      %v164 = vld [vmem:[%s146 + $0x50] sm:$0xff]
      %v165 = vld [vmem:[%s146 + $0x58] sm:$0xff]
      %v166 = vld [vmem:[%s146 + $0x60] sm:$0xff]
      %v167 = vld [vmem:[%s146 + $0x68] sm:$0xff]
      %v168 = vld [vmem:[%s146 + $0x70] sm:$0xff]
      %v169 = vld [vmem:[%s146 + $0x78] sm:$0xff]
      %v170 = vld [vmem:[%s2] sm:$0xff]
      %v171 = vld [vmem:[%s2 + $0x8] sm:$0xff]
      %v172 = vld [vmem:[%s2 + $0x10] sm:$0x3]
      %v173 = vlaneseq
      %v174 = vand.u32 %v173, 127
      %s175 = sld [smem:[#allocation3]]
      %v176 = vstv %s175
      %v177 = vadd.s32 %v154, %v176
      %v178 = vadd.s32 %v155, %v176
      %v179 = vadd.s32 %v156, %v176
      %v180 = vadd.s32 %v157, %v176
      %v181 = vadd.s32 %v158, %v176
      %v182 = vadd.s32 %v159, %v176
      %v183 = vadd.s32 %v160, %v176
      %v184 = vadd.s32 %v161, %v176
      %v185 = vadd.s32 %v162, %v176
      %v186 = vadd.s32 %v163, %v176
      %v187 = vadd.s32 %v164, %v176
      %v188 = vadd.s32 %v165, %v176
      %v189 = vadd.s32 %v166, %v176
      %v190 = vadd.s32 %v167, %v176
      %v191 = vadd.s32 %v168, %v176
      %v192 = vadd.s32 %v169, %v176
      %193 = vset.pattern.permute.xlu0 0
      %194 = vperm.xlu0 %193, %v177
      %v195 = vpop.permute.xlu0 %194
      %196 = vset.pattern.permute.xlu0 0
      %197 = vperm.xlu0 %196, %v178
      %v198 = vpop.permute.xlu0 %197
      %199 = vset.pattern.permute.xlu0 0
      %200 = vperm.xlu0 %199, %v179
      %v201 = vpop.permute.xlu0 %200
      %202 = vset.pattern.permute.xlu0 0
      %203 = vperm.xlu0 %202, %v180
      %v204 = vpop.permute.xlu0 %203
      %205 = vset.pattern.permute.xlu0 0
      %206 = vperm.xlu0 %205, %v181
      %v207 = vpop.permute.xlu0 %206
      %208 = vset.pattern.permute.xlu0 0
      %209 = vperm.xlu0 %208, %v182
      %v210 = vpop.permute.xlu0 %209
      %211 = vset.pattern.permute.xlu0 0
      %212 = vperm.xlu0 %211, %v183
      %v213 = vpop.permute.xlu0 %212
      %214 = vset.pattern.permute.xlu0 0
      %215 = vperm.xlu0 %214, %v184
      %v216 = vpop.permute.xlu0 %215
      %217 = vset.pattern.permute.xlu0 0
      %218 = vperm.xlu0 %217, %v185
      %v219 = vpop.permute.xlu0 %218
      %220 = vset.pattern.permute.xlu0 0
      %221 = vperm.xlu0 %220, %v186
      %v222 = vpop.permute.xlu0 %221
      %223 = vset.pattern.permute.xlu0 0
      %224 = vperm.xlu0 %223, %v187
      %v225 = vpop.permute.xlu0 %224
      %226 = vset.pattern.permute.xlu0 0
      %227 = vperm.xlu0 %226, %v188
      %v228 = vpop.permute.xlu0 %227
      %229 = vset.pattern.permute.xlu0 0
      %230 = vperm.xlu0 %229, %v189
      %v231 = vpop.permute.xlu0 %230
      %232 = vset.pattern.permute.xlu0 0
      %233 = vperm.xlu0 %232, %v190
      %v234 = vpop.permute.xlu0 %233
      %235 = vset.pattern.permute.xlu0 0
      %236 = vperm.xlu0 %235, %v191
      %v237 = vpop.permute.xlu0 %236
      %238 = vset.pattern.permute.xlu0 0
      %239 = vperm.xlu0 %238, %v192
      %v240 = vpop.permute.xlu0 %239
      %vm241 = vcmp.eq.s32.totalorder %v174, %v195
      %vm242 = vcmp.eq.s32.totalorder %v174, %v198
      %vm243 = vcmp.eq.s32.totalorder %v174, %v201
      %vm244 = vcmp.eq.s32.totalorder %v174, %v204
      %vm245 = vcmp.eq.s32.totalorder %v174, %v207
      %vm246 = vcmp.eq.s32.totalorder %v174, %v210
      %vm247 = vcmp.eq.s32.totalorder %v174, %v213
      %vm248 = vcmp.eq.s32.totalorder %v174, %v216
      %vm249 = vcmp.eq.s32.totalorder %v174, %v219
      %vm250 = vcmp.eq.s32.totalorder %v174, %v222
      %vm251 = vcmp.eq.s32.totalorder %v174, %v225
      %vm252 = vcmp.eq.s32.totalorder %v174, %v228
      %vm253 = vcmp.eq.s32.totalorder %v174, %v231
      %vm254 = vcmp.eq.s32.totalorder %v174, %v234
      %vm255 = vcmp.eq.s32.totalorder %v174, %v237
      %vm256 = vcmp.eq.s32.totalorder %v174, %v240
      %v257 = vsel %vm241, 1, 0
      %v258 = vsel %vm242, 1, 0
      %v259 = vsel %vm243, 1, 0
      %v260 = vsel %vm244, 1, 0
      %v261 = vsel %vm245, 1, 0
      %v262 = vsel %vm246, 1, 0
      %v263 = vsel %vm247, 1, 0
      %v264 = vsel %vm248, 1, 0
      %v265 = vsel %vm249, 1, 0
      %v266 = vsel %vm250, 1, 0
      %v267 = vsel %vm251, 1, 0
      %v268 = vsel %vm252, 1, 0
      %v269 = vsel %vm253, 1, 0
      %v270 = vsel %vm254, 1, 0
      %v271 = vsel %vm255, 1, 0
      %v272 = vsel %vm256, 1, 0
      %v273 = vcvt.s32.f32 %v257
      %v274 = vcvt.s32.f32 %v258
      %v275 = vcvt.s32.f32 %v259
      %v276 = vcvt.s32.f32 %v260
      %v277 = vcvt.s32.f32 %v261
      %v278 = vcvt.s32.f32 %v262
      %v279 = vcvt.s32.f32 %v263
      %v280 = vcvt.s32.f32 %v264
      %v281 = vcvt.s32.f32 %v265
      %v282 = vcvt.s32.f32 %v266
      %v283 = vcvt.s32.f32 %v267
      %v284 = vcvt.s32.f32 %v268
      %v285 = vcvt.s32.f32 %v269
      %v286 = vcvt.s32.f32 %v270
      %v287 = vcvt.s32.f32 %v271
      %v288 = vcvt.s32.f32 %v272
      %vm289 = vcmask 146432
      %v291 = vsel %vm289, %v273, 0
      %v294 = vsel %vm289, %v274, 0
      %v297 = vsel %vm289, %v275, 0
      %v300 = vsel %vm289, %v276, 0
      %v303 = vsel %vm289, %v277, 0
      %v306 = vsel %vm289, %v278, 0
      %v309 = vsel %vm289, %v279, 0
      %v312 = vsel %vm289, %v280, 0
      %v315 = vsel %vm289, %v281, 0
      %v318 = vsel %vm289, %v282, 0
      %v321 = vsel %vm289, %v283, 0
      %v324 = vsel %vm289, %v284, 0
      %v327 = vsel %vm289, %v285, 0
      %v330 = vsel %vm289, %v286, 0
      %v333 = vsel %vm289, %v287, 0
      %v336 = vsel %vm289, %v288, 0
      %vm338 = vcmask 1041408
      %v340 = vsel %vm338, %v172, 0
      %342 = vmatprep.subr.mxu0 0.0
      %343 = vmatpush1.msra.mxu0 0.0
      %344 = vmatprep.subr.mxu0 0.0
      %345 = vmatpush1.msra.mxu0 0.0
      %346 = vmatprep.subr.mxu0 0.0
      %347 = vmatpush1.msra.mxu0 0.0
      %348 = vmatprep.subr.mxu0 0.0
      %349 = vmatpush1.msra.mxu0 0.0
      %350 = vmatprep.subr.mxu0 0.0
      %351 = vmatpush1.msra.mxu0 0.0
      %352 = vmatprep.subr.mxu0 0.0
      %353 = vmatpush1.msra.mxu0 0.0
      %354 = vmatprep.subr.mxu0 0.0
      %355 = vmatpush1.msra.mxu0 0.0
      %356 = vmatprep.subr.mxu0 0.0
      %357 = vmatpush1.msra.mxu0 0.0
      %358 = vmatprep.subr.mxu0 0.0
      %359 = vmatpush1.msra.mxu0 0.0
      %360 = vmatprep.subr.mxu0 0.0
      %361 = vmatpush1.msra.mxu0 0.0
      %362 = vmatprep.subr.mxu0 0.0
      %363 = vmatpush1.msra.mxu0 0.0
      %364 = vmatprep.subr.mxu0 0.0
      %365 = vmatpush1.msra.mxu0 0.0
      %366 = vmatprep.subr.mxu0 0.0
      %367 = vmatpush1.msra.mxu0 0.0
      %368 = vmatprep.subr.mxu0 0.0
      %v369 = vand.u32 %v340, 4294901760
      %370 = vmatpush1.msra.mxu0 %v369
      %371 = vmatprep.subr.mxu0 0.0
      %v372 = vand.u32 %v171, 4294901760
      %373 = vmatpush1.msra.mxu0 %v372
      %374 = vmatprep.subr.mxu0 0.0
      %v375 = vand.u32 %v170, 4294901760
      %376 = vmatpush1.msra.mxu0 %v375
      %377 = vmatprep.subr.mxu0 0.0
      %378 = vmatpush2.msra.mxu0 0.0
      %379 = vmatprep.subr.mxu0 0.0
      %380 = vmatpush2.msra.mxu0 0.0
      %381 = vmatprep.subr.mxu0 0.0
      %382 = vmatpush2.msra.mxu0 0.0
      %383 = vmatprep.subr.mxu0 0.0
      %384 = vmatpush2.msra.mxu0 0.0
      %385 = vmatprep.subr.mxu0 0.0
      %386 = vmatpush2.msra.mxu0 0.0
      %387 = vmatprep.subr.mxu0 0.0
      %388 = vmatpush2.msra.mxu0 0.0
      %389 = vmatprep.subr.mxu0 0.0
      %390 = vmatpush2.msra.mxu0 0.0
      %391 = vmatprep.subr.mxu0 0.0
      %392 = vmatpush2.msra.mxu0 0.0
      %393 = vmatprep.subr.mxu0 0.0
      %394 = vmatpush2.msra.mxu0 0.0
      %395 = vmatprep.subr.mxu0 0.0
      %396 = vmatpush2.msra.mxu0 0.0
      %397 = vmatprep.subr.mxu0 0.0
      %398 = vmatpush2.msra.mxu0 0.0
      %399 = vmatprep.subr.mxu0 0.0
      %400 = vmatpush2.msra.mxu0 0.0
      %401 = vmatprep.subr.mxu0 0.0
      %402 = vmatpush2.msra.mxu0 0.0
      %403 = vmatprep.subr.mxu0 0.0
      %404 = vmatpush2.msra.mxu0 0.0
      %405 = vmatprep.subr.mxu0 0.0
      %406 = vmatpush2.msra.mxu0 0.0
      %407 = vmatprep.subr.mxu0 0.0
      %408 = vmatpush2.msra.mxu0 0.0
      %409 = vmatprep.mubr.f32.mxu0 0.0
      %v410 = vand.u32 %v291, 4294901760
      %v411 = vsub.f32 %v291, %v410
      %v412 = vand.u32 %v411, 4294901760
      %v413 = vsub.f32 %v411, %v412
      %v414 = vand.u32 %v413, 4294901760
      %415 = vmatmul.mubr.f32.gmra.mxu0 %v414
      %v416 = vpop.f32.mrf.mxu0
      %v417 = vadd.f32 0.0, %v416
      %v418 = vpop.f32.mrf.mxu0
      %419 = vmatprep.mubr.f32.mxu0 0.0
      %v420 = vand.u32 %v294, 4294901760
      %v421 = vsub.f32 %v294, %v420
      %v422 = vand.u32 %v421, 4294901760
      %v423 = vsub.f32 %v421, %v422
      %v424 = vand.u32 %v423, 4294901760
      %425 = vmatmul.mubr.f32.gmra.mxu0 %v424
      %v426 = vpop.f32.mrf.mxu0
      %v427 = vadd.f32 0.0, %v426
      %v428 = vpop.f32.mrf.mxu0
      %429 = vmatprep.mubr.f32.mxu0 0.0
      %v430 = vand.u32 %v297, 4294901760
      %v431 = vsub.f32 %v297, %v430
      %v432 = vand.u32 %v431, 4294901760
      %v433 = vsub.f32 %v431, %v432
      %v434 = vand.u32 %v433, 4294901760
      %435 = vmatmul.mubr.f32.gmra.mxu0 %v434
      %v436 = vpop.f32.mrf.mxu0
      %v437 = vadd.f32 0.0, %v436
      %v438 = vpop.f32.mrf.mxu0
      %439 = vmatprep.mubr.f32.mxu0 0.0
      %v440 = vand.u32 %v300, 4294901760
      %v441 = vsub.f32 %v300, %v440
      %v442 = vand.u32 %v441, 4294901760
      %v443 = vsub.f32 %v441, %v442
      %v444 = vand.u32 %v443, 4294901760
      %445 = vmatmul.mubr.f32.gmra.mxu0 %v444
      %v446 = vpop.f32.mrf.mxu0
      %v447 = vadd.f32 0.0, %v446
      %v448 = vpop.f32.mrf.mxu0
      %449 = vmatprep.mubr.f32.mxu0 0.0
      %v450 = vand.u32 %v303, 4294901760
      %v451 = vsub.f32 %v303, %v450
      %v452 = vand.u32 %v451, 4294901760
      %v453 = vsub.f32 %v451, %v452
      %v454 = vand.u32 %v453, 4294901760
      %455 = vmatmul.mubr.f32.gmra.mxu0 %v454
      %v456 = vpop.f32.mrf.mxu0
      %v457 = vadd.f32 0.0, %v456
      %v458 = vpop.f32.mrf.mxu0
      %459 = vmatprep.mubr.f32.mxu0 0.0
      %v460 = vand.u32 %v306, 4294901760
      %v461 = vsub.f32 %v306, %v460
      %v462 = vand.u32 %v461, 4294901760
      %v463 = vsub.f32 %v461, %v462
      %v464 = vand.u32 %v463, 4294901760
      %465 = vmatmul.mubr.f32.gmra.mxu0 %v464
      %v466 = vpop.f32.mrf.mxu0
      %v467 = vadd.f32 0.0, %v466
      %v468 = vpop.f32.mrf.mxu0
      %469 = vmatprep.mubr.f32.mxu0 0.0
      %v470 = vand.u32 %v309, 4294901760
      %v471 = vsub.f32 %v309, %v470
      %v472 = vand.u32 %v471, 4294901760
      %v473 = vsub.f32 %v471, %v472
      %v474 = vand.u32 %v473, 4294901760
      %475 = vmatmul.mubr.f32.gmra.mxu0 %v474
      %v476 = vpop.f32.mrf.mxu0
      %v477 = vadd.f32 0.0, %v476
      %v478 = vpop.f32.mrf.mxu0
      %479 = vmatprep.mubr.f32.mxu0 0.0
      %v480 = vand.u32 %v312, 4294901760
      %v481 = vsub.f32 %v312, %v480
      %v482 = vand.u32 %v481, 4294901760
      %v483 = vsub.f32 %v481, %v482
      %v484 = vand.u32 %v483, 4294901760
      %485 = vmatmul.mubr.f32.gmra.mxu0 %v484
      %v486 = vpop.f32.mrf.mxu0
      %v487 = vadd.f32 0.0, %v486
      %v488 = vpop.f32.mrf.mxu0
      %489 = vmatprep.mubr.f32.mxu0 0.0
      %v490 = vand.u32 %v315, 4294901760
      %v491 = vsub.f32 %v315, %v490
      %v492 = vand.u32 %v491, 4294901760
      %v493 = vsub.f32 %v491, %v492
      %v494 = vand.u32 %v493, 4294901760
      %495 = vmatmul.mubr.f32.gmra.mxu0 %v494
      %v496 = vpop.f32.mrf.mxu0
      %v497 = vadd.f32 0.0, %v496
      %v498 = vpop.f32.mrf.mxu0
      %499 = vmatprep.mubr.f32.mxu0 0.0
      %v500 = vand.u32 %v318, 4294901760
      %v501 = vsub.f32 %v318, %v500
      %v502 = vand.u32 %v501, 4294901760
      %v503 = vsub.f32 %v501, %v502
      %v504 = vand.u32 %v503, 4294901760
      %505 = vmatmul.mubr.f32.gmra.mxu0 %v504
      %v506 = vpop.f32.mrf.mxu0
      %v507 = vadd.f32 0.0, %v506
      %v508 = vpop.f32.mrf.mxu0
      %509 = vmatprep.mubr.f32.mxu0 0.0
      %v510 = vand.u32 %v321, 4294901760
      %v511 = vsub.f32 %v321, %v510
      %v512 = vand.u32 %v511, 4294901760
      %v513 = vsub.f32 %v511, %v512
      %v514 = vand.u32 %v513, 4294901760
      %515 = vmatmul.mubr.f32.gmra.mxu0 %v514
      %v516 = vpop.f32.mrf.mxu0
      %v517 = vadd.f32 0.0, %v516
      %v518 = vpop.f32.mrf.mxu0
      %519 = vmatprep.mubr.f32.mxu0 0.0
      %v520 = vand.u32 %v324, 4294901760
      %v521 = vsub.f32 %v324, %v520
      %v522 = vand.u32 %v521, 4294901760
      %v523 = vsub.f32 %v521, %v522
      %v524 = vand.u32 %v523, 4294901760
      %525 = vmatmul.mubr.f32.gmra.mxu0 %v524
      %v526 = vpop.f32.mrf.mxu0
      %v527 = vadd.f32 0.0, %v526
      %v528 = vpop.f32.mrf.mxu0
      %529 = vmatprep.mubr.f32.mxu0 0.0
      %v530 = vand.u32 %v327, 4294901760
      %v531 = vsub.f32 %v327, %v530
      %v532 = vand.u32 %v531, 4294901760
      %v533 = vsub.f32 %v531, %v532
      %v534 = vand.u32 %v533, 4294901760
      %535 = vmatmul.mubr.f32.gmra.mxu0 %v534
      %v536 = vpop.f32.mrf.mxu0
      %v537 = vadd.f32 0.0, %v536
      %v538 = vpop.f32.mrf.mxu0
      %539 = vmatprep.mubr.f32.mxu0 0.0
      %v540 = vand.u32 %v330, 4294901760
      %v541 = vsub.f32 %v330, %v540
      %v542 = vand.u32 %v541, 4294901760
      %v543 = vsub.f32 %v541, %v542
      %v544 = vand.u32 %v543, 4294901760
      %545 = vmatmul.mubr.f32.gmra.mxu0 %v544
      %v546 = vpop.f32.mrf.mxu0
      %v547 = vadd.f32 0.0, %v546
      %v548 = vpop.f32.mrf.mxu0
      %549 = vmatprep.mubr.f32.mxu0 0.0
      %v550 = vand.u32 %v333, 4294901760
      %v551 = vsub.f32 %v333, %v550
      %v552 = vand.u32 %v551, 4294901760
      %v553 = vsub.f32 %v551, %v552
      %v554 = vand.u32 %v553, 4294901760
      %555 = vmatmul.mubr.f32.gmra.mxu0 %v554
      %v556 = vpop.f32.mrf.mxu0
      %v557 = vadd.f32 0.0, %v556
      %v558 = vpop.f32.mrf.mxu0
      %559 = vmatprep.mubr.f32.mxu0 0.0
      %v560 = vand.u32 %v336, 4294901760
      %v561 = vsub.f32 %v336, %v560
      %v562 = vand.u32 %v561, 4294901760
      %v563 = vsub.f32 %v561, %v562
      %v564 = vand.u32 %v563, 4294901760
      %565 = vmatmul.mubr.f32.gmra.mxu0 %v564
      %v566 = vpop.f32.mrf.mxu0
      %v567 = vadd.f32 0.0, %v566
      %v568 = vpop.f32.mrf.mxu0
      %569 = vdwg.mxu0
      %570 = vmatprep.subr.mxu0 0.0
      %571 = vmatpush1.msra.mxu0 0.0
      %572 = vmatprep.subr.mxu0 0.0
      %573 = vmatpush1.msra.mxu0 0.0
      %574 = vmatprep.subr.mxu0 0.0
      %575 = vmatpush1.msra.mxu0 0.0
      %576 = vmatprep.subr.mxu0 0.0
      %577 = vmatpush1.msra.mxu0 0.0
      %578 = vmatprep.subr.mxu0 0.0
      %579 = vmatpush1.msra.mxu0 0.0
      %580 = vmatprep.subr.mxu0 0.0
      %581 = vmatpush1.msra.mxu0 0.0
      %582 = vmatprep.subr.mxu0 0.0
      %583 = vmatpush1.msra.mxu0 0.0
      %584 = vmatprep.subr.mxu0 0.0
      %585 = vmatpush1.msra.mxu0 0.0
      %586 = vmatprep.subr.mxu0 0.0
      %587 = vmatpush1.msra.mxu0 0.0
      %588 = vmatprep.subr.mxu0 0.0
      %589 = vmatpush1.msra.mxu0 0.0
      %590 = vmatprep.subr.mxu0 0.0
      %591 = vmatpush1.msra.mxu0 0.0
      %592 = vmatprep.subr.mxu0 0.0
      %593 = vmatpush1.msra.mxu0 0.0
      %594 = vmatprep.subr.mxu0 0.0
      %595 = vmatpush1.msra.mxu0 0.0
      %596 = vmatprep.subr.mxu0 0.0
      %v597 = vand.u32 %v340, 4294901760
      %v598 = vsub.f32 %v340, %v597
      %v599 = vand.u32 %v598, 4294901760
      %v600 = vsub.f32 %v598, %v599
      %v601 = vand.u32 %v600, 4294901760
      %602 = vmatpush1.msra.mxu0 %v601
      %603 = vmatprep.subr.mxu0 0.0
      %v604 = vand.u32 %v171, 4294901760
      %v605 = vsub.f32 %v171, %v604
      %v606 = vand.u32 %v605, 4294901760
      %v607 = vsub.f32 %v605, %v606
      %v608 = vand.u32 %v607, 4294901760
      %609 = vmatpush1.msra.mxu0 %v608
      %610 = vmatprep.subr.mxu0 0.0
      %v611 = vand.u32 %v170, 4294901760
      %v612 = vsub.f32 %v170, %v611
      %v613 = vand.u32 %v612, 4294901760
      %v614 = vsub.f32 %v612, %v613
      %v615 = vand.u32 %v614, 4294901760
      %616 = vmatpush1.msra.mxu0 %v615
      %617 = vmatprep.subr.mxu0 0.0
      %618 = vmatpush2.msra.mxu0 0.0
      %619 = vmatprep.subr.mxu0 0.0
      %620 = vmatpush2.msra.mxu0 0.0
      %621 = vmatprep.subr.mxu0 0.0
      %622 = vmatpush2.msra.mxu0 0.0
      %623 = vmatprep.subr.mxu0 0.0
      %624 = vmatpush2.msra.mxu0 0.0
      %625 = vmatprep.subr.mxu0 0.0
      %626 = vmatpush2.msra.mxu0 0.0
      %627 = vmatprep.subr.mxu0 0.0
      %628 = vmatpush2.msra.mxu0 0.0
      %629 = vmatprep.subr.mxu0 0.0
      %630 = vmatpush2.msra.mxu0 0.0
      %631 = vmatprep.subr.mxu0 0.0
      %632 = vmatpush2.msra.mxu0 0.0
      %633 = vmatprep.subr.mxu0 0.0
      %634 = vmatpush2.msra.mxu0 0.0
      %635 = vmatprep.subr.mxu0 0.0
      %636 = vmatpush2.msra.mxu0 0.0
      %637 = vmatprep.subr.mxu0 0.0
      %638 = vmatpush2.msra.mxu0 0.0
      %639 = vmatprep.subr.mxu0 0.0
      %640 = vmatpush2.msra.mxu0 0.0
      %641 = vmatprep.subr.mxu0 0.0
      %642 = vmatpush2.msra.mxu0 0.0
      %643 = vmatprep.subr.mxu0 0.0
      %644 = vmatpush2.msra.mxu0 0.0
      %645 = vmatprep.subr.mxu0 0.0
      %646 = vmatpush2.msra.mxu0 0.0
      %647 = vmatprep.subr.mxu0 0.0
      %648 = vmatpush2.msra.mxu0 0.0
      %649 = vmatprep.mubr.f32.mxu0 0.0
      %v650 = vand.u32 %v291, 4294901760
      %651 = vmatmul.mubr.f32.gmra.mxu0 %v650
      %v652 = vpop.f32.mrf.mxu0
      %v653 = vadd.f32 %v417, %v652
      %v654 = vpop.f32.mrf.mxu0
      %655 = vmatprep.mubr.f32.mxu0 0.0
      %v656 = vand.u32 %v294, 4294901760
      %657 = vmatmul.mubr.f32.gmra.mxu0 %v656
      %v658 = vpop.f32.mrf.mxu0
      %v659 = vadd.f32 %v427, %v658
      %v660 = vpop.f32.mrf.mxu0
      %661 = vmatprep.mubr.f32.mxu0 0.0
      %v662 = vand.u32 %v297, 4294901760
      %663 = vmatmul.mubr.f32.gmra.mxu0 %v662
      %v664 = vpop.f32.mrf.mxu0
      %v665 = vadd.f32 %v437, %v664
      %v666 = vpop.f32.mrf.mxu0
      %667 = vmatprep.mubr.f32.mxu0 0.0
      %v668 = vand.u32 %v300, 4294901760
      %669 = vmatmul.mubr.f32.gmra.mxu0 %v668
      %v670 = vpop.f32.mrf.mxu0
      %v671 = vadd.f32 %v447, %v670
      %v672 = vpop.f32.mrf.mxu0
      %673 = vmatprep.mubr.f32.mxu0 0.0
      %v674 = vand.u32 %v303, 4294901760
      %675 = vmatmul.mubr.f32.gmra.mxu0 %v674
      %v676 = vpop.f32.mrf.mxu0
      %v677 = vadd.f32 %v457, %v676
      %v678 = vpop.f32.mrf.mxu0
      %679 = vmatprep.mubr.f32.mxu0 0.0
      %v680 = vand.u32 %v306, 4294901760
      %681 = vmatmul.mubr.f32.gmra.mxu0 %v680
      %v682 = vpop.f32.mrf.mxu0
      %v683 = vadd.f32 %v467, %v682
      %v684 = vpop.f32.mrf.mxu0
      %685 = vmatprep.mubr.f32.mxu0 0.0
      %v686 = vand.u32 %v309, 4294901760
      %687 = vmatmul.mubr.f32.gmra.mxu0 %v686
      %v688 = vpop.f32.mrf.mxu0
      %v689 = vadd.f32 %v477, %v688
      %v690 = vpop.f32.mrf.mxu0
      %691 = vmatprep.mubr.f32.mxu0 0.0
      %v692 = vand.u32 %v312, 4294901760
      %693 = vmatmul.mubr.f32.gmra.mxu0 %v692
      %v694 = vpop.f32.mrf.mxu0
      %v695 = vadd.f32 %v487, %v694
      %v696 = vpop.f32.mrf.mxu0
      %697 = vmatprep.mubr.f32.mxu0 0.0
      %v698 = vand.u32 %v315, 4294901760
      %699 = vmatmul.mubr.f32.gmra.mxu0 %v698
      %v700 = vpop.f32.mrf.mxu0
      %v701 = vadd.f32 %v497, %v700
      %v702 = vpop.f32.mrf.mxu0
      %703 = vmatprep.mubr.f32.mxu0 0.0
      %v704 = vand.u32 %v318, 4294901760
      %705 = vmatmul.mubr.f32.gmra.mxu0 %v704
      %v706 = vpop.f32.mrf.mxu0
      %v707 = vadd.f32 %v507, %v706
      %v708 = vpop.f32.mrf.mxu0
      %709 = vmatprep.mubr.f32.mxu0 0.0
      %v710 = vand.u32 %v321, 4294901760
      %711 = vmatmul.mubr.f32.gmra.mxu0 %v710
      %v712 = vpop.f32.mrf.mxu0
      %v713 = vadd.f32 %v517, %v712
      %v714 = vpop.f32.mrf.mxu0
      %715 = vmatprep.mubr.f32.mxu0 0.0
      %v716 = vand.u32 %v324, 4294901760
      %717 = vmatmul.mubr.f32.gmra.mxu0 %v716
      %v718 = vpop.f32.mrf.mxu0
      %v719 = vadd.f32 %v527, %v718
      %v720 = vpop.f32.mrf.mxu0
      %721 = vmatprep.mubr.f32.mxu0 0.0
      %v722 = vand.u32 %v327, 4294901760
      %723 = vmatmul.mubr.f32.gmra.mxu0 %v722
      %v724 = vpop.f32.mrf.mxu0
      %v725 = vadd.f32 %v537, %v724
      %v726 = vpop.f32.mrf.mxu0
      %727 = vmatprep.mubr.f32.mxu0 0.0
      %v728 = vand.u32 %v330, 4294901760
      %729 = vmatmul.mubr.f32.gmra.mxu0 %v728
      %v730 = vpop.f32.mrf.mxu0
      %v731 = vadd.f32 %v547, %v730
      %v732 = vpop.f32.mrf.mxu0
      %733 = vmatprep.mubr.f32.mxu0 0.0
      %v734 = vand.u32 %v333, 4294901760
      %735 = vmatmul.mubr.f32.gmra.mxu0 %v734
      %v736 = vpop.f32.mrf.mxu0
      %v737 = vadd.f32 %v557, %v736
      %v738 = vpop.f32.mrf.mxu0
      %739 = vmatprep.mubr.f32.mxu0 0.0
      %v740 = vand.u32 %v336, 4294901760
      %741 = vmatmul.mubr.f32.gmra.mxu0 %v740
      %v742 = vpop.f32.mrf.mxu0
      %v743 = vadd.f32 %v567, %v742
      %v744 = vpop.f32.mrf.mxu0
      %745 = vdwg.mxu0
      %746 = vmatprep.subr.mxu0 0.0
      %747 = vmatpush1.msra.mxu0 0.0
      %748 = vmatprep.subr.mxu0 0.0
      %749 = vmatpush1.msra.mxu0 0.0
      %750 = vmatprep.subr.mxu0 0.0
      %751 = vmatpush1.msra.mxu0 0.0
      %752 = vmatprep.subr.mxu0 0.0
      %753 = vmatpush1.msra.mxu0 0.0
      %754 = vmatprep.subr.mxu0 0.0
      %755 = vmatpush1.msra.mxu0 0.0
      %756 = vmatprep.subr.mxu0 0.0
      %757 = vmatpush1.msra.mxu0 0.0
      %758 = vmatprep.subr.mxu0 0.0
      %759 = vmatpush1.msra.mxu0 0.0
      %760 = vmatprep.subr.mxu0 0.0
      %761 = vmatpush1.msra.mxu0 0.0
      %762 = vmatprep.subr.mxu0 0.0
      %763 = vmatpush1.msra.mxu0 0.0
      %764 = vmatprep.subr.mxu0 0.0
      %765 = vmatpush1.msra.mxu0 0.0
      %766 = vmatprep.subr.mxu0 0.0
      %767 = vmatpush1.msra.mxu0 0.0
      %768 = vmatprep.subr.mxu0 0.0
      %769 = vmatpush1.msra.mxu0 0.0
      %770 = vmatprep.subr.mxu0 0.0
      %771 = vmatpush1.msra.mxu0 0.0
      %772 = vmatprep.subr.mxu0 0.0
      %v773 = vand.u32 %v340, 4294901760
      %v774 = vsub.f32 %v340, %v773
      %775 = vmatpush1.msra.mxu0 %v774
      %776 = vmatprep.subr.mxu0 0.0
      %v777 = vand.u32 %v171, 4294901760
      %v778 = vsub.f32 %v171, %v777
      %779 = vmatpush1.msra.mxu0 %v778
      %780 = vmatprep.subr.mxu0 0.0
      %v781 = vand.u32 %v170, 4294901760
      %v782 = vsub.f32 %v170, %v781
      %783 = vmatpush1.msra.mxu0 %v782
      %784 = vmatprep.subr.mxu0 0.0
      %785 = vmatpush2.msra.mxu0 0.0
      %786 = vmatprep.subr.mxu0 0.0
      %787 = vmatpush2.msra.mxu0 0.0
      %788 = vmatprep.subr.mxu0 0.0
      %789 = vmatpush2.msra.mxu0 0.0
      %790 = vmatprep.subr.mxu0 0.0
      %791 = vmatpush2.msra.mxu0 0.0
      %792 = vmatprep.subr.mxu0 0.0
      %793 = vmatpush2.msra.mxu0 0.0
      %794 = vmatprep.subr.mxu0 0.0
      %795 = vmatpush2.msra.mxu0 0.0
      %796 = vmatprep.subr.mxu0 0.0
      %797 = vmatpush2.msra.mxu0 0.0
      %798 = vmatprep.subr.mxu0 0.0
      %799 = vmatpush2.msra.mxu0 0.0
      %800 = vmatprep.subr.mxu0 0.0
      %801 = vmatpush2.msra.mxu0 0.0
      %802 = vmatprep.subr.mxu0 0.0
      %803 = vmatpush2.msra.mxu0 0.0
      %804 = vmatprep.subr.mxu0 0.0
      %805 = vmatpush2.msra.mxu0 0.0
      %806 = vmatprep.subr.mxu0 0.0
      %807 = vmatpush2.msra.mxu0 0.0
      %808 = vmatprep.subr.mxu0 0.0
      %809 = vmatpush2.msra.mxu0 0.0
      %810 = vmatprep.subr.mxu0 0.0
      %811 = vmatpush2.msra.mxu0 0.0
      %812 = vmatprep.subr.mxu0 0.0
      %813 = vmatpush2.msra.mxu0 0.0
      %814 = vmatprep.subr.mxu0 0.0
      %815 = vmatpush2.msra.mxu0 0.0
      %816 = vmatprep.mubr.f32.mxu0 0.0
      %v817 = vand.u32 %v291, 4294901760
      %v818 = vsub.f32 %v291, %v817
      %819 = vmatmul.mubr.f32.gmra.mxu0 %v818
      %v820 = vpop.f32.mrf.mxu0
      %v821 = vadd.f32 %v653, %v820
      %v822 = vpop.f32.mrf.mxu0
      %823 = vmatprep.mubr.f32.mxu0 0.0
      %v824 = vand.u32 %v294, 4294901760
      %v825 = vsub.f32 %v294, %v824
      %826 = vmatmul.mubr.f32.gmra.mxu0 %v825
      %v827 = vpop.f32.mrf.mxu0
      %v828 = vadd.f32 %v659, %v827
      %v829 = vpop.f32.mrf.mxu0
      %830 = vmatprep.mubr.f32.mxu0 0.0
      %v831 = vand.u32 %v297, 4294901760
      %v832 = vsub.f32 %v297, %v831
      %833 = vmatmul.mubr.f32.gmra.mxu0 %v832
      %v834 = vpop.f32.mrf.mxu0
      %v835 = vadd.f32 %v665, %v834
      %v836 = vpop.f32.mrf.mxu0
      %837 = vmatprep.mubr.f32.mxu0 0.0
      %v838 = vand.u32 %v300, 4294901760
      %v839 = vsub.f32 %v300, %v838
      %840 = vmatmul.mubr.f32.gmra.mxu0 %v839
      %v841 = vpop.f32.mrf.mxu0
      %v842 = vadd.f32 %v671, %v841
      %v843 = vpop.f32.mrf.mxu0
      %844 = vmatprep.mubr.f32.mxu0 0.0
      %v845 = vand.u32 %v303, 4294901760
      %v846 = vsub.f32 %v303, %v845
      %847 = vmatmul.mubr.f32.gmra.mxu0 %v846
      %v848 = vpop.f32.mrf.mxu0
      %v849 = vadd.f32 %v677, %v848
      %v850 = vpop.f32.mrf.mxu0
      %851 = vmatprep.mubr.f32.mxu0 0.0
      %v852 = vand.u32 %v306, 4294901760
      %v853 = vsub.f32 %v306, %v852
      %854 = vmatmul.mubr.f32.gmra.mxu0 %v853
      %v855 = vpop.f32.mrf.mxu0
      %v856 = vadd.f32 %v683, %v855
      %v857 = vpop.f32.mrf.mxu0
      %858 = vmatprep.mubr.f32.mxu0 0.0
      %v859 = vand.u32 %v309, 4294901760
      %v860 = vsub.f32 %v309, %v859
      %861 = vmatmul.mubr.f32.gmra.mxu0 %v860
      %v862 = vpop.f32.mrf.mxu0
      %v863 = vadd.f32 %v689, %v862
      %v864 = vpop.f32.mrf.mxu0
      %865 = vmatprep.mubr.f32.mxu0 0.0
      %v866 = vand.u32 %v312, 4294901760
      %v867 = vsub.f32 %v312, %v866
      %868 = vmatmul.mubr.f32.gmra.mxu0 %v867
      %v869 = vpop.f32.mrf.mxu0
      %v870 = vadd.f32 %v695, %v869
      %v871 = vpop.f32.mrf.mxu0
      %872 = vmatprep.mubr.f32.mxu0 0.0
      %v873 = vand.u32 %v315, 4294901760
      %v874 = vsub.f32 %v315, %v873
      %875 = vmatmul.mubr.f32.gmra.mxu0 %v874
      %v876 = vpop.f32.mrf.mxu0
      %v877 = vadd.f32 %v701, %v876
      %v878 = vpop.f32.mrf.mxu0
      %879 = vmatprep.mubr.f32.mxu0 0.0
      %v880 = vand.u32 %v318, 4294901760
      %v881 = vsub.f32 %v318, %v880
      %882 = vmatmul.mubr.f32.gmra.mxu0 %v881
      %v883 = vpop.f32.mrf.mxu0
      %v884 = vadd.f32 %v707, %v883
      %v885 = vpop.f32.mrf.mxu0
      %886 = vmatprep.mubr.f32.mxu0 0.0
      %v887 = vand.u32 %v321, 4294901760
      %v888 = vsub.f32 %v321, %v887
      %889 = vmatmul.mubr.f32.gmra.mxu0 %v888
      %v890 = vpop.f32.mrf.mxu0
      %v891 = vadd.f32 %v713, %v890
      %v892 = vpop.f32.mrf.mxu0
      %893 = vmatprep.mubr.f32.mxu0 0.0
      %v894 = vand.u32 %v324, 4294901760
      %v895 = vsub.f32 %v324, %v894
      %896 = vmatmul.mubr.f32.gmra.mxu0 %v895
      %v897 = vpop.f32.mrf.mxu0
      %v898 = vadd.f32 %v719, %v897
      %v899 = vpop.f32.mrf.mxu0
      %900 = vmatprep.mubr.f32.mxu0 0.0
      %v901 = vand.u32 %v327, 4294901760
      %v902 = vsub.f32 %v327, %v901
      %903 = vmatmul.mubr.f32.gmra.mxu0 %v902
      %v904 = vpop.f32.mrf.mxu0
      %v905 = vadd.f32 %v725, %v904
      %v906 = vpop.f32.mrf.mxu0
      %907 = vmatprep.mubr.f32.mxu0 0.0
      %v908 = vand.u32 %v330, 4294901760
      %v909 = vsub.f32 %v330, %v908
      %910 = vmatmul.mubr.f32.gmra.mxu0 %v909
      %v911 = vpop.f32.mrf.mxu0
      %v912 = vadd.f32 %v731, %v911
      %v913 = vpop.f32.mrf.mxu0
      %914 = vmatprep.mubr.f32.mxu0 0.0
      %v915 = vand.u32 %v333, 4294901760
      %v916 = vsub.f32 %v333, %v915
      %917 = vmatmul.mubr.f32.gmra.mxu0 %v916
      %v918 = vpop.f32.mrf.mxu0
      %v919 = vadd.f32 %v737, %v918
      %v920 = vpop.f32.mrf.mxu0
      %921 = vmatprep.mubr.f32.mxu0 0.0
      %v922 = vand.u32 %v336, 4294901760
      %v923 = vsub.f32 %v336, %v922
      %924 = vmatmul.mubr.f32.gmra.mxu0 %v923
      %v925 = vpop.f32.mrf.mxu0
      %v926 = vadd.f32 %v743, %v925
      %v927 = vpop.f32.mrf.mxu0
      %928 = vdwg.mxu0
      %929 = vmatprep.subr.mxu0 0.0
      %930 = vmatpush1.msra.mxu0 0.0
      %931 = vmatprep.subr.mxu0 0.0
      %932 = vmatpush1.msra.mxu0 0.0
      %933 = vmatprep.subr.mxu0 0.0
      %934 = vmatpush1.msra.mxu0 0.0
      %935 = vmatprep.subr.mxu0 0.0
      %936 = vmatpush1.msra.mxu0 0.0
      %937 = vmatprep.subr.mxu0 0.0
      %938 = vmatpush1.msra.mxu0 0.0
      %939 = vmatprep.subr.mxu0 0.0
      %940 = vmatpush1.msra.mxu0 0.0
      %941 = vmatprep.subr.mxu0 0.0
      %942 = vmatpush1.msra.mxu0 0.0
      %943 = vmatprep.subr.mxu0 0.0
      %944 = vmatpush1.msra.mxu0 0.0
      %945 = vmatprep.subr.mxu0 0.0
      %946 = vmatpush1.msra.mxu0 0.0
      %947 = vmatprep.subr.mxu0 0.0
      %948 = vmatpush1.msra.mxu0 0.0
      %949 = vmatprep.subr.mxu0 0.0
      %950 = vmatpush1.msra.mxu0 0.0
      %951 = vmatprep.subr.mxu0 0.0
      %952 = vmatpush1.msra.mxu0 0.0
      %953 = vmatprep.subr.mxu0 0.0
      %954 = vmatpush1.msra.mxu0 0.0
      %955 = vmatprep.subr.mxu0 0.0
      %v956 = vand.u32 %v340, 4294901760
      %957 = vmatpush1.msra.mxu0 %v956
      %958 = vmatprep.subr.mxu0 0.0
      %v959 = vand.u32 %v171, 4294901760
      %960 = vmatpush1.msra.mxu0 %v959
      %961 = vmatprep.subr.mxu0 0.0
      %v962 = vand.u32 %v170, 4294901760
      %963 = vmatpush1.msra.mxu0 %v962
      %964 = vmatprep.subr.mxu0 0.0
      %965 = vmatpush2.msra.mxu0 0.0
      %966 = vmatprep.subr.mxu0 0.0
      %967 = vmatpush2.msra.mxu0 0.0
      %968 = vmatprep.subr.mxu0 0.0
      %969 = vmatpush2.msra.mxu0 0.0
      %970 = vmatprep.subr.mxu0 0.0
      %971 = vmatpush2.msra.mxu0 0.0
      %972 = vmatprep.subr.mxu0 0.0
      %973 = vmatpush2.msra.mxu0 0.0
      %974 = vmatprep.subr.mxu0 0.0
      %975 = vmatpush2.msra.mxu0 0.0
      %976 = vmatprep.subr.mxu0 0.0
      %977 = vmatpush2.msra.mxu0 0.0
      %978 = vmatprep.subr.mxu0 0.0
      %979 = vmatpush2.msra.mxu0 0.0
      %980 = vmatprep.subr.mxu0 0.0
      %981 = vmatpush2.msra.mxu0 0.0
      %982 = vmatprep.subr.mxu0 0.0
      %983 = vmatpush2.msra.mxu0 0.0
      %984 = vmatprep.subr.mxu0 0.0
      %985 = vmatpush2.msra.mxu0 0.0
      %986 = vmatprep.subr.mxu0 0.0
      %987 = vmatpush2.msra.mxu0 0.0
      %988 = vmatprep.subr.mxu0 0.0
      %989 = vmatpush2.msra.mxu0 0.0
      %990 = vmatprep.subr.mxu0 0.0
      %991 = vmatpush2.msra.mxu0 0.0
      %992 = vmatprep.subr.mxu0 0.0
      %993 = vmatpush2.msra.mxu0 0.0
      %994 = vmatprep.subr.mxu0 0.0
      %995 = vmatpush2.msra.mxu0 0.0
      %996 = vmatprep.mubr.f32.mxu0 0.0
      %v997 = vand.u32 %v291, 4294901760
      %v998 = vsub.f32 %v291, %v997
      %v999 = vand.u32 %v998, 4294901760
      %1000 = vmatmul.mubr.f32.gmra.mxu0 %v999
      %v1001 = vpop.f32.mrf.mxu0
      %v1002 = vadd.f32 %v821, %v1001
      %v1003 = vpop.f32.mrf.mxu0
      %1004 = vmatprep.mubr.f32.mxu0 0.0
      %v1005 = vand.u32 %v294, 4294901760
      %v1006 = vsub.f32 %v294, %v1005
      %v1007 = vand.u32 %v1006, 4294901760
      %1008 = vmatmul.mubr.f32.gmra.mxu0 %v1007
      %v1009 = vpop.f32.mrf.mxu0
      %v1010 = vadd.f32 %v828, %v1009
      %v1011 = vpop.f32.mrf.mxu0
      %1012 = vmatprep.mubr.f32.mxu0 0.0
      %v1013 = vand.u32 %v297, 4294901760
      %v1014 = vsub.f32 %v297, %v1013
      %v1015 = vand.u32 %v1014, 4294901760
      %1016 = vmatmul.mubr.f32.gmra.mxu0 %v1015
      %v1017 = vpop.f32.mrf.mxu0
      %v1018 = vadd.f32 %v835, %v1017
      %v1019 = vpop.f32.mrf.mxu0
      %1020 = vmatprep.mubr.f32.mxu0 0.0
      %v1021 = vand.u32 %v300, 4294901760
      %v1022 = vsub.f32 %v300, %v1021
      %v1023 = vand.u32 %v1022, 4294901760
      %1024 = vmatmul.mubr.f32.gmra.mxu0 %v1023
      %v1025 = vpop.f32.mrf.mxu0
      %v1026 = vadd.f32 %v842, %v1025
      %v1027 = vpop.f32.mrf.mxu0
      %1028 = vmatprep.mubr.f32.mxu0 0.0
      %v1029 = vand.u32 %v303, 4294901760
      %v1030 = vsub.f32 %v303, %v1029
      %v1031 = vand.u32 %v1030, 4294901760
      %1032 = vmatmul.mubr.f32.gmra.mxu0 %v1031
      %v1033 = vpop.f32.mrf.mxu0
      %v1034 = vadd.f32 %v849, %v1033
      %v1035 = vpop.f32.mrf.mxu0
      %1036 = vmatprep.mubr.f32.mxu0 0.0
      %v1037 = vand.u32 %v306, 4294901760
      %v1038 = vsub.f32 %v306, %v1037
      %v1039 = vand.u32 %v1038, 4294901760
      %1040 = vmatmul.mubr.f32.gmra.mxu0 %v1039
      %v1041 = vpop.f32.mrf.mxu0
      %v1042 = vadd.f32 %v856, %v1041
      %v1043 = vpop.f32.mrf.mxu0
      %1044 = vmatprep.mubr.f32.mxu0 0.0
      %v1045 = vand.u32 %v309, 4294901760
      %v1046 = vsub.f32 %v309, %v1045
      %v1047 = vand.u32 %v1046, 4294901760
      %1048 = vmatmul.mubr.f32.gmra.mxu0 %v1047
      %v1049 = vpop.f32.mrf.mxu0
      %v1050 = vadd.f32 %v863, %v1049
      %v1051 = vpop.f32.mrf.mxu0
      %1052 = vmatprep.mubr.f32.mxu0 0.0
      %v1053 = vand.u32 %v312, 4294901760
      %v1054 = vsub.f32 %v312, %v1053
      %v1055 = vand.u32 %v1054, 4294901760
      %1056 = vmatmul.mubr.f32.gmra.mxu0 %v1055
      %v1057 = vpop.f32.mrf.mxu0
      %v1058 = vadd.f32 %v870, %v1057
      %v1059 = vpop.f32.mrf.mxu0
      %1060 = vmatprep.mubr.f32.mxu0 0.0
      %v1061 = vand.u32 %v315, 4294901760
      %v1062 = vsub.f32 %v315, %v1061
      %v1063 = vand.u32 %v1062, 4294901760
      %1064 = vmatmul.mubr.f32.gmra.mxu0 %v1063
      %v1065 = vpop.f32.mrf.mxu0
      %v1066 = vadd.f32 %v877, %v1065
      %v1067 = vpop.f32.mrf.mxu0
      %1068 = vmatprep.mubr.f32.mxu0 0.0
      %v1069 = vand.u32 %v318, 4294901760
      %v1070 = vsub.f32 %v318, %v1069
      %v1071 = vand.u32 %v1070, 4294901760
      %1072 = vmatmul.mubr.f32.gmra.mxu0 %v1071
      %v1073 = vpop.f32.mrf.mxu0
      %v1074 = vadd.f32 %v884, %v1073
      %v1075 = vpop.f32.mrf.mxu0
      %1076 = vmatprep.mubr.f32.mxu0 0.0
      %v1077 = vand.u32 %v321, 4294901760
      %v1078 = vsub.f32 %v321, %v1077
      %v1079 = vand.u32 %v1078, 4294901760
      %1080 = vmatmul.mubr.f32.gmra.mxu0 %v1079
      %v1081 = vpop.f32.mrf.mxu0
      %v1082 = vadd.f32 %v891, %v1081
      %v1083 = vpop.f32.mrf.mxu0
      %1084 = vmatprep.mubr.f32.mxu0 0.0
      %v1085 = vand.u32 %v324, 4294901760
      %v1086 = vsub.f32 %v324, %v1085
      %v1087 = vand.u32 %v1086, 4294901760
      %1088 = vmatmul.mubr.f32.gmra.mxu0 %v1087
      %v1089 = vpop.f32.mrf.mxu0
      %v1090 = vadd.f32 %v898, %v1089
      %v1091 = vpop.f32.mrf.mxu0
      %1092 = vmatprep.mubr.f32.mxu0 0.0
      %v1093 = vand.u32 %v327, 4294901760
      %v1094 = vsub.f32 %v327, %v1093
      %v1095 = vand.u32 %v1094, 4294901760
      %1096 = vmatmul.mubr.f32.gmra.mxu0 %v1095
      %v1097 = vpop.f32.mrf.mxu0
      %v1098 = vadd.f32 %v905, %v1097
      %v1099 = vpop.f32.mrf.mxu0
      %1100 = vmatprep.mubr.f32.mxu0 0.0
      %v1101 = vand.u32 %v330, 4294901760
      %v1102 = vsub.f32 %v330, %v1101
      %v1103 = vand.u32 %v1102, 4294901760
      %1104 = vmatmul.mubr.f32.gmra.mxu0 %v1103
      %v1105 = vpop.f32.mrf.mxu0
      %v1106 = vadd.f32 %v912, %v1105
      %v1107 = vpop.f32.mrf.mxu0
      %1108 = vmatprep.mubr.f32.mxu0 0.0
      %v1109 = vand.u32 %v333, 4294901760
      %v1110 = vsub.f32 %v333, %v1109
      %v1111 = vand.u32 %v1110, 4294901760
      %1112 = vmatmul.mubr.f32.gmra.mxu0 %v1111
      %v1113 = vpop.f32.mrf.mxu0
      %v1114 = vadd.f32 %v919, %v1113
      %v1115 = vpop.f32.mrf.mxu0
      %1116 = vmatprep.mubr.f32.mxu0 0.0
      %v1117 = vand.u32 %v336, 4294901760
      %v1118 = vsub.f32 %v336, %v1117
      %v1119 = vand.u32 %v1118, 4294901760
      %1120 = vmatmul.mubr.f32.gmra.mxu0 %v1119
      %v1121 = vpop.f32.mrf.mxu0
      %v1122 = vadd.f32 %v926, %v1121
      %v1123 = vpop.f32.mrf.mxu0
      %1124 = vdwg.mxu0
      %1125 = vmatprep.subr.mxu0 0.0
      %1126 = vmatpush1.msra.mxu0 0.0
      %1127 = vmatprep.subr.mxu0 0.0
      %1128 = vmatpush1.msra.mxu0 0.0
      %1129 = vmatprep.subr.mxu0 0.0
      %1130 = vmatpush1.msra.mxu0 0.0
      %1131 = vmatprep.subr.mxu0 0.0
      %1132 = vmatpush1.msra.mxu0 0.0
      %1133 = vmatprep.subr.mxu0 0.0
      %1134 = vmatpush1.msra.mxu0 0.0
      %1135 = vmatprep.subr.mxu0 0.0
      %1136 = vmatpush1.msra.mxu0 0.0
      %1137 = vmatprep.subr.mxu0 0.0
      %1138 = vmatpush1.msra.mxu0 0.0
      %1139 = vmatprep.subr.mxu0 0.0
      %1140 = vmatpush1.msra.mxu0 0.0
      %1141 = vmatprep.subr.mxu0 0.0
      %1142 = vmatpush1.msra.mxu0 0.0
      %1143 = vmatprep.subr.mxu0 0.0
      %1144 = vmatpush1.msra.mxu0 0.0
      %1145 = vmatprep.subr.mxu0 0.0
      %1146 = vmatpush1.msra.mxu0 0.0
      %1147 = vmatprep.subr.mxu0 0.0
      %1148 = vmatpush1.msra.mxu0 0.0
      %1149 = vmatprep.subr.mxu0 0.0
      %1150 = vmatpush1.msra.mxu0 0.0
      %1151 = vmatprep.subr.mxu0 0.0
      %v1152 = vand.u32 %v340, 4294901760
      %v1153 = vsub.f32 %v340, %v1152
      %v1154 = vand.u32 %v1153, 4294901760
      %1155 = vmatpush1.msra.mxu0 %v1154
      %1156 = vmatprep.subr.mxu0 0.0
      %v1157 = vand.u32 %v171, 4294901760
      %v1158 = vsub.f32 %v171, %v1157
      %v1159 = vand.u32 %v1158, 4294901760
      %1160 = vmatpush1.msra.mxu0 %v1159
      %1161 = vmatprep.subr.mxu0 0.0
      %v1162 = vand.u32 %v170, 4294901760
      %v1163 = vsub.f32 %v170, %v1162
      %v1164 = vand.u32 %v1163, 4294901760
      %1165 = vmatpush1.msra.mxu0 %v1164
      %1166 = vmatprep.subr.mxu0 0.0
      %1167 = vmatpush2.msra.mxu0 0.0
      %1168 = vmatprep.subr.mxu0 0.0
      %1169 = vmatpush2.msra.mxu0 0.0
      %1170 = vmatprep.subr.mxu0 0.0
      %1171 = vmatpush2.msra.mxu0 0.0
      %1172 = vmatprep.subr.mxu0 0.0
      %1173 = vmatpush2.msra.mxu0 0.0
      %1174 = vmatprep.subr.mxu0 0.0
      %1175 = vmatpush2.msra.mxu0 0.0
      %1176 = vmatprep.subr.mxu0 0.0
      %1177 = vmatpush2.msra.mxu0 0.0
      %1178 = vmatprep.subr.mxu0 0.0
      %1179 = vmatpush2.msra.mxu0 0.0
      %1180 = vmatprep.subr.mxu0 0.0
      %1181 = vmatpush2.msra.mxu0 0.0
      %1182 = vmatprep.subr.mxu0 0.0
      %1183 = vmatpush2.msra.mxu0 0.0
      %1184 = vmatprep.subr.mxu0 0.0
      %1185 = vmatpush2.msra.mxu0 0.0
      %1186 = vmatprep.subr.mxu0 0.0
      %1187 = vmatpush2.msra.mxu0 0.0
      %1188 = vmatprep.subr.mxu0 0.0
      %1189 = vmatpush2.msra.mxu0 0.0
      %1190 = vmatprep.subr.mxu0 0.0
      %1191 = vmatpush2.msra.mxu0 0.0
      %1192 = vmatprep.subr.mxu0 0.0
      %1193 = vmatpush2.msra.mxu0 0.0
      %1194 = vmatprep.subr.mxu0 0.0
      %1195 = vmatpush2.msra.mxu0 0.0
      %1196 = vmatprep.subr.mxu0 0.0
      %1197 = vmatpush2.msra.mxu0 0.0
      %1198 = vmatprep.mubr.f32.mxu0 0.0
      %v1199 = vand.u32 %v291, 4294901760
      %1200 = vmatmul.mubr.f32.gmra.mxu0 %v1199
      %v1201 = vpop.f32.mrf.mxu0
      %v1202 = vadd.f32 %v1002, %v1201
      %v1203 = vpop.f32.mrf.mxu0
      %1204 = vmatprep.mubr.f32.mxu0 0.0
      %v1205 = vand.u32 %v294, 4294901760
      %1206 = vmatmul.mubr.f32.gmra.mxu0 %v1205
      %v1207 = vpop.f32.mrf.mxu0
      %v1208 = vadd.f32 %v1010, %v1207
      %v1209 = vpop.f32.mrf.mxu0
      %1210 = vmatprep.mubr.f32.mxu0 0.0
      %v1211 = vand.u32 %v297, 4294901760
      %1212 = vmatmul.mubr.f32.gmra.mxu0 %v1211
      %v1213 = vpop.f32.mrf.mxu0
      %v1214 = vadd.f32 %v1018, %v1213
      %v1215 = vpop.f32.mrf.mxu0
      %1216 = vmatprep.mubr.f32.mxu0 0.0
      %v1217 = vand.u32 %v300, 4294901760
      %1218 = vmatmul.mubr.f32.gmra.mxu0 %v1217
      %v1219 = vpop.f32.mrf.mxu0
      %v1220 = vadd.f32 %v1026, %v1219
      %v1221 = vpop.f32.mrf.mxu0
      %1222 = vmatprep.mubr.f32.mxu0 0.0
      %v1223 = vand.u32 %v303, 4294901760
      %1224 = vmatmul.mubr.f32.gmra.mxu0 %v1223
      %v1225 = vpop.f32.mrf.mxu0
      %v1226 = vadd.f32 %v1034, %v1225
      %v1227 = vpop.f32.mrf.mxu0
      %1228 = vmatprep.mubr.f32.mxu0 0.0
      %v1229 = vand.u32 %v306, 4294901760
      %1230 = vmatmul.mubr.f32.gmra.mxu0 %v1229
      %v1231 = vpop.f32.mrf.mxu0
      %v1232 = vadd.f32 %v1042, %v1231
      %v1233 = vpop.f32.mrf.mxu0
      %1234 = vmatprep.mubr.f32.mxu0 0.0
      %v1235 = vand.u32 %v309, 4294901760
      %1236 = vmatmul.mubr.f32.gmra.mxu0 %v1235
      %v1237 = vpop.f32.mrf.mxu0
      %v1238 = vadd.f32 %v1050, %v1237
      %v1239 = vpop.f32.mrf.mxu0
      %1240 = vmatprep.mubr.f32.mxu0 0.0
      %v1241 = vand.u32 %v312, 4294901760
      %1242 = vmatmul.mubr.f32.gmra.mxu0 %v1241
      %v1243 = vpop.f32.mrf.mxu0
      %v1244 = vadd.f32 %v1058, %v1243
      %v1245 = vpop.f32.mrf.mxu0
      %1246 = vmatprep.mubr.f32.mxu0 0.0
      %v1247 = vand.u32 %v315, 4294901760
      %1248 = vmatmul.mubr.f32.gmra.mxu0 %v1247
      %v1249 = vpop.f32.mrf.mxu0
      %v1250 = vadd.f32 %v1066, %v1249
      %v1251 = vpop.f32.mrf.mxu0
      %1252 = vmatprep.mubr.f32.mxu0 0.0
      %v1253 = vand.u32 %v318, 4294901760
      %1254 = vmatmul.mubr.f32.gmra.mxu0 %v1253
      %v1255 = vpop.f32.mrf.mxu0
      %v1256 = vadd.f32 %v1074, %v1255
      %v1257 = vpop.f32.mrf.mxu0
      %1258 = vmatprep.mubr.f32.mxu0 0.0
      %v1259 = vand.u32 %v321, 4294901760
      %1260 = vmatmul.mubr.f32.gmra.mxu0 %v1259
      %v1261 = vpop.f32.mrf.mxu0
      %v1262 = vadd.f32 %v1082, %v1261
      %v1263 = vpop.f32.mrf.mxu0
      %1264 = vmatprep.mubr.f32.mxu0 0.0
      %v1265 = vand.u32 %v324, 4294901760
      %1266 = vmatmul.mubr.f32.gmra.mxu0 %v1265
      %v1267 = vpop.f32.mrf.mxu0
      %v1268 = vadd.f32 %v1090, %v1267
      %v1269 = vpop.f32.mrf.mxu0
      %1270 = vmatprep.mubr.f32.mxu0 0.0
      %v1271 = vand.u32 %v327, 4294901760
      %1272 = vmatmul.mubr.f32.gmra.mxu0 %v1271
      %v1273 = vpop.f32.mrf.mxu0
      %v1274 = vadd.f32 %v1098, %v1273
      %v1275 = vpop.f32.mrf.mxu0
      %1276 = vmatprep.mubr.f32.mxu0 0.0
      %v1277 = vand.u32 %v330, 4294901760
      %1278 = vmatmul.mubr.f32.gmra.mxu0 %v1277
      %v1279 = vpop.f32.mrf.mxu0
      %v1280 = vadd.f32 %v1106, %v1279
      %v1281 = vpop.f32.mrf.mxu0
      %1282 = vmatprep.mubr.f32.mxu0 0.0
      %v1283 = vand.u32 %v333, 4294901760
      %1284 = vmatmul.mubr.f32.gmra.mxu0 %v1283
      %v1285 = vpop.f32.mrf.mxu0
      %v1286 = vadd.f32 %v1114, %v1285
      %v1287 = vpop.f32.mrf.mxu0
      %1288 = vmatprep.mubr.f32.mxu0 0.0
      %v1289 = vand.u32 %v336, 4294901760
      %1290 = vmatmul.mubr.f32.gmra.mxu0 %v1289
      %v1291 = vpop.f32.mrf.mxu0
      %v1292 = vadd.f32 %v1122, %v1291
      %v1293 = vpop.f32.mrf.mxu0
      %1294 = vdwg.mxu0
      %1295 = vmatprep.subr.mxu0 0.0
      %1296 = vmatpush1.msra.mxu0 0.0
      %1297 = vmatprep.subr.mxu0 0.0
      %1298 = vmatpush1.msra.mxu0 0.0
      %1299 = vmatprep.subr.mxu0 0.0
      %1300 = vmatpush1.msra.mxu0 0.0
      %1301 = vmatprep.subr.mxu0 0.0
      %1302 = vmatpush1.msra.mxu0 0.0
      %1303 = vmatprep.subr.mxu0 0.0
      %1304 = vmatpush1.msra.mxu0 0.0
      %1305 = vmatprep.subr.mxu0 0.0
      %1306 = vmatpush1.msra.mxu0 0.0
      %1307 = vmatprep.subr.mxu0 0.0
      %1308 = vmatpush1.msra.mxu0 0.0
      %1309 = vmatprep.subr.mxu0 0.0
      %1310 = vmatpush1.msra.mxu0 0.0
      %1311 = vmatprep.subr.mxu0 0.0
      %1312 = vmatpush1.msra.mxu0 0.0
      %1313 = vmatprep.subr.mxu0 0.0
      %1314 = vmatpush1.msra.mxu0 0.0
      %1315 = vmatprep.subr.mxu0 0.0
      %1316 = vmatpush1.msra.mxu0 0.0
      %1317 = vmatprep.subr.mxu0 0.0
      %1318 = vmatpush1.msra.mxu0 0.0
      %1319 = vmatprep.subr.mxu0 0.0
      %1320 = vmatpush1.msra.mxu0 0.0
      %1321 = vmatprep.subr.mxu0 0.0
      %v1322 = vand.u32 %v340, 4294901760
      %1323 = vmatpush1.msra.mxu0 %v1322
      %1324 = vmatprep.subr.mxu0 0.0
      %v1325 = vand.u32 %v171, 4294901760
      %1326 = vmatpush1.msra.mxu0 %v1325
      %1327 = vmatprep.subr.mxu0 0.0
      %v1328 = vand.u32 %v170, 4294901760
      %1329 = vmatpush1.msra.mxu0 %v1328
      %1330 = vmatprep.subr.mxu0 0.0
      %1331 = vmatpush2.msra.mxu0 0.0
      %1332 = vmatprep.subr.mxu0 0.0
      %1333 = vmatpush2.msra.mxu0 0.0
      %1334 = vmatprep.subr.mxu0 0.0
      %1335 = vmatpush2.msra.mxu0 0.0
      %1336 = vmatprep.subr.mxu0 0.0
      %1337 = vmatpush2.msra.mxu0 0.0
      %1338 = vmatprep.subr.mxu0 0.0
      %1339 = vmatpush2.msra.mxu0 0.0
      %1340 = vmatprep.subr.mxu0 0.0
      %1341 = vmatpush2.msra.mxu0 0.0
      %1342 = vmatprep.subr.mxu0 0.0
      %1343 = vmatpush2.msra.mxu0 0.0
      %1344 = vmatprep.subr.mxu0 0.0
      %1345 = vmatpush2.msra.mxu0 0.0
      %1346 = vmatprep.subr.mxu0 0.0
      %1347 = vmatpush2.msra.mxu0 0.0
      %1348 = vmatprep.subr.mxu0 0.0
      %1349 = vmatpush2.msra.mxu0 0.0
      %1350 = vmatprep.subr.mxu0 0.0
      %1351 = vmatpush2.msra.mxu0 0.0
      %1352 = vmatprep.subr.mxu0 0.0
      %1353 = vmatpush2.msra.mxu0 0.0
      %1354 = vmatprep.subr.mxu0 0.0
      %1355 = vmatpush2.msra.mxu0 0.0
      %1356 = vmatprep.subr.mxu0 0.0
      %1357 = vmatpush2.msra.mxu0 0.0
      %1358 = vmatprep.subr.mxu0 0.0
      %1359 = vmatpush2.msra.mxu0 0.0
      %1360 = vmatprep.subr.mxu0 0.0
      %1361 = vmatpush2.msra.mxu0 0.0
      %1362 = vmatprep.mubr.f32.mxu0 0.0
      %v1363 = vand.u32 %v291, 4294901760
      %1364 = vmatmul.mubr.f32.gmra.mxu0 %v1363
      %v1365 = vpop.f32.mrf.mxu0
      %v1366 = vadd.f32 %v1202, %v1365
      %v1367 = vpop.f32.mrf.mxu0
      %1368 = vmatprep.mubr.f32.mxu0 0.0
      %v1369 = vand.u32 %v294, 4294901760
      %1370 = vmatmul.mubr.f32.gmra.mxu0 %v1369
      %v1371 = vpop.f32.mrf.mxu0
      %v1372 = vadd.f32 %v1208, %v1371
      %v1373 = vpop.f32.mrf.mxu0
      %1374 = vmatprep.mubr.f32.mxu0 0.0
      %v1375 = vand.u32 %v297, 4294901760
      %1376 = vmatmul.mubr.f32.gmra.mxu0 %v1375
      %v1377 = vpop.f32.mrf.mxu0
      %v1378 = vadd.f32 %v1214, %v1377
      %v1379 = vpop.f32.mrf.mxu0
      %1380 = vmatprep.mubr.f32.mxu0 0.0
      %v1381 = vand.u32 %v300, 4294901760
      %1382 = vmatmul.mubr.f32.gmra.mxu0 %v1381
      %v1383 = vpop.f32.mrf.mxu0
      %v1384 = vadd.f32 %v1220, %v1383
      %v1385 = vpop.f32.mrf.mxu0
      %1386 = vmatprep.mubr.f32.mxu0 0.0
      %v1387 = vand.u32 %v303, 4294901760
      %1388 = vmatmul.mubr.f32.gmra.mxu0 %v1387
      %v1389 = vpop.f32.mrf.mxu0
      %v1390 = vadd.f32 %v1226, %v1389
      %v1391 = vpop.f32.mrf.mxu0
      %1392 = vmatprep.mubr.f32.mxu0 0.0
      %v1393 = vand.u32 %v306, 4294901760
      %1394 = vmatmul.mubr.f32.gmra.mxu0 %v1393
      %v1395 = vpop.f32.mrf.mxu0
      %v1396 = vadd.f32 %v1232, %v1395
      %v1397 = vpop.f32.mrf.mxu0
      %1398 = vmatprep.mubr.f32.mxu0 0.0
      %v1399 = vand.u32 %v309, 4294901760
      %1400 = vmatmul.mubr.f32.gmra.mxu0 %v1399
      %v1401 = vpop.f32.mrf.mxu0
      %v1402 = vadd.f32 %v1238, %v1401
      %v1403 = vpop.f32.mrf.mxu0
      %1404 = vmatprep.mubr.f32.mxu0 0.0
      %v1405 = vand.u32 %v312, 4294901760
      %1406 = vmatmul.mubr.f32.gmra.mxu0 %v1405
      %v1407 = vpop.f32.mrf.mxu0
      %v1408 = vadd.f32 %v1244, %v1407
      %v1409 = vpop.f32.mrf.mxu0
      %1410 = vmatprep.mubr.f32.mxu0 0.0
      %v1411 = vand.u32 %v315, 4294901760
      %1412 = vmatmul.mubr.f32.gmra.mxu0 %v1411
      %v1413 = vpop.f32.mrf.mxu0
      %v1414 = vadd.f32 %v1250, %v1413
      %v1415 = vpop.f32.mrf.mxu0
      %1416 = vmatprep.mubr.f32.mxu0 0.0
      %v1417 = vand.u32 %v318, 4294901760
      %1418 = vmatmul.mubr.f32.gmra.mxu0 %v1417
      %v1419 = vpop.f32.mrf.mxu0
      %v1420 = vadd.f32 %v1256, %v1419
      %v1421 = vpop.f32.mrf.mxu0
      %1422 = vmatprep.mubr.f32.mxu0 0.0
      %v1423 = vand.u32 %v321, 4294901760
      %1424 = vmatmul.mubr.f32.gmra.mxu0 %v1423
      %v1425 = vpop.f32.mrf.mxu0
      %v1426 = vadd.f32 %v1262, %v1425
      %v1427 = vpop.f32.mrf.mxu0
      %1428 = vmatprep.mubr.f32.mxu0 0.0
      %v1429 = vand.u32 %v324, 4294901760
      %1430 = vmatmul.mubr.f32.gmra.mxu0 %v1429
      %v1431 = vpop.f32.mrf.mxu0
      %v1432 = vadd.f32 %v1268, %v1431
      %v1433 = vpop.f32.mrf.mxu0
      %1434 = vmatprep.mubr.f32.mxu0 0.0
      %v1435 = vand.u32 %v327, 4294901760
      %1436 = vmatmul.mubr.f32.gmra.mxu0 %v1435
      %v1437 = vpop.f32.mrf.mxu0
      %v1438 = vadd.f32 %v1274, %v1437
      %v1439 = vpop.f32.mrf.mxu0
      %1440 = vmatprep.mubr.f32.mxu0 0.0
      %v1441 = vand.u32 %v330, 4294901760
      %1442 = vmatmul.mubr.f32.gmra.mxu0 %v1441
      %v1443 = vpop.f32.mrf.mxu0
      %v1444 = vadd.f32 %v1280, %v1443
      %v1445 = vpop.f32.mrf.mxu0
      %1446 = vmatprep.mubr.f32.mxu0 0.0
      %v1447 = vand.u32 %v333, 4294901760
      %1448 = vmatmul.mubr.f32.gmra.mxu0 %v1447
      %v1449 = vpop.f32.mrf.mxu0
      %v1450 = vadd.f32 %v1286, %v1449
      %v1451 = vpop.f32.mrf.mxu0
      %1452 = vmatprep.mubr.f32.mxu0 0.0
      %v1453 = vand.u32 %v336, 4294901760
      %1454 = vmatmul.mubr.f32.gmra.mxu0 %v1453
      %v1455 = vpop.f32.mrf.mxu0
      %v1456 = vadd.f32 %v1292, %v1455
      %v1457 = vpop.f32.mrf.mxu0
      %1458 = vdwg.mxu0
      %vm1459 = vcmask 261120
      %1460 = vst.msk [vmem:[%s152] sm:$0xff] %vm1459, %v1366
      %1461 = vst.msk [vmem:[%s152 + $0x8] sm:$0xff] %vm1459, %v1372
      %1462 = vst.msk [vmem:[%s152 + $0x10] sm:$0xff] %vm1459, %v1378
      %1463 = vst.msk [vmem:[%s152 + $0x18] sm:$0xff] %vm1459, %v1384
      %1464 = vst.msk [vmem:[%s152 + $0x20] sm:$0xff] %vm1459, %v1390
      %1465 = vst.msk [vmem:[%s152 + $0x28] sm:$0xff] %vm1459, %v1396
      %1466 = vst.msk [vmem:[%s152 + $0x30] sm:$0xff] %vm1459, %v1402
      %1467 = vst.msk [vmem:[%s152 + $0x38] sm:$0xff] %vm1459, %v1408
      %1468 = vst.msk [vmem:[%s152 + $0x40] sm:$0xff] %vm1459, %v1414
      %1469 = vst.msk [vmem:[%s152 + $0x48] sm:$0xff] %vm1459, %v1420
      %1470 = vst.msk [vmem:[%s152 + $0x50] sm:$0xff] %vm1459, %v1426
      %1471 = vst.msk [vmem:[%s152 + $0x58] sm:$0xff] %vm1459, %v1432
      %1472 = vst.msk [vmem:[%s152 + $0x60] sm:$0xff] %vm1459, %v1438
      %1473 = vst.msk [vmem:[%s152 + $0x68] sm:$0xff] %vm1459, %v1444
      %1474 = vst.msk [vmem:[%s152 + $0x70] sm:$0xff] %vm1459, %v1450
      %1475 = vst.msk [vmem:[%s152 + $0x78] sm:$0xff] %vm1459, %v1456
      %s1476 = sld [smem:[#allocation3 + $0x1]]
      %v1477 = vstv %s1476
      %v1478 = vadd.s32 %v154, %v1477
      %v1479 = vadd.s32 %v155, %v1477
      %v1480 = vadd.s32 %v156, %v1477
      %v1481 = vadd.s32 %v157, %v1477
      %v1482 = vadd.s32 %v158, %v1477
      %v1483 = vadd.s32 %v159, %v1477
      %v1484 = vadd.s32 %v160, %v1477
      %v1485 = vadd.s32 %v161, %v1477
      %v1486 = vadd.s32 %v162, %v1477
      %v1487 = vadd.s32 %v163, %v1477
      %v1488 = vadd.s32 %v164, %v1477
      %v1489 = vadd.s32 %v165, %v1477
      %v1490 = vadd.s32 %v166, %v1477
      %v1491 = vadd.s32 %v167, %v1477
      %v1492 = vadd.s32 %v168, %v1477
      %v1493 = vadd.s32 %v169, %v1477
      %1494 = vset.pattern.permute.xlu0 1
      %1495 = vperm.xlu0 %1494, %v1478
      %v1496 = vpop.permute.xlu0 %1495
      %1497 = vset.pattern.permute.xlu0 1
      %1498 = vperm.xlu0 %1497, %v1479
      %v1499 = vpop.permute.xlu0 %1498
      %1500 = vset.pattern.permute.xlu0 1
      %1501 = vperm.xlu0 %1500, %v1480
      %v1502 = vpop.permute.xlu0 %1501
      %1503 = vset.pattern.permute.xlu0 1
      %1504 = vperm.xlu0 %1503, %v1481
      %v1505 = vpop.permute.xlu0 %1504
      %1506 = vset.pattern.permute.xlu0 1
      %1507 = vperm.xlu0 %1506, %v1482
      %v1508 = vpop.permute.xlu0 %1507
      %1509 = vset.pattern.permute.xlu0 1
      %1510 = vperm.xlu0 %1509, %v1483
      %v1511 = vpop.permute.xlu0 %1510
      %1512 = vset.pattern.permute.xlu0 1
      %1513 = vperm.xlu0 %1512, %v1484
      %v1514 = vpop.permute.xlu0 %1513
      %1515 = vset.pattern.permute.xlu0 1
      %1516 = vperm.xlu0 %1515, %v1485
      %v1517 = vpop.permute.xlu0 %1516
      %1518 = vset.pattern.permute.xlu0 1
      %1519 = vperm.xlu0 %1518, %v1486
      %v1520 = vpop.permute.xlu0 %1519
      %1521 = vset.pattern.permute.xlu0 1
      %1522 = vperm.xlu0 %1521, %v1487
      %v1523 = vpop.permute.xlu0 %1522
      %1524 = vset.pattern.permute.xlu0 1
      %1525 = vperm.xlu0 %1524, %v1488
      %v1526 = vpop.permute.xlu0 %1525
      %1527 = vset.pattern.permute.xlu0 1
      %1528 = vperm.xlu0 %1527, %v1489
      %v1529 = vpop.permute.xlu0 %1528
      %1530 = vset.pattern.permute.xlu0 1
      %1531 = vperm.xlu0 %1530, %v1490
      %v1532 = vpop.permute.xlu0 %1531
      %1533 = vset.pattern.permute.xlu0 1
      %1534 = vperm.xlu0 %1533, %v1491
      %v1535 = vpop.permute.xlu0 %1534
      %1536 = vset.pattern.permute.xlu0 1
      %1537 = vperm.xlu0 %1536, %v1492
      %v1538 = vpop.permute.xlu0 %1537
      %1539 = vset.pattern.permute.xlu0 1
      %1540 = vperm.xlu0 %1539, %v1493
      %v1541 = vpop.permute.xlu0 %1540
      %vm1542 = vcmp.eq.s32.totalorder %v174, %v1496
      %vm1543 = vcmp.eq.s32.totalorder %v174, %v1499
      %vm1544 = vcmp.eq.s32.totalorder %v174, %v1502
      %vm1545 = vcmp.eq.s32.totalorder %v174, %v1505
      %vm1546 = vcmp.eq.s32.totalorder %v174, %v1508
      %vm1547 = vcmp.eq.s32.totalorder %v174, %v1511
      %vm1548 = vcmp.eq.s32.totalorder %v174, %v1514
      %vm1549 = vcmp.eq.s32.totalorder %v174, %v1517
      %vm1550 = vcmp.eq.s32.totalorder %v174, %v1520
      %vm1551 = vcmp.eq.s32.totalorder %v174, %v1523
      %vm1552 = vcmp.eq.s32.totalorder %v174, %v1526
      %vm1553 = vcmp.eq.s32.totalorder %v174, %v1529
      %vm1554 = vcmp.eq.s32.totalorder %v174, %v1532
      %vm1555 = vcmp.eq.s32.totalorder %v174, %v1535
      %vm1556 = vcmp.eq.s32.totalorder %v174, %v1538
      %vm1557 = vcmp.eq.s32.totalorder %v174, %v1541
      %v1558 = vsel %vm1542, 1, 0
      %v1559 = vsel %vm1543, 1, 0
      %v1560 = vsel %vm1544, 1, 0
      %v1561 = vsel %vm1545, 1, 0
      %v1562 = vsel %vm1546, 1, 0
      %v1563 = vsel %vm1547, 1, 0
      %v1564 = vsel %vm1548, 1, 0
      %v1565 = vsel %vm1549, 1, 0
      %v1566 = vsel %vm1550, 1, 0
      %v1567 = vsel %vm1551, 1, 0
      %v1568 = vsel %vm1552, 1, 0
      %v1569 = vsel %vm1553, 1, 0
      %v1570 = vsel %vm1554, 1, 0
      %v1571 = vsel %vm1555, 1, 0
      %v1572 = vsel %vm1556, 1, 0
      %v1573 = vsel %vm1557, 1, 0
      %v1574 = vcvt.s32.f32 %v1558
      %v1575 = vcvt.s32.f32 %v1559
      %v1576 = vcvt.s32.f32 %v1560
      %v1577 = vcvt.s32.f32 %v1561
      %v1578 = vcvt.s32.f32 %v1562
      %v1579 = vcvt.s32.f32 %v1563
      %v1580 = vcvt.s32.f32 %v1564
      %v1581 = vcvt.s32.f32 %v1565
      %v1582 = vcvt.s32.f32 %v1566
      %v1583 = vcvt.s32.f32 %v1567
      %v1584 = vcvt.s32.f32 %v1568
      %v1585 = vcvt.s32.f32 %v1569
      %v1586 = vcvt.s32.f32 %v1570
      %v1587 = vcvt.s32.f32 %v1571
      %v1588 = vcvt.s32.f32 %v1572
      %v1589 = vcvt.s32.f32 %v1573
      %v1591 = vsel %vm289, %v1574, 0
      %v1594 = vsel %vm289, %v1575, 0
      %v1597 = vsel %vm289, %v1576, 0
      %v1600 = vsel %vm289, %v1577, 0
      %v1603 = vsel %vm289, %v1578, 0
      %v1606 = vsel %vm289, %v1579, 0
      %v1609 = vsel %vm289, %v1580, 0
      %v1612 = vsel %vm289, %v1581, 0
      %v1615 = vsel %vm289, %v1582, 0
      %v1618 = vsel %vm289, %v1583, 0
      %v1621 = vsel %vm289, %v1584, 0
      %v1624 = vsel %vm289, %v1585, 0
      %v1627 = vsel %vm289, %v1586, 0
      %v1630 = vsel %vm289, %v1587, 0
      %v1633 = vsel %vm289, %v1588, 0
      %v1636 = vsel %vm289, %v1589, 0
      %1638 = vmatprep.subr.mxu0 0.0
      %1639 = vmatpush1.msra.mxu0 0.0
      %1640 = vmatprep.subr.mxu0 0.0
      %1641 = vmatpush1.msra.mxu0 0.0
      %1642 = vmatprep.subr.mxu0 0.0
      %1643 = vmatpush1.msra.mxu0 0.0
      %1644 = vmatprep.subr.mxu0 0.0
      %1645 = vmatpush1.msra.mxu0 0.0
      %1646 = vmatprep.subr.mxu0 0.0
      %1647 = vmatpush1.msra.mxu0 0.0
      %1648 = vmatprep.subr.mxu0 0.0
      %1649 = vmatpush1.msra.mxu0 0.0
      %1650 = vmatprep.subr.mxu0 0.0
      %1651 = vmatpush1.msra.mxu0 0.0
      %1652 = vmatprep.subr.mxu0 0.0
      %1653 = vmatpush1.msra.mxu0 0.0
      %1654 = vmatprep.subr.mxu0 0.0
      %1655 = vmatpush1.msra.mxu0 0.0
      %1656 = vmatprep.subr.mxu0 0.0
      %1657 = vmatpush1.msra.mxu0 0.0
      %1658 = vmatprep.subr.mxu0 0.0
      %1659 = vmatpush1.msra.mxu0 0.0
      %1660 = vmatprep.subr.mxu0 0.0
      %1661 = vmatpush1.msra.mxu0 0.0
      %1662 = vmatprep.subr.mxu0 0.0
      %1663 = vmatpush1.msra.mxu0 0.0
      %1664 = vmatprep.subr.mxu0 0.0
      %v1665 = vand.u32 %v340, 4294901760
      %1666 = vmatpush1.msra.mxu0 %v1665
      %1667 = vmatprep.subr.mxu0 0.0
      %v1668 = vand.u32 %v171, 4294901760
      %1669 = vmatpush1.msra.mxu0 %v1668
      %1670 = vmatprep.subr.mxu0 0.0
      %v1671 = vand.u32 %v170, 4294901760
      %1672 = vmatpush1.msra.mxu0 %v1671
      %1673 = vmatprep.subr.mxu0 0.0
      %1674 = vmatpush2.msra.mxu0 0.0
      %1675 = vmatprep.subr.mxu0 0.0
      %1676 = vmatpush2.msra.mxu0 0.0
      %1677 = vmatprep.subr.mxu0 0.0
      %1678 = vmatpush2.msra.mxu0 0.0
      %1679 = vmatprep.subr.mxu0 0.0
      %1680 = vmatpush2.msra.mxu0 0.0
      %1681 = vmatprep.subr.mxu0 0.0
      %1682 = vmatpush2.msra.mxu0 0.0
      %1683 = vmatprep.subr.mxu0 0.0
      %1684 = vmatpush2.msra.mxu0 0.0
      %1685 = vmatprep.subr.mxu0 0.0
      %1686 = vmatpush2.msra.mxu0 0.0
      %1687 = vmatprep.subr.mxu0 0.0
      %1688 = vmatpush2.msra.mxu0 0.0
      %1689 = vmatprep.subr.mxu0 0.0
      %1690 = vmatpush2.msra.mxu0 0.0
      %1691 = vmatprep.subr.mxu0 0.0
      %1692 = vmatpush2.msra.mxu0 0.0
      %1693 = vmatprep.subr.mxu0 0.0
      %1694 = vmatpush2.msra.mxu0 0.0
      %1695 = vmatprep.subr.mxu0 0.0
      %1696 = vmatpush2.msra.mxu0 0.0
      %1697 = vmatprep.subr.mxu0 0.0
      %1698 = vmatpush2.msra.mxu0 0.0
      %1699 = vmatprep.subr.mxu0 0.0
      %1700 = vmatpush2.msra.mxu0 0.0
      %1701 = vmatprep.subr.mxu0 0.0
      %1702 = vmatpush2.msra.mxu0 0.0
      %1703 = vmatprep.subr.mxu0 0.0
      %1704 = vmatpush2.msra.mxu0 0.0
      %1705 = vmatprep.mubr.f32.mxu0 0.0
      %v1706 = vand.u32 %v1591, 4294901760
      %v1707 = vsub.f32 %v1591, %v1706
      %v1708 = vand.u32 %v1707, 4294901760
      %v1709 = vsub.f32 %v1707, %v1708
      %v1710 = vand.u32 %v1709, 4294901760
      %1711 = vmatmul.mubr.f32.gmra.mxu0 %v1710
      %v1712 = vpop.f32.mrf.mxu0
      %v1713 = vadd.f32 0.0, %v1712
      %v1714 = vpop.f32.mrf.mxu0
      %1715 = vmatprep.mubr.f32.mxu0 0.0
      %v1716 = vand.u32 %v1594, 4294901760
      %v1717 = vsub.f32 %v1594, %v1716
      %v1718 = vand.u32 %v1717, 4294901760
      %v1719 = vsub.f32 %v1717, %v1718
      %v1720 = vand.u32 %v1719, 4294901760
      %1721 = vmatmul.mubr.f32.gmra.mxu0 %v1720
      %v1722 = vpop.f32.mrf.mxu0
      %v1723 = vadd.f32 0.0, %v1722
      %v1724 = vpop.f32.mrf.mxu0
      %1725 = vmatprep.mubr.f32.mxu0 0.0
      %v1726 = vand.u32 %v1597, 4294901760
      %v1727 = vsub.f32 %v1597, %v1726
      %v1728 = vand.u32 %v1727, 4294901760
      %v1729 = vsub.f32 %v1727, %v1728
      %v1730 = vand.u32 %v1729, 4294901760
      %1731 = vmatmul.mubr.f32.gmra.mxu0 %v1730
      %v1732 = vpop.f32.mrf.mxu0
      %v1733 = vadd.f32 0.0, %v1732
      %v1734 = vpop.f32.mrf.mxu0
      %1735 = vmatprep.mubr.f32.mxu0 0.0
      %v1736 = vand.u32 %v1600, 4294901760
      %v1737 = vsub.f32 %v1600, %v1736
      %v1738 = vand.u32 %v1737, 4294901760
      %v1739 = vsub.f32 %v1737, %v1738
      %v1740 = vand.u32 %v1739, 4294901760
      %1741 = vmatmul.mubr.f32.gmra.mxu0 %v1740
      %v1742 = vpop.f32.mrf.mxu0
      %v1743 = vadd.f32 0.0, %v1742
      %v1744 = vpop.f32.mrf.mxu0
      %1745 = vmatprep.mubr.f32.mxu0 0.0
      %v1746 = vand.u32 %v1603, 4294901760
      %v1747 = vsub.f32 %v1603, %v1746
      %v1748 = vand.u32 %v1747, 4294901760
      %v1749 = vsub.f32 %v1747, %v1748
      %v1750 = vand.u32 %v1749, 4294901760
      %1751 = vmatmul.mubr.f32.gmra.mxu0 %v1750
      %v1752 = vpop.f32.mrf.mxu0
      %v1753 = vadd.f32 0.0, %v1752
      %v1754 = vpop.f32.mrf.mxu0
      %1755 = vmatprep.mubr.f32.mxu0 0.0
      %v1756 = vand.u32 %v1606, 4294901760
      %v1757 = vsub.f32 %v1606, %v1756
      %v1758 = vand.u32 %v1757, 4294901760
      %v1759 = vsub.f32 %v1757, %v1758
      %v1760 = vand.u32 %v1759, 4294901760
      %1761 = vmatmul.mubr.f32.gmra.mxu0 %v1760
      %v1762 = vpop.f32.mrf.mxu0
      %v1763 = vadd.f32 0.0, %v1762
      %v1764 = vpop.f32.mrf.mxu0
      %1765 = vmatprep.mubr.f32.mxu0 0.0
      %v1766 = vand.u32 %v1609, 4294901760
      %v1767 = vsub.f32 %v1609, %v1766
      %v1768 = vand.u32 %v1767, 4294901760
      %v1769 = vsub.f32 %v1767, %v1768
      %v1770 = vand.u32 %v1769, 4294901760
      %1771 = vmatmul.mubr.f32.gmra.mxu0 %v1770
      %v1772 = vpop.f32.mrf.mxu0
      %v1773 = vadd.f32 0.0, %v1772
      %v1774 = vpop.f32.mrf.mxu0
      %1775 = vmatprep.mubr.f32.mxu0 0.0
      %v1776 = vand.u32 %v1612, 4294901760
      %v1777 = vsub.f32 %v1612, %v1776
      %v1778 = vand.u32 %v1777, 4294901760
      %v1779 = vsub.f32 %v1777, %v1778
      %v1780 = vand.u32 %v1779, 4294901760
      %1781 = vmatmul.mubr.f32.gmra.mxu0 %v1780
      %v1782 = vpop.f32.mrf.mxu0
      %v1783 = vadd.f32 0.0, %v1782
      %v1784 = vpop.f32.mrf.mxu0
      %1785 = vmatprep.mubr.f32.mxu0 0.0
      %v1786 = vand.u32 %v1615, 4294901760
      %v1787 = vsub.f32 %v1615, %v1786
      %v1788 = vand.u32 %v1787, 4294901760
      %v1789 = vsub.f32 %v1787, %v1788
      %v1790 = vand.u32 %v1789, 4294901760
      %1791 = vmatmul.mubr.f32.gmra.mxu0 %v1790
      %v1792 = vpop.f32.mrf.mxu0
      %v1793 = vadd.f32 0.0, %v1792
      %v1794 = vpop.f32.mrf.mxu0
      %1795 = vmatprep.mubr.f32.mxu0 0.0
      %v1796 = vand.u32 %v1618, 4294901760
      %v1797 = vsub.f32 %v1618, %v1796
      %v1798 = vand.u32 %v1797, 4294901760
      %v1799 = vsub.f32 %v1797, %v1798
      %v1800 = vand.u32 %v1799, 4294901760
      %1801 = vmatmul.mubr.f32.gmra.mxu0 %v1800
      %v1802 = vpop.f32.mrf.mxu0
      %v1803 = vadd.f32 0.0, %v1802
      %v1804 = vpop.f32.mrf.mxu0
      %1805 = vmatprep.mubr.f32.mxu0 0.0
      %v1806 = vand.u32 %v1621, 4294901760
      %v1807 = vsub.f32 %v1621, %v1806
      %v1808 = vand.u32 %v1807, 4294901760
      %v1809 = vsub.f32 %v1807, %v1808
      %v1810 = vand.u32 %v1809, 4294901760
      %1811 = vmatmul.mubr.f32.gmra.mxu0 %v1810
      %v1812 = vpop.f32.mrf.mxu0
      %v1813 = vadd.f32 0.0, %v1812
      %v1814 = vpop.f32.mrf.mxu0
      %1815 = vmatprep.mubr.f32.mxu0 0.0
      %v1816 = vand.u32 %v1624, 4294901760
      %v1817 = vsub.f32 %v1624, %v1816
      %v1818 = vand.u32 %v1817, 4294901760
      %v1819 = vsub.f32 %v1817, %v1818
      %v1820 = vand.u32 %v1819, 4294901760
      %1821 = vmatmul.mubr.f32.gmra.mxu0 %v1820
      %v1822 = vpop.f32.mrf.mxu0
      %v1823 = vadd.f32 0.0, %v1822
      %v1824 = vpop.f32.mrf.mxu0
      %1825 = vmatprep.mubr.f32.mxu0 0.0
      %v1826 = vand.u32 %v1627, 4294901760
      %v1827 = vsub.f32 %v1627, %v1826
      %v1828 = vand.u32 %v1827, 4294901760
      %v1829 = vsub.f32 %v1827, %v1828
      %v1830 = vand.u32 %v1829, 4294901760
      %1831 = vmatmul.mubr.f32.gmra.mxu0 %v1830
      %v1832 = vpop.f32.mrf.mxu0
      %v1833 = vadd.f32 0.0, %v1832
      %v1834 = vpop.f32.mrf.mxu0
      %1835 = vmatprep.mubr.f32.mxu0 0.0
      %v1836 = vand.u32 %v1630, 4294901760
      %v1837 = vsub.f32 %v1630, %v1836
      %v1838 = vand.u32 %v1837, 4294901760
      %v1839 = vsub.f32 %v1837, %v1838
      %v1840 = vand.u32 %v1839, 4294901760
      %1841 = vmatmul.mubr.f32.gmra.mxu0 %v1840
      %v1842 = vpop.f32.mrf.mxu0
      %v1843 = vadd.f32 0.0, %v1842
      %v1844 = vpop.f32.mrf.mxu0
      %1845 = vmatprep.mubr.f32.mxu0 0.0
      %v1846 = vand.u32 %v1633, 4294901760
      %v1847 = vsub.f32 %v1633, %v1846
      %v1848 = vand.u32 %v1847, 4294901760
      %v1849 = vsub.f32 %v1847, %v1848
      %v1850 = vand.u32 %v1849, 4294901760
      %1851 = vmatmul.mubr.f32.gmra.mxu0 %v1850
      %v1852 = vpop.f32.mrf.mxu0
      %v1853 = vadd.f32 0.0, %v1852
      %v1854 = vpop.f32.mrf.mxu0
      %1855 = vmatprep.mubr.f32.mxu0 0.0
      %v1856 = vand.u32 %v1636, 4294901760
      %v1857 = vsub.f32 %v1636, %v1856
      %v1858 = vand.u32 %v1857, 4294901760
      %v1859 = vsub.f32 %v1857, %v1858
      %v1860 = vand.u32 %v1859, 4294901760
      %1861 = vmatmul.mubr.f32.gmra.mxu0 %v1860
      %v1862 = vpop.f32.mrf.mxu0
      %v1863 = vadd.f32 0.0, %v1862
      %v1864 = vpop.f32.mrf.mxu0
      %1865 = vdwg.mxu0
      %1866 = vmatprep.subr.mxu0 0.0
      %1867 = vmatpush1.msra.mxu0 0.0
      %1868 = vmatprep.subr.mxu0 0.0
      %1869 = vmatpush1.msra.mxu0 0.0
      %1870 = vmatprep.subr.mxu0 0.0
      %1871 = vmatpush1.msra.mxu0 0.0
      %1872 = vmatprep.subr.mxu0 0.0
      %1873 = vmatpush1.msra.mxu0 0.0
      %1874 = vmatprep.subr.mxu0 0.0
      %1875 = vmatpush1.msra.mxu0 0.0
      %1876 = vmatprep.subr.mxu0 0.0
      %1877 = vmatpush1.msra.mxu0 0.0
      %1878 = vmatprep.subr.mxu0 0.0
      %1879 = vmatpush1.msra.mxu0 0.0
      %1880 = vmatprep.subr.mxu0 0.0
      %1881 = vmatpush1.msra.mxu0 0.0
      %1882 = vmatprep.subr.mxu0 0.0
      %1883 = vmatpush1.msra.mxu0 0.0
      %1884 = vmatprep.subr.mxu0 0.0
      %1885 = vmatpush1.msra.mxu0 0.0
      %1886 = vmatprep.subr.mxu0 0.0
      %1887 = vmatpush1.msra.mxu0 0.0
      %1888 = vmatprep.subr.mxu0 0.0
      %1889 = vmatpush1.msra.mxu0 0.0
      %1890 = vmatprep.subr.mxu0 0.0
      %1891 = vmatpush1.msra.mxu0 0.0
      %1892 = vmatprep.subr.mxu0 0.0
      %v1893 = vand.u32 %v340, 4294901760
      %v1894 = vsub.f32 %v340, %v1893
      %v1895 = vand.u32 %v1894, 4294901760
      %v1896 = vsub.f32 %v1894, %v1895
      %v1897 = vand.u32 %v1896, 4294901760
      %1898 = vmatpush1.msra.mxu0 %v1897
      %1899 = vmatprep.subr.mxu0 0.0
      %v1900 = vand.u32 %v171, 4294901760
      %v1901 = vsub.f32 %v171, %v1900
      %v1902 = vand.u32 %v1901, 4294901760
      %v1903 = vsub.f32 %v1901, %v1902
      %v1904 = vand.u32 %v1903, 4294901760
      %1905 = vmatpush1.msra.mxu0 %v1904
      %1906 = vmatprep.subr.mxu0 0.0
      %v1907 = vand.u32 %v170, 4294901760
      %v1908 = vsub.f32 %v170, %v1907
      %v1909 = vand.u32 %v1908, 4294901760
      %v1910 = vsub.f32 %v1908, %v1909
      %v1911 = vand.u32 %v1910, 4294901760
      %1912 = vmatpush1.msra.mxu0 %v1911
      %1913 = vmatprep.subr.mxu0 0.0
      %1914 = vmatpush2.msra.mxu0 0.0
      %1915 = vmatprep.subr.mxu0 0.0
      %1916 = vmatpush2.msra.mxu0 0.0
      %1917 = vmatprep.subr.mxu0 0.0
      %1918 = vmatpush2.msra.mxu0 0.0
      %1919 = vmatprep.subr.mxu0 0.0
      %1920 = vmatpush2.msra.mxu0 0.0
      %1921 = vmatprep.subr.mxu0 0.0
      %1922 = vmatpush2.msra.mxu0 0.0
      %1923 = vmatprep.subr.mxu0 0.0
      %1924 = vmatpush2.msra.mxu0 0.0
      %1925 = vmatprep.subr.mxu0 0.0
      %1926 = vmatpush2.msra.mxu0 0.0
      %1927 = vmatprep.subr.mxu0 0.0
      %1928 = vmatpush2.msra.mxu0 0.0
      %1929 = vmatprep.subr.mxu0 0.0
      %1930 = vmatpush2.msra.mxu0 0.0
      %1931 = vmatprep.subr.mxu0 0.0
      %1932 = vmatpush2.msra.mxu0 0.0
      %1933 = vmatprep.subr.mxu0 0.0
      %1934 = vmatpush2.msra.mxu0 0.0
      %1935 = vmatprep.subr.mxu0 0.0
      %1936 = vmatpush2.msra.mxu0 0.0
      %1937 = vmatprep.subr.mxu0 0.0
      %1938 = vmatpush2.msra.mxu0 0.0
      %1939 = vmatprep.subr.mxu0 0.0
      %1940 = vmatpush2.msra.mxu0 0.0
      %1941 = vmatprep.subr.mxu0 0.0
      %1942 = vmatpush2.msra.mxu0 0.0
      %1943 = vmatprep.subr.mxu0 0.0
      %1944 = vmatpush2.msra.mxu0 0.0
      %1945 = vmatprep.mubr.f32.mxu0 0.0
      %v1946 = vand.u32 %v1591, 4294901760
      %1947 = vmatmul.mubr.f32.gmra.mxu0 %v1946
      %v1948 = vpop.f32.mrf.mxu0
      %v1949 = vadd.f32 %v1713, %v1948
      %v1950 = vpop.f32.mrf.mxu0
      %1951 = vmatprep.mubr.f32.mxu0 0.0
      %v1952 = vand.u32 %v1594, 4294901760
      %1953 = vmatmul.mubr.f32.gmra.mxu0 %v1952
      %v1954 = vpop.f32.mrf.mxu0
      %v1955 = vadd.f32 %v1723, %v1954
      %v1956 = vpop.f32.mrf.mxu0
      %1957 = vmatprep.mubr.f32.mxu0 0.0
      %v1958 = vand.u32 %v1597, 4294901760
      %1959 = vmatmul.mubr.f32.gmra.mxu0 %v1958
      %v1960 = vpop.f32.mrf.mxu0
      %v1961 = vadd.f32 %v1733, %v1960
      %v1962 = vpop.f32.mrf.mxu0
      %1963 = vmatprep.mubr.f32.mxu0 0.0
      %v1964 = vand.u32 %v1600, 4294901760
      %1965 = vmatmul.mubr.f32.gmra.mxu0 %v1964
      %v1966 = vpop.f32.mrf.mxu0
      %v1967 = vadd.f32 %v1743, %v1966
      %v1968 = vpop.f32.mrf.mxu0
      %1969 = vmatprep.mubr.f32.mxu0 0.0
      %v1970 = vand.u32 %v1603, 4294901760
      %1971 = vmatmul.mubr.f32.gmra.mxu0 %v1970
      %v1972 = vpop.f32.mrf.mxu0
      %v1973 = vadd.f32 %v1753, %v1972
      %v1974 = vpop.f32.mrf.mxu0
      %1975 = vmatprep.mubr.f32.mxu0 0.0
      %v1976 = vand.u32 %v1606, 4294901760
      %1977 = vmatmul.mubr.f32.gmra.mxu0 %v1976
      %v1978 = vpop.f32.mrf.mxu0
      %v1979 = vadd.f32 %v1763, %v1978
      %v1980 = vpop.f32.mrf.mxu0
      %1981 = vmatprep.mubr.f32.mxu0 0.0
      %v1982 = vand.u32 %v1609, 4294901760
      %1983 = vmatmul.mubr.f32.gmra.mxu0 %v1982
      %v1984 = vpop.f32.mrf.mxu0
      %v1985 = vadd.f32 %v1773, %v1984
      %v1986 = vpop.f32.mrf.mxu0
      %1987 = vmatprep.mubr.f32.mxu0 0.0
      %v1988 = vand.u32 %v1612, 4294901760
      %1989 = vmatmul.mubr.f32.gmra.mxu0 %v1988
      %v1990 = vpop.f32.mrf.mxu0
      %v1991 = vadd.f32 %v1783, %v1990
      %v1992 = vpop.f32.mrf.mxu0
      %1993 = vmatprep.mubr.f32.mxu0 0.0
      %v1994 = vand.u32 %v1615, 4294901760
      %1995 = vmatmul.mubr.f32.gmra.mxu0 %v1994
      %v1996 = vpop.f32.mrf.mxu0
      %v1997 = vadd.f32 %v1793, %v1996
      %v1998 = vpop.f32.mrf.mxu0
      %1999 = vmatprep.mubr.f32.mxu0 0.0
      %v2000 = vand.u32 %v1618, 4294901760
      %2001 = vmatmul.mubr.f32.gmra.mxu0 %v2000
      %v2002 = vpop.f32.mrf.mxu0
      %v2003 = vadd.f32 %v1803, %v2002
      %v2004 = vpop.f32.mrf.mxu0
      %2005 = vmatprep.mubr.f32.mxu0 0.0
      %v2006 = vand.u32 %v1621, 4294901760
      %2007 = vmatmul.mubr.f32.gmra.mxu0 %v2006
      %v2008 = vpop.f32.mrf.mxu0
      %v2009 = vadd.f32 %v1813, %v2008
      %v2010 = vpop.f32.mrf.mxu0
      %2011 = vmatprep.mubr.f32.mxu0 0.0
      %v2012 = vand.u32 %v1624, 4294901760
      %2013 = vmatmul.mubr.f32.gmra.mxu0 %v2012
      %v2014 = vpop.f32.mrf.mxu0
      %v2015 = vadd.f32 %v1823, %v2014
      %v2016 = vpop.f32.mrf.mxu0
      %2017 = vmatprep.mubr.f32.mxu0 0.0
      %v2018 = vand.u32 %v1627, 4294901760
      %2019 = vmatmul.mubr.f32.gmra.mxu0 %v2018
      %v2020 = vpop.f32.mrf.mxu0
      %v2021 = vadd.f32 %v1833, %v2020
      %v2022 = vpop.f32.mrf.mxu0
      %2023 = vmatprep.mubr.f32.mxu0 0.0
      %v2024 = vand.u32 %v1630, 4294901760
      %2025 = vmatmul.mubr.f32.gmra.mxu0 %v2024
      %v2026 = vpop.f32.mrf.mxu0
      %v2027 = vadd.f32 %v1843, %v2026
      %v2028 = vpop.f32.mrf.mxu0
      %2029 = vmatprep.mubr.f32.mxu0 0.0
      %v2030 = vand.u32 %v1633, 4294901760
      %2031 = vmatmul.mubr.f32.gmra.mxu0 %v2030
      %v2032 = vpop.f32.mrf.mxu0
      %v2033 = vadd.f32 %v1853, %v2032
      %v2034 = vpop.f32.mrf.mxu0
      %2035 = vmatprep.mubr.f32.mxu0 0.0
      %v2036 = vand.u32 %v1636, 4294901760
      %2037 = vmatmul.mubr.f32.gmra.mxu0 %v2036
      %v2038 = vpop.f32.mrf.mxu0
      %v2039 = vadd.f32 %v1863, %v2038
      %v2040 = vpop.f32.mrf.mxu0
      %2041 = vdwg.mxu0
      %2042 = vmatprep.subr.mxu0 0.0
      %2043 = vmatpush1.msra.mxu0 0.0
      %2044 = vmatprep.subr.mxu0 0.0
      %2045 = vmatpush1.msra.mxu0 0.0
      %2046 = vmatprep.subr.mxu0 0.0
      %2047 = vmatpush1.msra.mxu0 0.0
      %2048 = vmatprep.subr.mxu0 0.0
      %2049 = vmatpush1.msra.mxu0 0.0
      %2050 = vmatprep.subr.mxu0 0.0
      %2051 = vmatpush1.msra.mxu0 0.0
      %2052 = vmatprep.subr.mxu0 0.0
      %2053 = vmatpush1.msra.mxu0 0.0
      %2054 = vmatprep.subr.mxu0 0.0
      %2055 = vmatpush1.msra.mxu0 0.0
      %2056 = vmatprep.subr.mxu0 0.0
      %2057 = vmatpush1.msra.mxu0 0.0
      %2058 = vmatprep.subr.mxu0 0.0
      %2059 = vmatpush1.msra.mxu0 0.0
      %2060 = vmatprep.subr.mxu0 0.0
      %2061 = vmatpush1.msra.mxu0 0.0
      %2062 = vmatprep.subr.mxu0 0.0
      %2063 = vmatpush1.msra.mxu0 0.0
      %2064 = vmatprep.subr.mxu0 0.0
      %2065 = vmatpush1.msra.mxu0 0.0
      %2066 = vmatprep.subr.mxu0 0.0
      %2067 = vmatpush1.msra.mxu0 0.0
      %2068 = vmatprep.subr.mxu0 0.0
      %v2069 = vand.u32 %v340, 4294901760
      %v2070 = vsub.f32 %v340, %v2069
      %2071 = vmatpush1.msra.mxu0 %v2070
      %2072 = vmatprep.subr.mxu0 0.0
      %v2073 = vand.u32 %v171, 4294901760
      %v2074 = vsub.f32 %v171, %v2073
      %2075 = vmatpush1.msra.mxu0 %v2074
      %2076 = vmatprep.subr.mxu0 0.0
      %v2077 = vand.u32 %v170, 4294901760
      %v2078 = vsub.f32 %v170, %v2077
      %2079 = vmatpush1.msra.mxu0 %v2078
      %2080 = vmatprep.subr.mxu0 0.0
      %2081 = vmatpush2.msra.mxu0 0.0
      %2082 = vmatprep.subr.mxu0 0.0
      %2083 = vmatpush2.msra.mxu0 0.0
      %2084 = vmatprep.subr.mxu0 0.0
      %2085 = vmatpush2.msra.mxu0 0.0
      %2086 = vmatprep.subr.mxu0 0.0
      %2087 = vmatpush2.msra.mxu0 0.0
      %2088 = vmatprep.subr.mxu0 0.0
      %2089 = vmatpush2.msra.mxu0 0.0
      %2090 = vmatprep.subr.mxu0 0.0
      %2091 = vmatpush2.msra.mxu0 0.0
      %2092 = vmatprep.subr.mxu0 0.0
      %2093 = vmatpush2.msra.mxu0 0.0
      %2094 = vmatprep.subr.mxu0 0.0
      %2095 = vmatpush2.msra.mxu0 0.0
      %2096 = vmatprep.subr.mxu0 0.0
      %2097 = vmatpush2.msra.mxu0 0.0
      %2098 = vmatprep.subr.mxu0 0.0
      %2099 = vmatpush2.msra.mxu0 0.0
      %2100 = vmatprep.subr.mxu0 0.0
      %2101 = vmatpush2.msra.mxu0 0.0
      %2102 = vmatprep.subr.mxu0 0.0
      %2103 = vmatpush2.msra.mxu0 0.0
      %2104 = vmatprep.subr.mxu0 0.0
      %2105 = vmatpush2.msra.mxu0 0.0
      %2106 = vmatprep.subr.mxu0 0.0
      %2107 = vmatpush2.msra.mxu0 0.0
      %2108 = vmatprep.subr.mxu0 0.0
      %2109 = vmatpush2.msra.mxu0 0.0
      %2110 = vmatprep.subr.mxu0 0.0
      %2111 = vmatpush2.msra.mxu0 0.0
      %2112 = vmatprep.mubr.f32.mxu0 0.0
      %v2113 = vand.u32 %v1591, 4294901760
      %v2114 = vsub.f32 %v1591, %v2113
      %2115 = vmatmul.mubr.f32.gmra.mxu0 %v2114
      %v2116 = vpop.f32.mrf.mxu0
      %v2117 = vadd.f32 %v1949, %v2116
      %v2118 = vpop.f32.mrf.mxu0
      %2119 = vmatprep.mubr.f32.mxu0 0.0
      %v2120 = vand.u32 %v1594, 4294901760
      %v2121 = vsub.f32 %v1594, %v2120
      %2122 = vmatmul.mubr.f32.gmra.mxu0 %v2121
      %v2123 = vpop.f32.mrf.mxu0
      %v2124 = vadd.f32 %v1955, %v2123
      %v2125 = vpop.f32.mrf.mxu0
      %2126 = vmatprep.mubr.f32.mxu0 0.0
      %v2127 = vand.u32 %v1597, 4294901760
      %v2128 = vsub.f32 %v1597, %v2127
      %2129 = vmatmul.mubr.f32.gmra.mxu0 %v2128
      %v2130 = vpop.f32.mrf.mxu0
      %v2131 = vadd.f32 %v1961, %v2130
      %v2132 = vpop.f32.mrf.mxu0
      %2133 = vmatprep.mubr.f32.mxu0 0.0
      %v2134 = vand.u32 %v1600, 4294901760
      %v2135 = vsub.f32 %v1600, %v2134
      %2136 = vmatmul.mubr.f32.gmra.mxu0 %v2135
      %v2137 = vpop.f32.mrf.mxu0
      %v2138 = vadd.f32 %v1967, %v2137
      %v2139 = vpop.f32.mrf.mxu0
      %2140 = vmatprep.mubr.f32.mxu0 0.0
      %v2141 = vand.u32 %v1603, 4294901760
      %v2142 = vsub.f32 %v1603, %v2141
      %2143 = vmatmul.mubr.f32.gmra.mxu0 %v2142
      %v2144 = vpop.f32.mrf.mxu0
      %v2145 = vadd.f32 %v1973, %v2144
      %v2146 = vpop.f32.mrf.mxu0
      %2147 = vmatprep.mubr.f32.mxu0 0.0
      %v2148 = vand.u32 %v1606, 4294901760
      %v2149 = vsub.f32 %v1606, %v2148
      %2150 = vmatmul.mubr.f32.gmra.mxu0 %v2149
      %v2151 = vpop.f32.mrf.mxu0
      %v2152 = vadd.f32 %v1979, %v2151
      %v2153 = vpop.f32.mrf.mxu0
      %2154 = vmatprep.mubr.f32.mxu0 0.0
      %v2155 = vand.u32 %v1609, 4294901760
      %v2156 = vsub.f32 %v1609, %v2155
      %2157 = vmatmul.mubr.f32.gmra.mxu0 %v2156
      %v2158 = vpop.f32.mrf.mxu0
      %v2159 = vadd.f32 %v1985, %v2158
      %v2160 = vpop.f32.mrf.mxu0
      %2161 = vmatprep.mubr.f32.mxu0 0.0
      %v2162 = vand.u32 %v1612, 4294901760
      %v2163 = vsub.f32 %v1612, %v2162
      %2164 = vmatmul.mubr.f32.gmra.mxu0 %v2163
      %v2165 = vpop.f32.mrf.mxu0
      %v2166 = vadd.f32 %v1991, %v2165
      %v2167 = vpop.f32.mrf.mxu0
      %2168 = vmatprep.mubr.f32.mxu0 0.0
      %v2169 = vand.u32 %v1615, 4294901760
      %v2170 = vsub.f32 %v1615, %v2169
      %2171 = vmatmul.mubr.f32.gmra.mxu0 %v2170
      %v2172 = vpop.f32.mrf.mxu0
      %v2173 = vadd.f32 %v1997, %v2172
      %v2174 = vpop.f32.mrf.mxu0
      %2175 = vmatprep.mubr.f32.mxu0 0.0
      %v2176 = vand.u32 %v1618, 4294901760
      %v2177 = vsub.f32 %v1618, %v2176
      %2178 = vmatmul.mubr.f32.gmra.mxu0 %v2177
      %v2179 = vpop.f32.mrf.mxu0
      %v2180 = vadd.f32 %v2003, %v2179
      %v2181 = vpop.f32.mrf.mxu0
      %2182 = vmatprep.mubr.f32.mxu0 0.0
      %v2183 = vand.u32 %v1621, 4294901760
      %v2184 = vsub.f32 %v1621, %v2183
      %2185 = vmatmul.mubr.f32.gmra.mxu0 %v2184
      %v2186 = vpop.f32.mrf.mxu0
      %v2187 = vadd.f32 %v2009, %v2186
      %v2188 = vpop.f32.mrf.mxu0
      %2189 = vmatprep.mubr.f32.mxu0 0.0
      %v2190 = vand.u32 %v1624, 4294901760
      %v2191 = vsub.f32 %v1624, %v2190
      %2192 = vmatmul.mubr.f32.gmra.mxu0 %v2191
      %v2193 = vpop.f32.mrf.mxu0
      %v2194 = vadd.f32 %v2015, %v2193
      %v2195 = vpop.f32.mrf.mxu0
      %2196 = vmatprep.mubr.f32.mxu0 0.0
      %v2197 = vand.u32 %v1627, 4294901760
      %v2198 = vsub.f32 %v1627, %v2197
      %2199 = vmatmul.mubr.f32.gmra.mxu0 %v2198
      %v2200 = vpop.f32.mrf.mxu0
      %v2201 = vadd.f32 %v2021, %v2200
      %v2202 = vpop.f32.mrf.mxu0
      %2203 = vmatprep.mubr.f32.mxu0 0.0
      %v2204 = vand.u32 %v1630, 4294901760
      %v2205 = vsub.f32 %v1630, %v2204
      %2206 = vmatmul.mubr.f32.gmra.mxu0 %v2205
      %v2207 = vpop.f32.mrf.mxu0
      %v2208 = vadd.f32 %v2027, %v2207
      %v2209 = vpop.f32.mrf.mxu0
      %2210 = vmatprep.mubr.f32.mxu0 0.0
      %v2211 = vand.u32 %v1633, 4294901760
      %v2212 = vsub.f32 %v1633, %v2211
      %2213 = vmatmul.mubr.f32.gmra.mxu0 %v2212
      %v2214 = vpop.f32.mrf.mxu0
      %v2215 = vadd.f32 %v2033, %v2214
      %v2216 = vpop.f32.mrf.mxu0
      %2217 = vmatprep.mubr.f32.mxu0 0.0
      %v2218 = vand.u32 %v1636, 4294901760
      %v2219 = vsub.f32 %v1636, %v2218
      %2220 = vmatmul.mubr.f32.gmra.mxu0 %v2219
      %v2221 = vpop.f32.mrf.mxu0
      %v2222 = vadd.f32 %v2039, %v2221
      %v2223 = vpop.f32.mrf.mxu0
      %2224 = vdwg.mxu0
      %2225 = vmatprep.subr.mxu0 0.0
      %2226 = vmatpush1.msra.mxu0 0.0
      %2227 = vmatprep.subr.mxu0 0.0
      %2228 = vmatpush1.msra.mxu0 0.0
      %2229 = vmatprep.subr.mxu0 0.0
      %2230 = vmatpush1.msra.mxu0 0.0
      %2231 = vmatprep.subr.mxu0 0.0
      %2232 = vmatpush1.msra.mxu0 0.0
      %2233 = vmatprep.subr.mxu0 0.0
      %2234 = vmatpush1.msra.mxu0 0.0
      %2235 = vmatprep.subr.mxu0 0.0
      %2236 = vmatpush1.msra.mxu0 0.0
      %2237 = vmatprep.subr.mxu0 0.0
      %2238 = vmatpush1.msra.mxu0 0.0
      %2239 = vmatprep.subr.mxu0 0.0
      %2240 = vmatpush1.msra.mxu0 0.0
      %2241 = vmatprep.subr.mxu0 0.0
      %2242 = vmatpush1.msra.mxu0 0.0
      %2243 = vmatprep.subr.mxu0 0.0
      %2244 = vmatpush1.msra.mxu0 0.0
      %2245 = vmatprep.subr.mxu0 0.0
      %2246 = vmatpush1.msra.mxu0 0.0
      %2247 = vmatprep.subr.mxu0 0.0
      %2248 = vmatpush1.msra.mxu0 0.0
      %2249 = vmatprep.subr.mxu0 0.0
      %2250 = vmatpush1.msra.mxu0 0.0
      %2251 = vmatprep.subr.mxu0 0.0
      %v2252 = vand.u32 %v340, 4294901760
      %2253 = vmatpush1.msra.mxu0 %v2252
      %2254 = vmatprep.subr.mxu0 0.0
      %v2255 = vand.u32 %v171, 4294901760
      %2256 = vmatpush1.msra.mxu0 %v2255
      %2257 = vmatprep.subr.mxu0 0.0
      %v2258 = vand.u32 %v170, 4294901760
      %2259 = vmatpush1.msra.mxu0 %v2258
      %2260 = vmatprep.subr.mxu0 0.0
      %2261 = vmatpush2.msra.mxu0 0.0
      %2262 = vmatprep.subr.mxu0 0.0
      %2263 = vmatpush2.msra.mxu0 0.0
      %2264 = vmatprep.subr.mxu0 0.0
      %2265 = vmatpush2.msra.mxu0 0.0
      %2266 = vmatprep.subr.mxu0 0.0
      %2267 = vmatpush2.msra.mxu0 0.0
      %2268 = vmatprep.subr.mxu0 0.0
      %2269 = vmatpush2.msra.mxu0 0.0
      %2270 = vmatprep.subr.mxu0 0.0
      %2271 = vmatpush2.msra.mxu0 0.0
      %2272 = vmatprep.subr.mxu0 0.0
      %2273 = vmatpush2.msra.mxu0 0.0
      %2274 = vmatprep.subr.mxu0 0.0
      %2275 = vmatpush2.msra.mxu0 0.0
      %2276 = vmatprep.subr.mxu0 0.0
      %2277 = vmatpush2.msra.mxu0 0.0
      %2278 = vmatprep.subr.mxu0 0.0
      %2279 = vmatpush2.msra.mxu0 0.0
      %2280 = vmatprep.subr.mxu0 0.0
      %2281 = vmatpush2.msra.mxu0 0.0
      %2282 = vmatprep.subr.mxu0 0.0
      %2283 = vmatpush2.msra.mxu0 0.0
      %2284 = vmatprep.subr.mxu0 0.0
      %2285 = vmatpush2.msra.mxu0 0.0
      %2286 = vmatprep.subr.mxu0 0.0
      %2287 = vmatpush2.msra.mxu0 0.0
      %2288 = vmatprep.subr.mxu0 0.0
      %2289 = vmatpush2.msra.mxu0 0.0
      %2290 = vmatprep.subr.mxu0 0.0
      %2291 = vmatpush2.msra.mxu0 0.0
      %2292 = vmatprep.mubr.f32.mxu0 0.0
      %v2293 = vand.u32 %v1591, 4294901760
      %v2294 = vsub.f32 %v1591, %v2293
      %v2295 = vand.u32 %v2294, 4294901760
      %2296 = vmatmul.mubr.f32.gmra.mxu0 %v2295
      %v2297 = vpop.f32.mrf.mxu0
      %v2298 = vadd.f32 %v2117, %v2297
      %v2299 = vpop.f32.mrf.mxu0
      %2300 = vmatprep.mubr.f32.mxu0 0.0
      %v2301 = vand.u32 %v1594, 4294901760
      %v2302 = vsub.f32 %v1594, %v2301
      %v2303 = vand.u32 %v2302, 4294901760
      %2304 = vmatmul.mubr.f32.gmra.mxu0 %v2303
      %v2305 = vpop.f32.mrf.mxu0
      %v2306 = vadd.f32 %v2124, %v2305
      %v2307 = vpop.f32.mrf.mxu0
      %2308 = vmatprep.mubr.f32.mxu0 0.0
      %v2309 = vand.u32 %v1597, 4294901760
      %v2310 = vsub.f32 %v1597, %v2309
      %v2311 = vand.u32 %v2310, 4294901760
      %2312 = vmatmul.mubr.f32.gmra.mxu0 %v2311
      %v2313 = vpop.f32.mrf.mxu0
      %v2314 = vadd.f32 %v2131, %v2313
      %v2315 = vpop.f32.mrf.mxu0
      %2316 = vmatprep.mubr.f32.mxu0 0.0
      %v2317 = vand.u32 %v1600, 4294901760
      %v2318 = vsub.f32 %v1600, %v2317
      %v2319 = vand.u32 %v2318, 4294901760
      %2320 = vmatmul.mubr.f32.gmra.mxu0 %v2319
      %v2321 = vpop.f32.mrf.mxu0
      %v2322 = vadd.f32 %v2138, %v2321
      %v2323 = vpop.f32.mrf.mxu0
      %2324 = vmatprep.mubr.f32.mxu0 0.0
      %v2325 = vand.u32 %v1603, 4294901760
      %v2326 = vsub.f32 %v1603, %v2325
      %v2327 = vand.u32 %v2326, 4294901760
      %2328 = vmatmul.mubr.f32.gmra.mxu0 %v2327
      %v2329 = vpop.f32.mrf.mxu0
      %v2330 = vadd.f32 %v2145, %v2329
      %v2331 = vpop.f32.mrf.mxu0
      %2332 = vmatprep.mubr.f32.mxu0 0.0
      %v2333 = vand.u32 %v1606, 4294901760
      %v2334 = vsub.f32 %v1606, %v2333
      %v2335 = vand.u32 %v2334, 4294901760
      %2336 = vmatmul.mubr.f32.gmra.mxu0 %v2335
      %v2337 = vpop.f32.mrf.mxu0
      %v2338 = vadd.f32 %v2152, %v2337
      %v2339 = vpop.f32.mrf.mxu0
      %2340 = vmatprep.mubr.f32.mxu0 0.0
      %v2341 = vand.u32 %v1609, 4294901760
      %v2342 = vsub.f32 %v1609, %v2341
      %v2343 = vand.u32 %v2342, 4294901760
      %2344 = vmatmul.mubr.f32.gmra.mxu0 %v2343
      %v2345 = vpop.f32.mrf.mxu0
      %v2346 = vadd.f32 %v2159, %v2345
      %v2347 = vpop.f32.mrf.mxu0
      %2348 = vmatprep.mubr.f32.mxu0 0.0
      %v2349 = vand.u32 %v1612, 4294901760
      %v2350 = vsub.f32 %v1612, %v2349
      %v2351 = vand.u32 %v2350, 4294901760
      %2352 = vmatmul.mubr.f32.gmra.mxu0 %v2351
      %v2353 = vpop.f32.mrf.mxu0
      %v2354 = vadd.f32 %v2166, %v2353
      %v2355 = vpop.f32.mrf.mxu0
      %2356 = vmatprep.mubr.f32.mxu0 0.0
      %v2357 = vand.u32 %v1615, 4294901760
      %v2358 = vsub.f32 %v1615, %v2357
      %v2359 = vand.u32 %v2358, 4294901760
      %2360 = vmatmul.mubr.f32.gmra.mxu0 %v2359
      %v2361 = vpop.f32.mrf.mxu0
      %v2362 = vadd.f32 %v2173, %v2361
      %v2363 = vpop.f32.mrf.mxu0
      %2364 = vmatprep.mubr.f32.mxu0 0.0
      %v2365 = vand.u32 %v1618, 4294901760
      %v2366 = vsub.f32 %v1618, %v2365
      %v2367 = vand.u32 %v2366, 4294901760
      %2368 = vmatmul.mubr.f32.gmra.mxu0 %v2367
      %v2369 = vpop.f32.mrf.mxu0
      %v2370 = vadd.f32 %v2180, %v2369
      %v2371 = vpop.f32.mrf.mxu0
      %2372 = vmatprep.mubr.f32.mxu0 0.0
      %v2373 = vand.u32 %v1621, 4294901760
      %v2374 = vsub.f32 %v1621, %v2373
      %v2375 = vand.u32 %v2374, 4294901760
      %2376 = vmatmul.mubr.f32.gmra.mxu0 %v2375
      %v2377 = vpop.f32.mrf.mxu0
      %v2378 = vadd.f32 %v2187, %v2377
      %v2379 = vpop.f32.mrf.mxu0
      %2380 = vmatprep.mubr.f32.mxu0 0.0
      %v2381 = vand.u32 %v1624, 4294901760
      %v2382 = vsub.f32 %v1624, %v2381
      %v2383 = vand.u32 %v2382, 4294901760
      %2384 = vmatmul.mubr.f32.gmra.mxu0 %v2383
      %v2385 = vpop.f32.mrf.mxu0
      %v2386 = vadd.f32 %v2194, %v2385
      %v2387 = vpop.f32.mrf.mxu0
      %2388 = vmatprep.mubr.f32.mxu0 0.0
      %v2389 = vand.u32 %v1627, 4294901760
      %v2390 = vsub.f32 %v1627, %v2389
      %v2391 = vand.u32 %v2390, 4294901760
      %2392 = vmatmul.mubr.f32.gmra.mxu0 %v2391
      %v2393 = vpop.f32.mrf.mxu0
      %v2394 = vadd.f32 %v2201, %v2393
      %v2395 = vpop.f32.mrf.mxu0
      %2396 = vmatprep.mubr.f32.mxu0 0.0
      %v2397 = vand.u32 %v1630, 4294901760
      %v2398 = vsub.f32 %v1630, %v2397
      %v2399 = vand.u32 %v2398, 4294901760
      %2400 = vmatmul.mubr.f32.gmra.mxu0 %v2399
      %v2401 = vpop.f32.mrf.mxu0
      %v2402 = vadd.f32 %v2208, %v2401
      %v2403 = vpop.f32.mrf.mxu0
      %2404 = vmatprep.mubr.f32.mxu0 0.0
      %v2405 = vand.u32 %v1633, 4294901760
      %v2406 = vsub.f32 %v1633, %v2405
      %v2407 = vand.u32 %v2406, 4294901760
      %2408 = vmatmul.mubr.f32.gmra.mxu0 %v2407
      %v2409 = vpop.f32.mrf.mxu0
      %v2410 = vadd.f32 %v2215, %v2409
      %v2411 = vpop.f32.mrf.mxu0
      %2412 = vmatprep.mubr.f32.mxu0 0.0
      %v2413 = vand.u32 %v1636, 4294901760
      %v2414 = vsub.f32 %v1636, %v2413
      %v2415 = vand.u32 %v2414, 4294901760
      %2416 = vmatmul.mubr.f32.gmra.mxu0 %v2415
      %v2417 = vpop.f32.mrf.mxu0
      %v2418 = vadd.f32 %v2222, %v2417
      %v2419 = vpop.f32.mrf.mxu0
      %2420 = vdwg.mxu0
      %2421 = vmatprep.subr.mxu0 0.0
      %2422 = vmatpush1.msra.mxu0 0.0
      %2423 = vmatprep.subr.mxu0 0.0
      %2424 = vmatpush1.msra.mxu0 0.0
      %2425 = vmatprep.subr.mxu0 0.0
      %2426 = vmatpush1.msra.mxu0 0.0
      %2427 = vmatprep.subr.mxu0 0.0
      %2428 = vmatpush1.msra.mxu0 0.0
      %2429 = vmatprep.subr.mxu0 0.0
      %2430 = vmatpush1.msra.mxu0 0.0
      %2431 = vmatprep.subr.mxu0 0.0
      %2432 = vmatpush1.msra.mxu0 0.0
      %2433 = vmatprep.subr.mxu0 0.0
      %2434 = vmatpush1.msra.mxu0 0.0
      %2435 = vmatprep.subr.mxu0 0.0
      %2436 = vmatpush1.msra.mxu0 0.0
      %2437 = vmatprep.subr.mxu0 0.0
      %2438 = vmatpush1.msra.mxu0 0.0
      %2439 = vmatprep.subr.mxu0 0.0
      %2440 = vmatpush1.msra.mxu0 0.0
      %2441 = vmatprep.subr.mxu0 0.0
      %2442 = vmatpush1.msra.mxu0 0.0
      %2443 = vmatprep.subr.mxu0 0.0
      %2444 = vmatpush1.msra.mxu0 0.0
      %2445 = vmatprep.subr.mxu0 0.0
      %2446 = vmatpush1.msra.mxu0 0.0
      %2447 = vmatprep.subr.mxu0 0.0
      %v2448 = vand.u32 %v340, 4294901760
      %v2449 = vsub.f32 %v340, %v2448
      %v2450 = vand.u32 %v2449, 4294901760
      %2451 = vmatpush1.msra.mxu0 %v2450
      %2452 = vmatprep.subr.mxu0 0.0
      %v2453 = vand.u32 %v171, 4294901760
      %v2454 = vsub.f32 %v171, %v2453
      %v2455 = vand.u32 %v2454, 4294901760
      %2456 = vmatpush1.msra.mxu0 %v2455
      %2457 = vmatprep.subr.mxu0 0.0
      %v2458 = vand.u32 %v170, 4294901760
      %v2459 = vsub.f32 %v170, %v2458
      %v2460 = vand.u32 %v2459, 4294901760
      %2461 = vmatpush1.msra.mxu0 %v2460
      %2462 = vmatprep.subr.mxu0 0.0
      %2463 = vmatpush2.msra.mxu0 0.0
      %2464 = vmatprep.subr.mxu0 0.0
      %2465 = vmatpush2.msra.mxu0 0.0
      %2466 = vmatprep.subr.mxu0 0.0
      %2467 = vmatpush2.msra.mxu0 0.0
      %2468 = vmatprep.subr.mxu0 0.0
      %2469 = vmatpush2.msra.mxu0 0.0
      %2470 = vmatprep.subr.mxu0 0.0
      %2471 = vmatpush2.msra.mxu0 0.0
      %2472 = vmatprep.subr.mxu0 0.0
      %2473 = vmatpush2.msra.mxu0 0.0
      %2474 = vmatprep.subr.mxu0 0.0
      %2475 = vmatpush2.msra.mxu0 0.0
      %2476 = vmatprep.subr.mxu0 0.0
      %2477 = vmatpush2.msra.mxu0 0.0
      %2478 = vmatprep.subr.mxu0 0.0
      %2479 = vmatpush2.msra.mxu0 0.0
      %2480 = vmatprep.subr.mxu0 0.0
      %2481 = vmatpush2.msra.mxu0 0.0
      %2482 = vmatprep.subr.mxu0 0.0
      %2483 = vmatpush2.msra.mxu0 0.0
      %2484 = vmatprep.subr.mxu0 0.0
      %2485 = vmatpush2.msra.mxu0 0.0
      %2486 = vmatprep.subr.mxu0 0.0
      %2487 = vmatpush2.msra.mxu0 0.0
      %2488 = vmatprep.subr.mxu0 0.0
      %2489 = vmatpush2.msra.mxu0 0.0
      %2490 = vmatprep.subr.mxu0 0.0
      %2491 = vmatpush2.msra.mxu0 0.0
      %2492 = vmatprep.subr.mxu0 0.0
      %2493 = vmatpush2.msra.mxu0 0.0
      %2494 = vmatprep.mubr.f32.mxu0 0.0
      %v2495 = vand.u32 %v1591, 4294901760
      %2496 = vmatmul.mubr.f32.gmra.mxu0 %v2495
      %v2497 = vpop.f32.mrf.mxu0
      %v2498 = vadd.f32 %v2298, %v2497
      %v2499 = vpop.f32.mrf.mxu0
      %2500 = vmatprep.mubr.f32.mxu0 0.0
      %v2501 = vand.u32 %v1594, 4294901760
      %2502 = vmatmul.mubr.f32.gmra.mxu0 %v2501
      %v2503 = vpop.f32.mrf.mxu0
      %v2504 = vadd.f32 %v2306, %v2503
      %v2505 = vpop.f32.mrf.mxu0
      %2506 = vmatprep.mubr.f32.mxu0 0.0
      %v2507 = vand.u32 %v1597, 4294901760
      %2508 = vmatmul.mubr.f32.gmra.mxu0 %v2507
      %v2509 = vpop.f32.mrf.mxu0
      %v2510 = vadd.f32 %v2314, %v2509
      %v2511 = vpop.f32.mrf.mxu0
      %2512 = vmatprep.mubr.f32.mxu0 0.0
      %v2513 = vand.u32 %v1600, 4294901760
      %2514 = vmatmul.mubr.f32.gmra.mxu0 %v2513
      %v2515 = vpop.f32.mrf.mxu0
      %v2516 = vadd.f32 %v2322, %v2515
      %v2517 = vpop.f32.mrf.mxu0
      %2518 = vmatprep.mubr.f32.mxu0 0.0
      %v2519 = vand.u32 %v1603, 4294901760
      %2520 = vmatmul.mubr.f32.gmra.mxu0 %v2519
      %v2521 = vpop.f32.mrf.mxu0
      %v2522 = vadd.f32 %v2330, %v2521
      %v2523 = vpop.f32.mrf.mxu0
      %2524 = vmatprep.mubr.f32.mxu0 0.0
      %v2525 = vand.u32 %v1606, 4294901760
      %2526 = vmatmul.mubr.f32.gmra.mxu0 %v2525
      %v2527 = vpop.f32.mrf.mxu0
      %v2528 = vadd.f32 %v2338, %v2527
      %v2529 = vpop.f32.mrf.mxu0
      %2530 = vmatprep.mubr.f32.mxu0 0.0
      %v2531 = vand.u32 %v1609, 4294901760
      %2532 = vmatmul.mubr.f32.gmra.mxu0 %v2531
      %v2533 = vpop.f32.mrf.mxu0
      %v2534 = vadd.f32 %v2346, %v2533
      %v2535 = vpop.f32.mrf.mxu0
      %2536 = vmatprep.mubr.f32.mxu0 0.0
      %v2537 = vand.u32 %v1612, 4294901760
      %2538 = vmatmul.mubr.f32.gmra.mxu0 %v2537
      %v2539 = vpop.f32.mrf.mxu0
      %v2540 = vadd.f32 %v2354, %v2539
      %v2541 = vpop.f32.mrf.mxu0
      %2542 = vmatprep.mubr.f32.mxu0 0.0
      %v2543 = vand.u32 %v1615, 4294901760
      %2544 = vmatmul.mubr.f32.gmra.mxu0 %v2543
      %v2545 = vpop.f32.mrf.mxu0
      %v2546 = vadd.f32 %v2362, %v2545
      %v2547 = vpop.f32.mrf.mxu0
      %2548 = vmatprep.mubr.f32.mxu0 0.0
      %v2549 = vand.u32 %v1618, 4294901760
      %2550 = vmatmul.mubr.f32.gmra.mxu0 %v2549
      %v2551 = vpop.f32.mrf.mxu0
      %v2552 = vadd.f32 %v2370, %v2551
      %v2553 = vpop.f32.mrf.mxu0
      %2554 = vmatprep.mubr.f32.mxu0 0.0
      %v2555 = vand.u32 %v1621, 4294901760
      %2556 = vmatmul.mubr.f32.gmra.mxu0 %v2555
      %v2557 = vpop.f32.mrf.mxu0
      %v2558 = vadd.f32 %v2378, %v2557
      %v2559 = vpop.f32.mrf.mxu0
      %2560 = vmatprep.mubr.f32.mxu0 0.0
      %v2561 = vand.u32 %v1624, 4294901760
      %2562 = vmatmul.mubr.f32.gmra.mxu0 %v2561
      %v2563 = vpop.f32.mrf.mxu0
      %v2564 = vadd.f32 %v2386, %v2563
      %v2565 = vpop.f32.mrf.mxu0
      %2566 = vmatprep.mubr.f32.mxu0 0.0
      %v2567 = vand.u32 %v1627, 4294901760
      %2568 = vmatmul.mubr.f32.gmra.mxu0 %v2567
      %v2569 = vpop.f32.mrf.mxu0
      %v2570 = vadd.f32 %v2394, %v2569
      %v2571 = vpop.f32.mrf.mxu0
      %2572 = vmatprep.mubr.f32.mxu0 0.0
      %v2573 = vand.u32 %v1630, 4294901760
      %2574 = vmatmul.mubr.f32.gmra.mxu0 %v2573
      %v2575 = vpop.f32.mrf.mxu0
      %v2576 = vadd.f32 %v2402, %v2575
      %v2577 = vpop.f32.mrf.mxu0
      %2578 = vmatprep.mubr.f32.mxu0 0.0
      %v2579 = vand.u32 %v1633, 4294901760
      %2580 = vmatmul.mubr.f32.gmra.mxu0 %v2579
      %v2581 = vpop.f32.mrf.mxu0
      %v2582 = vadd.f32 %v2410, %v2581
      %v2583 = vpop.f32.mrf.mxu0
      %2584 = vmatprep.mubr.f32.mxu0 0.0
      %v2585 = vand.u32 %v1636, 4294901760
      %2586 = vmatmul.mubr.f32.gmra.mxu0 %v2585
      %v2587 = vpop.f32.mrf.mxu0
      %v2588 = vadd.f32 %v2418, %v2587
      %v2589 = vpop.f32.mrf.mxu0
      %2590 = vdwg.mxu0
      %2591 = vmatprep.subr.mxu0 0.0
      %2592 = vmatpush1.msra.mxu0 0.0
      %2593 = vmatprep.subr.mxu0 0.0
      %2594 = vmatpush1.msra.mxu0 0.0
      %2595 = vmatprep.subr.mxu0 0.0
      %2596 = vmatpush1.msra.mxu0 0.0
      %2597 = vmatprep.subr.mxu0 0.0
      %2598 = vmatpush1.msra.mxu0 0.0
      %2599 = vmatprep.subr.mxu0 0.0
      %2600 = vmatpush1.msra.mxu0 0.0
      %2601 = vmatprep.subr.mxu0 0.0
      %2602 = vmatpush1.msra.mxu0 0.0
      %2603 = vmatprep.subr.mxu0 0.0
      %2604 = vmatpush1.msra.mxu0 0.0
      %2605 = vmatprep.subr.mxu0 0.0
      %2606 = vmatpush1.msra.mxu0 0.0
      %2607 = vmatprep.subr.mxu0 0.0
      %2608 = vmatpush1.msra.mxu0 0.0
      %2609 = vmatprep.subr.mxu0 0.0
      %2610 = vmatpush1.msra.mxu0 0.0
      %2611 = vmatprep.subr.mxu0 0.0
      %2612 = vmatpush1.msra.mxu0 0.0
      %2613 = vmatprep.subr.mxu0 0.0
      %2614 = vmatpush1.msra.mxu0 0.0
      %2615 = vmatprep.subr.mxu0 0.0
      %2616 = vmatpush1.msra.mxu0 0.0
      %2617 = vmatprep.subr.mxu0 0.0
      %v2618 = vand.u32 %v340, 4294901760
      %2619 = vmatpush1.msra.mxu0 %v2618
      %2620 = vmatprep.subr.mxu0 0.0
      %v2621 = vand.u32 %v171, 4294901760
      %2622 = vmatpush1.msra.mxu0 %v2621
      %2623 = vmatprep.subr.mxu0 0.0
      %v2624 = vand.u32 %v170, 4294901760
      %2625 = vmatpush1.msra.mxu0 %v2624
      %2626 = vmatprep.subr.mxu0 0.0
      %2627 = vmatpush2.msra.mxu0 0.0
      %2628 = vmatprep.subr.mxu0 0.0
      %2629 = vmatpush2.msra.mxu0 0.0
      %2630 = vmatprep.subr.mxu0 0.0
      %2631 = vmatpush2.msra.mxu0 0.0
      %2632 = vmatprep.subr.mxu0 0.0
      %2633 = vmatpush2.msra.mxu0 0.0
      %2634 = vmatprep.subr.mxu0 0.0
      %2635 = vmatpush2.msra.mxu0 0.0
      %2636 = vmatprep.subr.mxu0 0.0
      %2637 = vmatpush2.msra.mxu0 0.0
      %2638 = vmatprep.subr.mxu0 0.0
      %2639 = vmatpush2.msra.mxu0 0.0
      %2640 = vmatprep.subr.mxu0 0.0
      %2641 = vmatpush2.msra.mxu0 0.0
      %2642 = vmatprep.subr.mxu0 0.0
      %2643 = vmatpush2.msra.mxu0 0.0
      %2644 = vmatprep.subr.mxu0 0.0
      %2645 = vmatpush2.msra.mxu0 0.0
      %2646 = vmatprep.subr.mxu0 0.0
      %2647 = vmatpush2.msra.mxu0 0.0
      %2648 = vmatprep.subr.mxu0 0.0
      %2649 = vmatpush2.msra.mxu0 0.0
      %2650 = vmatprep.subr.mxu0 0.0
      %2651 = vmatpush2.msra.mxu0 0.0
      %2652 = vmatprep.subr.mxu0 0.0
      %2653 = vmatpush2.msra.mxu0 0.0
      %2654 = vmatprep.subr.mxu0 0.0
      %2655 = vmatpush2.msra.mxu0 0.0
      %2656 = vmatprep.subr.mxu0 0.0
      %2657 = vmatpush2.msra.mxu0 0.0
      %2658 = vmatprep.mubr.f32.mxu0 0.0
      %v2659 = vand.u32 %v1591, 4294901760
      %2660 = vmatmul.mubr.f32.gmra.mxu0 %v2659
      %v2661 = vpop.f32.mrf.mxu0
      %v2662 = vadd.f32 %v2498, %v2661
      %v2663 = vpop.f32.mrf.mxu0
      %2664 = vmatprep.mubr.f32.mxu0 0.0
      %v2665 = vand.u32 %v1594, 4294901760
      %2666 = vmatmul.mubr.f32.gmra.mxu0 %v2665
      %v2667 = vpop.f32.mrf.mxu0
      %v2668 = vadd.f32 %v2504, %v2667
      %v2669 = vpop.f32.mrf.mxu0
      %2670 = vmatprep.mubr.f32.mxu0 0.0
      %v2671 = vand.u32 %v1597, 4294901760
      %2672 = vmatmul.mubr.f32.gmra.mxu0 %v2671
      %v2673 = vpop.f32.mrf.mxu0
      %v2674 = vadd.f32 %v2510, %v2673
      %v2675 = vpop.f32.mrf.mxu0
      %2676 = vmatprep.mubr.f32.mxu0 0.0
      %v2677 = vand.u32 %v1600, 4294901760
      %2678 = vmatmul.mubr.f32.gmra.mxu0 %v2677
      %v2679 = vpop.f32.mrf.mxu0
      %v2680 = vadd.f32 %v2516, %v2679
      %v2681 = vpop.f32.mrf.mxu0
      %2682 = vmatprep.mubr.f32.mxu0 0.0
      %v2683 = vand.u32 %v1603, 4294901760
      %2684 = vmatmul.mubr.f32.gmra.mxu0 %v2683
      %v2685 = vpop.f32.mrf.mxu0
      %v2686 = vadd.f32 %v2522, %v2685
      %v2687 = vpop.f32.mrf.mxu0
      %2688 = vmatprep.mubr.f32.mxu0 0.0
      %v2689 = vand.u32 %v1606, 4294901760
      %2690 = vmatmul.mubr.f32.gmra.mxu0 %v2689
      %v2691 = vpop.f32.mrf.mxu0
      %v2692 = vadd.f32 %v2528, %v2691
      %v2693 = vpop.f32.mrf.mxu0
      %2694 = vmatprep.mubr.f32.mxu0 0.0
      %v2695 = vand.u32 %v1609, 4294901760
      %2696 = vmatmul.mubr.f32.gmra.mxu0 %v2695
      %v2697 = vpop.f32.mrf.mxu0
      %v2698 = vadd.f32 %v2534, %v2697
      %v2699 = vpop.f32.mrf.mxu0
      %2700 = vmatprep.mubr.f32.mxu0 0.0
      %v2701 = vand.u32 %v1612, 4294901760
      %2702 = vmatmul.mubr.f32.gmra.mxu0 %v2701
      %v2703 = vpop.f32.mrf.mxu0
      %v2704 = vadd.f32 %v2540, %v2703
      %v2705 = vpop.f32.mrf.mxu0
      %2706 = vmatprep.mubr.f32.mxu0 0.0
      %v2707 = vand.u32 %v1615, 4294901760
      %2708 = vmatmul.mubr.f32.gmra.mxu0 %v2707
      %v2709 = vpop.f32.mrf.mxu0
      %v2710 = vadd.f32 %v2546, %v2709
      %v2711 = vpop.f32.mrf.mxu0
      %2712 = vmatprep.mubr.f32.mxu0 0.0
      %v2713 = vand.u32 %v1618, 4294901760
      %2714 = vmatmul.mubr.f32.gmra.mxu0 %v2713
      %v2715 = vpop.f32.mrf.mxu0
      %v2716 = vadd.f32 %v2552, %v2715
      %v2717 = vpop.f32.mrf.mxu0
      %2718 = vmatprep.mubr.f32.mxu0 0.0
      %v2719 = vand.u32 %v1621, 4294901760
      %2720 = vmatmul.mubr.f32.gmra.mxu0 %v2719
      %v2721 = vpop.f32.mrf.mxu0
      %v2722 = vadd.f32 %v2558, %v2721
      %v2723 = vpop.f32.mrf.mxu0
      %2724 = vmatprep.mubr.f32.mxu0 0.0
      %v2725 = vand.u32 %v1624, 4294901760
      %2726 = vmatmul.mubr.f32.gmra.mxu0 %v2725
      %v2727 = vpop.f32.mrf.mxu0
      %v2728 = vadd.f32 %v2564, %v2727
      %v2729 = vpop.f32.mrf.mxu0
      %2730 = vmatprep.mubr.f32.mxu0 0.0
      %v2731 = vand.u32 %v1627, 4294901760
      %2732 = vmatmul.mubr.f32.gmra.mxu0 %v2731
      %v2733 = vpop.f32.mrf.mxu0
      %v2734 = vadd.f32 %v2570, %v2733
      %v2735 = vpop.f32.mrf.mxu0
      %2736 = vmatprep.mubr.f32.mxu0 0.0
      %v2737 = vand.u32 %v1630, 4294901760
      %2738 = vmatmul.mubr.f32.gmra.mxu0 %v2737
      %v2739 = vpop.f32.mrf.mxu0
      %v2740 = vadd.f32 %v2576, %v2739
      %v2741 = vpop.f32.mrf.mxu0
      %2742 = vmatprep.mubr.f32.mxu0 0.0
      %v2743 = vand.u32 %v1633, 4294901760
      %2744 = vmatmul.mubr.f32.gmra.mxu0 %v2743
      %v2745 = vpop.f32.mrf.mxu0
      %v2746 = vadd.f32 %v2582, %v2745
      %v2747 = vpop.f32.mrf.mxu0
      %2748 = vmatprep.mubr.f32.mxu0 0.0
      %v2749 = vand.u32 %v1636, 4294901760
      %2750 = vmatmul.mubr.f32.gmra.mxu0 %v2749
      %v2751 = vpop.f32.mrf.mxu0
      %v2752 = vadd.f32 %v2588, %v2751
      %v2753 = vpop.f32.mrf.mxu0
      %2754 = vdwg.mxu0
      %2771 = vrot.lane.b32.xlu0 %v2662, 32
      %v2772 = vpop.permute.xlu0 %2771
      %2773 = vrot.lane.b32.xlu0 %v2668, 32
      %v2774 = vpop.permute.xlu0 %2773
      %2775 = vrot.lane.b32.xlu0 %v2674, 32
      %v2776 = vpop.permute.xlu0 %2775
      %2777 = vrot.lane.b32.xlu0 %v2680, 32
      %v2778 = vpop.permute.xlu0 %2777
      %2779 = vrot.lane.b32.xlu0 %v2686, 32
      %v2780 = vpop.permute.xlu0 %2779
      %2781 = vrot.lane.b32.xlu0 %v2692, 32
      %v2782 = vpop.permute.xlu0 %2781
      %2783 = vrot.lane.b32.xlu0 %v2698, 32
      %v2784 = vpop.permute.xlu0 %2783
      %2785 = vrot.lane.b32.xlu0 %v2704, 32
      %v2786 = vpop.permute.xlu0 %2785
      %2787 = vrot.lane.b32.xlu0 %v2710, 32
      %v2788 = vpop.permute.xlu0 %2787
      %2789 = vrot.lane.b32.xlu0 %v2716, 32
      %v2790 = vpop.permute.xlu0 %2789
      %2791 = vrot.lane.b32.xlu0 %v2722, 32
      %v2792 = vpop.permute.xlu0 %2791
      %2793 = vrot.lane.b32.xlu0 %v2728, 32
      %v2794 = vpop.permute.xlu0 %2793
      %2795 = vrot.lane.b32.xlu0 %v2734, 32
      %v2796 = vpop.permute.xlu0 %2795
      %2797 = vrot.lane.b32.xlu0 %v2740, 32
      %v2798 = vpop.permute.xlu0 %2797
      %2799 = vrot.lane.b32.xlu0 %v2746, 32
      %v2800 = vpop.permute.xlu0 %2799
      %2801 = vrot.lane.b32.xlu0 %v2752, 32
      %v2802 = vpop.permute.xlu0 %2801
      %vm2819 = vcmask 523520
      %2820 = vst.msk [vmem:[%s152] sm:$0xff] %vm2819, %v2772
      %2821 = vst.msk [vmem:[%s152 + $0x8] sm:$0xff] %vm2819, %v2774
      %2822 = vst.msk [vmem:[%s152 + $0x10] sm:$0xff] %vm2819, %v2776
      %2823 = vst.msk [vmem:[%s152 + $0x18] sm:$0xff] %vm2819, %v2778
      %2824 = vst.msk [vmem:[%s152 + $0x20] sm:$0xff] %vm2819, %v2780
      %2825 = vst.msk [vmem:[%s152 + $0x28] sm:$0xff] %vm2819, %v2782
      %2826 = vst.msk [vmem:[%s152 + $0x30] sm:$0xff] %vm2819, %v2784
      %2827 = vst.msk [vmem:[%s152 + $0x38] sm:$0xff] %vm2819, %v2786
      %2828 = vst.msk [vmem:[%s152 + $0x40] sm:$0xff] %vm2819, %v2788
      %2829 = vst.msk [vmem:[%s152 + $0x48] sm:$0xff] %vm2819, %v2790
      %2830 = vst.msk [vmem:[%s152 + $0x50] sm:$0xff] %vm2819, %v2792
      %2831 = vst.msk [vmem:[%s152 + $0x58] sm:$0xff] %vm2819, %v2794
      %2832 = vst.msk [vmem:[%s152 + $0x60] sm:$0xff] %vm2819, %v2796
      %2833 = vst.msk [vmem:[%s152 + $0x68] sm:$0xff] %vm2819, %v2798
      %2834 = vst.msk [vmem:[%s152 + $0x70] sm:$0xff] %vm2819, %v2800
      %2835 = vst.msk [vmem:[%s152 + $0x78] sm:$0xff] %vm2819, %v2802
      %s2836 = sld [smem:[#allocation3 + $0x2]]
      %v2837 = vstv %s2836
      %v2838 = vadd.s32 %v154, %v2837
      %v2839 = vadd.s32 %v155, %v2837
      %v2840 = vadd.s32 %v156, %v2837
      %v2841 = vadd.s32 %v157, %v2837
      %v2842 = vadd.s32 %v158, %v2837
      %v2843 = vadd.s32 %v159, %v2837
      %v2844 = vadd.s32 %v160, %v2837
      %v2845 = vadd.s32 %v161, %v2837
      %v2846 = vadd.s32 %v162, %v2837
      %v2847 = vadd.s32 %v163, %v2837
      %v2848 = vadd.s32 %v164, %v2837
      %v2849 = vadd.s32 %v165, %v2837
      %v2850 = vadd.s32 %v166, %v2837
      %v2851 = vadd.s32 %v167, %v2837
      %v2852 = vadd.s32 %v168, %v2837
      %v2853 = vadd.s32 %v169, %v2837
      %2854 = vset.pattern.permute.xlu0 2
      %2855 = vperm.xlu0 %2854, %v2838
      %v2856 = vpop.permute.xlu0 %2855
      %2857 = vset.pattern.permute.xlu0 2
      %2858 = vperm.xlu0 %2857, %v2839
      %v2859 = vpop.permute.xlu0 %2858
      %2860 = vset.pattern.permute.xlu0 2
      %2861 = vperm.xlu0 %2860, %v2840
      %v2862 = vpop.permute.xlu0 %2861
      %2863 = vset.pattern.permute.xlu0 2
      %2864 = vperm.xlu0 %2863, %v2841
      %v2865 = vpop.permute.xlu0 %2864
      %2866 = vset.pattern.permute.xlu0 2
      %2867 = vperm.xlu0 %2866, %v2842
      %v2868 = vpop.permute.xlu0 %2867
      %2869 = vset.pattern.permute.xlu0 2
      %2870 = vperm.xlu0 %2869, %v2843
      %v2871 = vpop.permute.xlu0 %2870
      %2872 = vset.pattern.permute.xlu0 2
      %2873 = vperm.xlu0 %2872, %v2844
      %v2874 = vpop.permute.xlu0 %2873
      %2875 = vset.pattern.permute.xlu0 2
      %2876 = vperm.xlu0 %2875, %v2845
      %v2877 = vpop.permute.xlu0 %2876
      %2878 = vset.pattern.permute.xlu0 2
      %2879 = vperm.xlu0 %2878, %v2846
      %v2880 = vpop.permute.xlu0 %2879
      %2881 = vset.pattern.permute.xlu0 2
      %2882 = vperm.xlu0 %2881, %v2847
      %v2883 = vpop.permute.xlu0 %2882
      %2884 = vset.pattern.permute.xlu0 2
      %2885 = vperm.xlu0 %2884, %v2848
      %v2886 = vpop.permute.xlu0 %2885
      %2887 = vset.pattern.permute.xlu0 2
      %2888 = vperm.xlu0 %2887, %v2849
      %v2889 = vpop.permute.xlu0 %2888
      %2890 = vset.pattern.permute.xlu0 2
      %2891 = vperm.xlu0 %2890, %v2850
      %v2892 = vpop.permute.xlu0 %2891
      %2893 = vset.pattern.permute.xlu0 2
      %2894 = vperm.xlu0 %2893, %v2851
      %v2895 = vpop.permute.xlu0 %2894
      %2896 = vset.pattern.permute.xlu0 2
      %2897 = vperm.xlu0 %2896, %v2852
      %v2898 = vpop.permute.xlu0 %2897
      %2899 = vset.pattern.permute.xlu0 2
      %2900 = vperm.xlu0 %2899, %v2853
      %v2901 = vpop.permute.xlu0 %2900
      %vm2902 = vcmp.eq.s32.totalorder %v174, %v2856
      %vm2903 = vcmp.eq.s32.totalorder %v174, %v2859
      %vm2904 = vcmp.eq.s32.totalorder %v174, %v2862
      %vm2905 = vcmp.eq.s32.totalorder %v174, %v2865
      %vm2906 = vcmp.eq.s32.totalorder %v174, %v2868
      %vm2907 = vcmp.eq.s32.totalorder %v174, %v2871
      %vm2908 = vcmp.eq.s32.totalorder %v174, %v2874
      %vm2909 = vcmp.eq.s32.totalorder %v174, %v2877
      %vm2910 = vcmp.eq.s32.totalorder %v174, %v2880
      %vm2911 = vcmp.eq.s32.totalorder %v174, %v2883
      %vm2912 = vcmp.eq.s32.totalorder %v174, %v2886
      %vm2913 = vcmp.eq.s32.totalorder %v174, %v2889
      %vm2914 = vcmp.eq.s32.totalorder %v174, %v2892
      %vm2915 = vcmp.eq.s32.totalorder %v174, %v2895
      %vm2916 = vcmp.eq.s32.totalorder %v174, %v2898
      %vm2917 = vcmp.eq.s32.totalorder %v174, %v2901
      %v2918 = vsel %vm2902, 1, 0
      %v2919 = vsel %vm2903, 1, 0
      %v2920 = vsel %vm2904, 1, 0
      %v2921 = vsel %vm2905, 1, 0
      %v2922 = vsel %vm2906, 1, 0
      %v2923 = vsel %vm2907, 1, 0
      %v2924 = vsel %vm2908, 1, 0
      %v2925 = vsel %vm2909, 1, 0
      %v2926 = vsel %vm2910, 1, 0
      %v2927 = vsel %vm2911, 1, 0
      %v2928 = vsel %vm2912, 1, 0
      %v2929 = vsel %vm2913, 1, 0
      %v2930 = vsel %vm2914, 1, 0
      %v2931 = vsel %vm2915, 1, 0
      %v2932 = vsel %vm2916, 1, 0
      %v2933 = vsel %vm2917, 1, 0
      %v2934 = vcvt.s32.f32 %v2918
      %v2935 = vcvt.s32.f32 %v2919
      %v2936 = vcvt.s32.f32 %v2920
      %v2937 = vcvt.s32.f32 %v2921
      %v2938 = vcvt.s32.f32 %v2922
      %v2939 = vcvt.s32.f32 %v2923
      %v2940 = vcvt.s32.f32 %v2924
      %v2941 = vcvt.s32.f32 %v2925
      %v2942 = vcvt.s32.f32 %v2926
      %v2943 = vcvt.s32.f32 %v2927
      %v2944 = vcvt.s32.f32 %v2928
      %v2945 = vcvt.s32.f32 %v2929
      %v2946 = vcvt.s32.f32 %v2930
      %v2947 = vcvt.s32.f32 %v2931
      %v2948 = vcvt.s32.f32 %v2932
      %v2949 = vcvt.s32.f32 %v2933
      %v2951 = vsel %vm289, %v2934, 0
      %v2954 = vsel %vm289, %v2935, 0
      %v2957 = vsel %vm289, %v2936, 0
      %v2960 = vsel %vm289, %v2937, 0
      %v2963 = vsel %vm289, %v2938, 0
      %v2966 = vsel %vm289, %v2939, 0
      %v2969 = vsel %vm289, %v2940, 0
      %v2972 = vsel %vm289, %v2941, 0
      %v2975 = vsel %vm289, %v2942, 0
      %v2978 = vsel %vm289, %v2943, 0
      %v2981 = vsel %vm289, %v2944, 0
      %v2984 = vsel %vm289, %v2945, 0
      %v2987 = vsel %vm289, %v2946, 0
      %v2990 = vsel %vm289, %v2947, 0
      %v2993 = vsel %vm289, %v2948, 0
      %v2996 = vsel %vm289, %v2949, 0
      %2998 = vmatprep.subr.mxu0 0.0
      %2999 = vmatpush1.msra.mxu0 0.0
      %3000 = vmatprep.subr.mxu0 0.0
      %3001 = vmatpush1.msra.mxu0 0.0
      %3002 = vmatprep.subr.mxu0 0.0
      %3003 = vmatpush1.msra.mxu0 0.0
      %3004 = vmatprep.subr.mxu0 0.0
      %3005 = vmatpush1.msra.mxu0 0.0
      %3006 = vmatprep.subr.mxu0 0.0
      %3007 = vmatpush1.msra.mxu0 0.0
      %3008 = vmatprep.subr.mxu0 0.0
      %3009 = vmatpush1.msra.mxu0 0.0
      %3010 = vmatprep.subr.mxu0 0.0
      %3011 = vmatpush1.msra.mxu0 0.0
      %3012 = vmatprep.subr.mxu0 0.0
      %3013 = vmatpush1.msra.mxu0 0.0
      %3014 = vmatprep.subr.mxu0 0.0
      %3015 = vmatpush1.msra.mxu0 0.0
      %3016 = vmatprep.subr.mxu0 0.0
      %3017 = vmatpush1.msra.mxu0 0.0
      %3018 = vmatprep.subr.mxu0 0.0
      %3019 = vmatpush1.msra.mxu0 0.0
      %3020 = vmatprep.subr.mxu0 0.0
      %3021 = vmatpush1.msra.mxu0 0.0
      %3022 = vmatprep.subr.mxu0 0.0
      %3023 = vmatpush1.msra.mxu0 0.0
      %3024 = vmatprep.subr.mxu0 0.0
      %v3025 = vand.u32 %v340, 4294901760
      %3026 = vmatpush1.msra.mxu0 %v3025
      %3027 = vmatprep.subr.mxu0 0.0
      %v3028 = vand.u32 %v171, 4294901760
      %3029 = vmatpush1.msra.mxu0 %v3028
      %3030 = vmatprep.subr.mxu0 0.0
      %v3031 = vand.u32 %v170, 4294901760
      %3032 = vmatpush1.msra.mxu0 %v3031
      %3033 = vmatprep.subr.mxu0 0.0
      %3034 = vmatpush2.msra.mxu0 0.0
      %3035 = vmatprep.subr.mxu0 0.0
      %3036 = vmatpush2.msra.mxu0 0.0
      %3037 = vmatprep.subr.mxu0 0.0
      %3038 = vmatpush2.msra.mxu0 0.0
      %3039 = vmatprep.subr.mxu0 0.0
      %3040 = vmatpush2.msra.mxu0 0.0
      %3041 = vmatprep.subr.mxu0 0.0
      %3042 = vmatpush2.msra.mxu0 0.0
      %3043 = vmatprep.subr.mxu0 0.0
      %3044 = vmatpush2.msra.mxu0 0.0
      %3045 = vmatprep.subr.mxu0 0.0
      %3046 = vmatpush2.msra.mxu0 0.0
      %3047 = vmatprep.subr.mxu0 0.0
      %3048 = vmatpush2.msra.mxu0 0.0
      %3049 = vmatprep.subr.mxu0 0.0
      %3050 = vmatpush2.msra.mxu0 0.0
      %3051 = vmatprep.subr.mxu0 0.0
      %3052 = vmatpush2.msra.mxu0 0.0
      %3053 = vmatprep.subr.mxu0 0.0
      %3054 = vmatpush2.msra.mxu0 0.0
      %3055 = vmatprep.subr.mxu0 0.0
      %3056 = vmatpush2.msra.mxu0 0.0
      %3057 = vmatprep.subr.mxu0 0.0
      %3058 = vmatpush2.msra.mxu0 0.0
      %3059 = vmatprep.subr.mxu0 0.0
      %3060 = vmatpush2.msra.mxu0 0.0
      %3061 = vmatprep.subr.mxu0 0.0
      %3062 = vmatpush2.msra.mxu0 0.0
      %3063 = vmatprep.subr.mxu0 0.0
      %3064 = vmatpush2.msra.mxu0 0.0
      %3065 = vmatprep.mubr.f32.mxu0 0.0
      %v3066 = vand.u32 %v2951, 4294901760
      %v3067 = vsub.f32 %v2951, %v3066
      %v3068 = vand.u32 %v3067, 4294901760
      %v3069 = vsub.f32 %v3067, %v3068
      %v3070 = vand.u32 %v3069, 4294901760
      %3071 = vmatmul.mubr.f32.gmra.mxu0 %v3070
      %v3072 = vpop.f32.mrf.mxu0
      %v3073 = vadd.f32 0.0, %v3072
      %v3074 = vpop.f32.mrf.mxu0
      %3075 = vmatprep.mubr.f32.mxu0 0.0
      %v3076 = vand.u32 %v2954, 4294901760
      %v3077 = vsub.f32 %v2954, %v3076
      %v3078 = vand.u32 %v3077, 4294901760
      %v3079 = vsub.f32 %v3077, %v3078
      %v3080 = vand.u32 %v3079, 4294901760
      %3081 = vmatmul.mubr.f32.gmra.mxu0 %v3080
      %v3082 = vpop.f32.mrf.mxu0
      %v3083 = vadd.f32 0.0, %v3082
      %v3084 = vpop.f32.mrf.mxu0
      %3085 = vmatprep.mubr.f32.mxu0 0.0
      %v3086 = vand.u32 %v2957, 4294901760
      %v3087 = vsub.f32 %v2957, %v3086
      %v3088 = vand.u32 %v3087, 4294901760
      %v3089 = vsub.f32 %v3087, %v3088
      %v3090 = vand.u32 %v3089, 4294901760
      %3091 = vmatmul.mubr.f32.gmra.mxu0 %v3090
      %v3092 = vpop.f32.mrf.mxu0
      %v3093 = vadd.f32 0.0, %v3092
      %v3094 = vpop.f32.mrf.mxu0
      %3095 = vmatprep.mubr.f32.mxu0 0.0
      %v3096 = vand.u32 %v2960, 4294901760
      %v3097 = vsub.f32 %v2960, %v3096
      %v3098 = vand.u32 %v3097, 4294901760
      %v3099 = vsub.f32 %v3097, %v3098
      %v3100 = vand.u32 %v3099, 4294901760
      %3101 = vmatmul.mubr.f32.gmra.mxu0 %v3100
      %v3102 = vpop.f32.mrf.mxu0
      %v3103 = vadd.f32 0.0, %v3102
      %v3104 = vpop.f32.mrf.mxu0
      %3105 = vmatprep.mubr.f32.mxu0 0.0
      %v3106 = vand.u32 %v2963, 4294901760
      %v3107 = vsub.f32 %v2963, %v3106
      %v3108 = vand.u32 %v3107, 4294901760
      %v3109 = vsub.f32 %v3107, %v3108
      %v3110 = vand.u32 %v3109, 4294901760
      %3111 = vmatmul.mubr.f32.gmra.mxu0 %v3110
      %v3112 = vpop.f32.mrf.mxu0
      %v3113 = vadd.f32 0.0, %v3112
      %v3114 = vpop.f32.mrf.mxu0
      %3115 = vmatprep.mubr.f32.mxu0 0.0
      %v3116 = vand.u32 %v2966, 4294901760
      %v3117 = vsub.f32 %v2966, %v3116
      %v3118 = vand.u32 %v3117, 4294901760
      %v3119 = vsub.f32 %v3117, %v3118
      %v3120 = vand.u32 %v3119, 4294901760
      %3121 = vmatmul.mubr.f32.gmra.mxu0 %v3120
      %v3122 = vpop.f32.mrf.mxu0
      %v3123 = vadd.f32 0.0, %v3122
      %v3124 = vpop.f32.mrf.mxu0
      %3125 = vmatprep.mubr.f32.mxu0 0.0
      %v3126 = vand.u32 %v2969, 4294901760
      %v3127 = vsub.f32 %v2969, %v3126
      %v3128 = vand.u32 %v3127, 4294901760
      %v3129 = vsub.f32 %v3127, %v3128
      %v3130 = vand.u32 %v3129, 4294901760
      %3131 = vmatmul.mubr.f32.gmra.mxu0 %v3130
      %v3132 = vpop.f32.mrf.mxu0
      %v3133 = vadd.f32 0.0, %v3132
      %v3134 = vpop.f32.mrf.mxu0
      %3135 = vmatprep.mubr.f32.mxu0 0.0
      %v3136 = vand.u32 %v2972, 4294901760
      %v3137 = vsub.f32 %v2972, %v3136
      %v3138 = vand.u32 %v3137, 4294901760
      %v3139 = vsub.f32 %v3137, %v3138
      %v3140 = vand.u32 %v3139, 4294901760
      %3141 = vmatmul.mubr.f32.gmra.mxu0 %v3140
      %v3142 = vpop.f32.mrf.mxu0
      %v3143 = vadd.f32 0.0, %v3142
      %v3144 = vpop.f32.mrf.mxu0
      %3145 = vmatprep.mubr.f32.mxu0 0.0
      %v3146 = vand.u32 %v2975, 4294901760
      %v3147 = vsub.f32 %v2975, %v3146
      %v3148 = vand.u32 %v3147, 4294901760
      %v3149 = vsub.f32 %v3147, %v3148
      %v3150 = vand.u32 %v3149, 4294901760
      %3151 = vmatmul.mubr.f32.gmra.mxu0 %v3150
      %v3152 = vpop.f32.mrf.mxu0
      %v3153 = vadd.f32 0.0, %v3152
      %v3154 = vpop.f32.mrf.mxu0
      %3155 = vmatprep.mubr.f32.mxu0 0.0
      %v3156 = vand.u32 %v2978, 4294901760
      %v3157 = vsub.f32 %v2978, %v3156
      %v3158 = vand.u32 %v3157, 4294901760
      %v3159 = vsub.f32 %v3157, %v3158
      %v3160 = vand.u32 %v3159, 4294901760
      %3161 = vmatmul.mubr.f32.gmra.mxu0 %v3160
      %v3162 = vpop.f32.mrf.mxu0
      %v3163 = vadd.f32 0.0, %v3162
      %v3164 = vpop.f32.mrf.mxu0
      %3165 = vmatprep.mubr.f32.mxu0 0.0
      %v3166 = vand.u32 %v2981, 4294901760
      %v3167 = vsub.f32 %v2981, %v3166
      %v3168 = vand.u32 %v3167, 4294901760
      %v3169 = vsub.f32 %v3167, %v3168
      %v3170 = vand.u32 %v3169, 4294901760
      %3171 = vmatmul.mubr.f32.gmra.mxu0 %v3170
      %v3172 = vpop.f32.mrf.mxu0
      %v3173 = vadd.f32 0.0, %v3172
      %v3174 = vpop.f32.mrf.mxu0
      %3175 = vmatprep.mubr.f32.mxu0 0.0
      %v3176 = vand.u32 %v2984, 4294901760
      %v3177 = vsub.f32 %v2984, %v3176
      %v3178 = vand.u32 %v3177, 4294901760
      %v3179 = vsub.f32 %v3177, %v3178
      %v3180 = vand.u32 %v3179, 4294901760
      %3181 = vmatmul.mubr.f32.gmra.mxu0 %v3180
      %v3182 = vpop.f32.mrf.mxu0
      %v3183 = vadd.f32 0.0, %v3182
      %v3184 = vpop.f32.mrf.mxu0
      %3185 = vmatprep.mubr.f32.mxu0 0.0
      %v3186 = vand.u32 %v2987, 4294901760
      %v3187 = vsub.f32 %v2987, %v3186
      %v3188 = vand.u32 %v3187, 4294901760
      %v3189 = vsub.f32 %v3187, %v3188
      %v3190 = vand.u32 %v3189, 4294901760
      %3191 = vmatmul.mubr.f32.gmra.mxu0 %v3190
      %v3192 = vpop.f32.mrf.mxu0
      %v3193 = vadd.f32 0.0, %v3192
      %v3194 = vpop.f32.mrf.mxu0
      %3195 = vmatprep.mubr.f32.mxu0 0.0
      %v3196 = vand.u32 %v2990, 4294901760
      %v3197 = vsub.f32 %v2990, %v3196
      %v3198 = vand.u32 %v3197, 4294901760
      %v3199 = vsub.f32 %v3197, %v3198
      %v3200 = vand.u32 %v3199, 4294901760
      %3201 = vmatmul.mubr.f32.gmra.mxu0 %v3200
      %v3202 = vpop.f32.mrf.mxu0
      %v3203 = vadd.f32 0.0, %v3202
      %v3204 = vpop.f32.mrf.mxu0
      %3205 = vmatprep.mubr.f32.mxu0 0.0
      %v3206 = vand.u32 %v2993, 4294901760
      %v3207 = vsub.f32 %v2993, %v3206
      %v3208 = vand.u32 %v3207, 4294901760
      %v3209 = vsub.f32 %v3207, %v3208
      %v3210 = vand.u32 %v3209, 4294901760
      %3211 = vmatmul.mubr.f32.gmra.mxu0 %v3210
      %v3212 = vpop.f32.mrf.mxu0
      %v3213 = vadd.f32 0.0, %v3212
      %v3214 = vpop.f32.mrf.mxu0
      %3215 = vmatprep.mubr.f32.mxu0 0.0
      %v3216 = vand.u32 %v2996, 4294901760
      %v3217 = vsub.f32 %v2996, %v3216
      %v3218 = vand.u32 %v3217, 4294901760
      %v3219 = vsub.f32 %v3217, %v3218
      %v3220 = vand.u32 %v3219, 4294901760
      %3221 = vmatmul.mubr.f32.gmra.mxu0 %v3220
      %v3222 = vpop.f32.mrf.mxu0
      %v3223 = vadd.f32 0.0, %v3222
      %v3224 = vpop.f32.mrf.mxu0
      %3225 = vdwg.mxu0
      %3226 = vmatprep.subr.mxu0 0.0
      %3227 = vmatpush1.msra.mxu0 0.0
      %3228 = vmatprep.subr.mxu0 0.0
      %3229 = vmatpush1.msra.mxu0 0.0
      %3230 = vmatprep.subr.mxu0 0.0
      %3231 = vmatpush1.msra.mxu0 0.0
      %3232 = vmatprep.subr.mxu0 0.0
      %3233 = vmatpush1.msra.mxu0 0.0
      %3234 = vmatprep.subr.mxu0 0.0
      %3235 = vmatpush1.msra.mxu0 0.0
      %3236 = vmatprep.subr.mxu0 0.0
      %3237 = vmatpush1.msra.mxu0 0.0
      %3238 = vmatprep.subr.mxu0 0.0
      %3239 = vmatpush1.msra.mxu0 0.0
      %3240 = vmatprep.subr.mxu0 0.0
      %3241 = vmatpush1.msra.mxu0 0.0
      %3242 = vmatprep.subr.mxu0 0.0
      %3243 = vmatpush1.msra.mxu0 0.0
      %3244 = vmatprep.subr.mxu0 0.0
      %3245 = vmatpush1.msra.mxu0 0.0
      %3246 = vmatprep.subr.mxu0 0.0
      %3247 = vmatpush1.msra.mxu0 0.0
      %3248 = vmatprep.subr.mxu0 0.0
      %3249 = vmatpush1.msra.mxu0 0.0
      %3250 = vmatprep.subr.mxu0 0.0
      %3251 = vmatpush1.msra.mxu0 0.0
      %3252 = vmatprep.subr.mxu0 0.0
      %v3253 = vand.u32 %v340, 4294901760
      %v3254 = vsub.f32 %v340, %v3253
      %v3255 = vand.u32 %v3254, 4294901760
      %v3256 = vsub.f32 %v3254, %v3255
      %v3257 = vand.u32 %v3256, 4294901760
      %3258 = vmatpush1.msra.mxu0 %v3257
      %3259 = vmatprep.subr.mxu0 0.0
      %v3260 = vand.u32 %v171, 4294901760
      %v3261 = vsub.f32 %v171, %v3260
      %v3262 = vand.u32 %v3261, 4294901760
      %v3263 = vsub.f32 %v3261, %v3262
      %v3264 = vand.u32 %v3263, 4294901760
      %3265 = vmatpush1.msra.mxu0 %v3264
      %3266 = vmatprep.subr.mxu0 0.0
      %v3267 = vand.u32 %v170, 4294901760
      %v3268 = vsub.f32 %v170, %v3267
      %v3269 = vand.u32 %v3268, 4294901760
      %v3270 = vsub.f32 %v3268, %v3269
      %v3271 = vand.u32 %v3270, 4294901760
      %3272 = vmatpush1.msra.mxu0 %v3271
      %3273 = vmatprep.subr.mxu0 0.0
      %3274 = vmatpush2.msra.mxu0 0.0
      %3275 = vmatprep.subr.mxu0 0.0
      %3276 = vmatpush2.msra.mxu0 0.0
      %3277 = vmatprep.subr.mxu0 0.0
      %3278 = vmatpush2.msra.mxu0 0.0
      %3279 = vmatprep.subr.mxu0 0.0
      %3280 = vmatpush2.msra.mxu0 0.0
      %3281 = vmatprep.subr.mxu0 0.0
      %3282 = vmatpush2.msra.mxu0 0.0
      %3283 = vmatprep.subr.mxu0 0.0
      %3284 = vmatpush2.msra.mxu0 0.0
      %3285 = vmatprep.subr.mxu0 0.0
      %3286 = vmatpush2.msra.mxu0 0.0
      %3287 = vmatprep.subr.mxu0 0.0
      %3288 = vmatpush2.msra.mxu0 0.0
      %3289 = vmatprep.subr.mxu0 0.0
      %3290 = vmatpush2.msra.mxu0 0.0
      %3291 = vmatprep.subr.mxu0 0.0
      %3292 = vmatpush2.msra.mxu0 0.0
      %3293 = vmatprep.subr.mxu0 0.0
      %3294 = vmatpush2.msra.mxu0 0.0
      %3295 = vmatprep.subr.mxu0 0.0
      %3296 = vmatpush2.msra.mxu0 0.0
      %3297 = vmatprep.subr.mxu0 0.0
      %3298 = vmatpush2.msra.mxu0 0.0
      %3299 = vmatprep.subr.mxu0 0.0
      %3300 = vmatpush2.msra.mxu0 0.0
      %3301 = vmatprep.subr.mxu0 0.0
      %3302 = vmatpush2.msra.mxu0 0.0
      %3303 = vmatprep.subr.mxu0 0.0
      %3304 = vmatpush2.msra.mxu0 0.0
      %3305 = vmatprep.mubr.f32.mxu0 0.0
      %v3306 = vand.u32 %v2951, 4294901760
      %3307 = vmatmul.mubr.f32.gmra.mxu0 %v3306
      %v3308 = vpop.f32.mrf.mxu0
      %v3309 = vadd.f32 %v3073, %v3308
      %v3310 = vpop.f32.mrf.mxu0
      %3311 = vmatprep.mubr.f32.mxu0 0.0
      %v3312 = vand.u32 %v2954, 4294901760
      %3313 = vmatmul.mubr.f32.gmra.mxu0 %v3312
      %v3314 = vpop.f32.mrf.mxu0
      %v3315 = vadd.f32 %v3083, %v3314
      %v3316 = vpop.f32.mrf.mxu0
      %3317 = vmatprep.mubr.f32.mxu0 0.0
      %v3318 = vand.u32 %v2957, 4294901760
      %3319 = vmatmul.mubr.f32.gmra.mxu0 %v3318
      %v3320 = vpop.f32.mrf.mxu0
      %v3321 = vadd.f32 %v3093, %v3320
      %v3322 = vpop.f32.mrf.mxu0
      %3323 = vmatprep.mubr.f32.mxu0 0.0
      %v3324 = vand.u32 %v2960, 4294901760
      %3325 = vmatmul.mubr.f32.gmra.mxu0 %v3324
      %v3326 = vpop.f32.mrf.mxu0
      %v3327 = vadd.f32 %v3103, %v3326
      %v3328 = vpop.f32.mrf.mxu0
      %3329 = vmatprep.mubr.f32.mxu0 0.0
      %v3330 = vand.u32 %v2963, 4294901760
      %3331 = vmatmul.mubr.f32.gmra.mxu0 %v3330
      %v3332 = vpop.f32.mrf.mxu0
      %v3333 = vadd.f32 %v3113, %v3332
      %v3334 = vpop.f32.mrf.mxu0
      %3335 = vmatprep.mubr.f32.mxu0 0.0
      %v3336 = vand.u32 %v2966, 4294901760
      %3337 = vmatmul.mubr.f32.gmra.mxu0 %v3336
      %v3338 = vpop.f32.mrf.mxu0
      %v3339 = vadd.f32 %v3123, %v3338
      %v3340 = vpop.f32.mrf.mxu0
      %3341 = vmatprep.mubr.f32.mxu0 0.0
      %v3342 = vand.u32 %v2969, 4294901760
      %3343 = vmatmul.mubr.f32.gmra.mxu0 %v3342
      %v3344 = vpop.f32.mrf.mxu0
      %v3345 = vadd.f32 %v3133, %v3344
      %v3346 = vpop.f32.mrf.mxu0
      %3347 = vmatprep.mubr.f32.mxu0 0.0
      %v3348 = vand.u32 %v2972, 4294901760
      %3349 = vmatmul.mubr.f32.gmra.mxu0 %v3348
      %v3350 = vpop.f32.mrf.mxu0
      %v3351 = vadd.f32 %v3143, %v3350
      %v3352 = vpop.f32.mrf.mxu0
      %3353 = vmatprep.mubr.f32.mxu0 0.0
      %v3354 = vand.u32 %v2975, 4294901760
      %3355 = vmatmul.mubr.f32.gmra.mxu0 %v3354
      %v3356 = vpop.f32.mrf.mxu0
      %v3357 = vadd.f32 %v3153, %v3356
      %v3358 = vpop.f32.mrf.mxu0
      %3359 = vmatprep.mubr.f32.mxu0 0.0
      %v3360 = vand.u32 %v2978, 4294901760
      %3361 = vmatmul.mubr.f32.gmra.mxu0 %v3360
      %v3362 = vpop.f32.mrf.mxu0
      %v3363 = vadd.f32 %v3163, %v3362
      %v3364 = vpop.f32.mrf.mxu0
      %3365 = vmatprep.mubr.f32.mxu0 0.0
      %v3366 = vand.u32 %v2981, 4294901760
      %3367 = vmatmul.mubr.f32.gmra.mxu0 %v3366
      %v3368 = vpop.f32.mrf.mxu0
      %v3369 = vadd.f32 %v3173, %v3368
      %v3370 = vpop.f32.mrf.mxu0
      %3371 = vmatprep.mubr.f32.mxu0 0.0
      %v3372 = vand.u32 %v2984, 4294901760
      %3373 = vmatmul.mubr.f32.gmra.mxu0 %v3372
      %v3374 = vpop.f32.mrf.mxu0
      %v3375 = vadd.f32 %v3183, %v3374
      %v3376 = vpop.f32.mrf.mxu0
      %3377 = vmatprep.mubr.f32.mxu0 0.0
      %v3378 = vand.u32 %v2987, 4294901760
      %3379 = vmatmul.mubr.f32.gmra.mxu0 %v3378
      %v3380 = vpop.f32.mrf.mxu0
      %v3381 = vadd.f32 %v3193, %v3380
      %v3382 = vpop.f32.mrf.mxu0
      %3383 = vmatprep.mubr.f32.mxu0 0.0
      %v3384 = vand.u32 %v2990, 4294901760
      %3385 = vmatmul.mubr.f32.gmra.mxu0 %v3384
      %v3386 = vpop.f32.mrf.mxu0
      %v3387 = vadd.f32 %v3203, %v3386
      %v3388 = vpop.f32.mrf.mxu0
      %3389 = vmatprep.mubr.f32.mxu0 0.0
      %v3390 = vand.u32 %v2993, 4294901760
      %3391 = vmatmul.mubr.f32.gmra.mxu0 %v3390
      %v3392 = vpop.f32.mrf.mxu0
      %v3393 = vadd.f32 %v3213, %v3392
      %v3394 = vpop.f32.mrf.mxu0
      %3395 = vmatprep.mubr.f32.mxu0 0.0
      %v3396 = vand.u32 %v2996, 4294901760
      %3397 = vmatmul.mubr.f32.gmra.mxu0 %v3396
      %v3398 = vpop.f32.mrf.mxu0
      %v3399 = vadd.f32 %v3223, %v3398
      %v3400 = vpop.f32.mrf.mxu0
      %3401 = vdwg.mxu0
      %3402 = vmatprep.subr.mxu0 0.0
      %3403 = vmatpush1.msra.mxu0 0.0
      %3404 = vmatprep.subr.mxu0 0.0
      %3405 = vmatpush1.msra.mxu0 0.0
      %3406 = vmatprep.subr.mxu0 0.0
      %3407 = vmatpush1.msra.mxu0 0.0
      %3408 = vmatprep.subr.mxu0 0.0
      %3409 = vmatpush1.msra.mxu0 0.0
      %3410 = vmatprep.subr.mxu0 0.0
      %3411 = vmatpush1.msra.mxu0 0.0
      %3412 = vmatprep.subr.mxu0 0.0
      %3413 = vmatpush1.msra.mxu0 0.0
      %3414 = vmatprep.subr.mxu0 0.0
      %3415 = vmatpush1.msra.mxu0 0.0
      %3416 = vmatprep.subr.mxu0 0.0
      %3417 = vmatpush1.msra.mxu0 0.0
      %3418 = vmatprep.subr.mxu0 0.0
      %3419 = vmatpush1.msra.mxu0 0.0
      %3420 = vmatprep.subr.mxu0 0.0
      %3421 = vmatpush1.msra.mxu0 0.0
      %3422 = vmatprep.subr.mxu0 0.0
      %3423 = vmatpush1.msra.mxu0 0.0
      %3424 = vmatprep.subr.mxu0 0.0
      %3425 = vmatpush1.msra.mxu0 0.0
      %3426 = vmatprep.subr.mxu0 0.0
      %3427 = vmatpush1.msra.mxu0 0.0
      %3428 = vmatprep.subr.mxu0 0.0
      %v3429 = vand.u32 %v340, 4294901760
      %v3430 = vsub.f32 %v340, %v3429
      %3431 = vmatpush1.msra.mxu0 %v3430
      %3432 = vmatprep.subr.mxu0 0.0
      %v3433 = vand.u32 %v171, 4294901760
      %v3434 = vsub.f32 %v171, %v3433
      %3435 = vmatpush1.msra.mxu0 %v3434
      %3436 = vmatprep.subr.mxu0 0.0
      %v3437 = vand.u32 %v170, 4294901760
      %v3438 = vsub.f32 %v170, %v3437
      %3439 = vmatpush1.msra.mxu0 %v3438
      %3440 = vmatprep.subr.mxu0 0.0
      %3441 = vmatpush2.msra.mxu0 0.0
      %3442 = vmatprep.subr.mxu0 0.0
      %3443 = vmatpush2.msra.mxu0 0.0
      %3444 = vmatprep.subr.mxu0 0.0
      %3445 = vmatpush2.msra.mxu0 0.0
      %3446 = vmatprep.subr.mxu0 0.0
      %3447 = vmatpush2.msra.mxu0 0.0
      %3448 = vmatprep.subr.mxu0 0.0
      %3449 = vmatpush2.msra.mxu0 0.0
      %3450 = vmatprep.subr.mxu0 0.0
      %3451 = vmatpush2.msra.mxu0 0.0
      %3452 = vmatprep.subr.mxu0 0.0
      %3453 = vmatpush2.msra.mxu0 0.0
      %3454 = vmatprep.subr.mxu0 0.0
      %3455 = vmatpush2.msra.mxu0 0.0
      %3456 = vmatprep.subr.mxu0 0.0
      %3457 = vmatpush2.msra.mxu0 0.0
      %3458 = vmatprep.subr.mxu0 0.0
      %3459 = vmatpush2.msra.mxu0 0.0
      %3460 = vmatprep.subr.mxu0 0.0
      %3461 = vmatpush2.msra.mxu0 0.0
      %3462 = vmatprep.subr.mxu0 0.0
      %3463 = vmatpush2.msra.mxu0 0.0
      %3464 = vmatprep.subr.mxu0 0.0
      %3465 = vmatpush2.msra.mxu0 0.0
      %3466 = vmatprep.subr.mxu0 0.0
      %3467 = vmatpush2.msra.mxu0 0.0
      %3468 = vmatprep.subr.mxu0 0.0
      %3469 = vmatpush2.msra.mxu0 0.0
      %3470 = vmatprep.subr.mxu0 0.0
      %3471 = vmatpush2.msra.mxu0 0.0
      %3472 = vmatprep.mubr.f32.mxu0 0.0
      %v3473 = vand.u32 %v2951, 4294901760
      %v3474 = vsub.f32 %v2951, %v3473
      %3475 = vmatmul.mubr.f32.gmra.mxu0 %v3474
      %v3476 = vpop.f32.mrf.mxu0
      %v3477 = vadd.f32 %v3309, %v3476
      %v3478 = vpop.f32.mrf.mxu0
      %3479 = vmatprep.mubr.f32.mxu0 0.0
      %v3480 = vand.u32 %v2954, 4294901760
      %v3481 = vsub.f32 %v2954, %v3480
      %3482 = vmatmul.mubr.f32.gmra.mxu0 %v3481
      %v3483 = vpop.f32.mrf.mxu0
      %v3484 = vadd.f32 %v3315, %v3483
      %v3485 = vpop.f32.mrf.mxu0
      %3486 = vmatprep.mubr.f32.mxu0 0.0
      %v3487 = vand.u32 %v2957, 4294901760
      %v3488 = vsub.f32 %v2957, %v3487
      %3489 = vmatmul.mubr.f32.gmra.mxu0 %v3488
      %v3490 = vpop.f32.mrf.mxu0
      %v3491 = vadd.f32 %v3321, %v3490
      %v3492 = vpop.f32.mrf.mxu0
      %3493 = vmatprep.mubr.f32.mxu0 0.0
      %v3494 = vand.u32 %v2960, 4294901760
      %v3495 = vsub.f32 %v2960, %v3494
      %3496 = vmatmul.mubr.f32.gmra.mxu0 %v3495
      %v3497 = vpop.f32.mrf.mxu0
      %v3498 = vadd.f32 %v3327, %v3497
      %v3499 = vpop.f32.mrf.mxu0
      %3500 = vmatprep.mubr.f32.mxu0 0.0
      %v3501 = vand.u32 %v2963, 4294901760
      %v3502 = vsub.f32 %v2963, %v3501
      %3503 = vmatmul.mubr.f32.gmra.mxu0 %v3502
      %v3504 = vpop.f32.mrf.mxu0
      %v3505 = vadd.f32 %v3333, %v3504
      %v3506 = vpop.f32.mrf.mxu0
      %3507 = vmatprep.mubr.f32.mxu0 0.0
      %v3508 = vand.u32 %v2966, 4294901760
      %v3509 = vsub.f32 %v2966, %v3508
      %3510 = vmatmul.mubr.f32.gmra.mxu0 %v3509
      %v3511 = vpop.f32.mrf.mxu0
      %v3512 = vadd.f32 %v3339, %v3511
      %v3513 = vpop.f32.mrf.mxu0
      %3514 = vmatprep.mubr.f32.mxu0 0.0
      %v3515 = vand.u32 %v2969, 4294901760
      %v3516 = vsub.f32 %v2969, %v3515
      %3517 = vmatmul.mubr.f32.gmra.mxu0 %v3516
      %v3518 = vpop.f32.mrf.mxu0
      %v3519 = vadd.f32 %v3345, %v3518
      %v3520 = vpop.f32.mrf.mxu0
      %3521 = vmatprep.mubr.f32.mxu0 0.0
      %v3522 = vand.u32 %v2972, 4294901760
      %v3523 = vsub.f32 %v2972, %v3522
      %3524 = vmatmul.mubr.f32.gmra.mxu0 %v3523
      %v3525 = vpop.f32.mrf.mxu0
      %v3526 = vadd.f32 %v3351, %v3525
      %v3527 = vpop.f32.mrf.mxu0
      %3528 = vmatprep.mubr.f32.mxu0 0.0
      %v3529 = vand.u32 %v2975, 4294901760
      %v3530 = vsub.f32 %v2975, %v3529
      %3531 = vmatmul.mubr.f32.gmra.mxu0 %v3530
      %v3532 = vpop.f32.mrf.mxu0
      %v3533 = vadd.f32 %v3357, %v3532
      %v3534 = vpop.f32.mrf.mxu0
      %3535 = vmatprep.mubr.f32.mxu0 0.0
      %v3536 = vand.u32 %v2978, 4294901760
      %v3537 = vsub.f32 %v2978, %v3536
      %3538 = vmatmul.mubr.f32.gmra.mxu0 %v3537
      %v3539 = vpop.f32.mrf.mxu0
      %v3540 = vadd.f32 %v3363, %v3539
      %v3541 = vpop.f32.mrf.mxu0
      %3542 = vmatprep.mubr.f32.mxu0 0.0
      %v3543 = vand.u32 %v2981, 4294901760
      %v3544 = vsub.f32 %v2981, %v3543
      %3545 = vmatmul.mubr.f32.gmra.mxu0 %v3544
      %v3546 = vpop.f32.mrf.mxu0
      %v3547 = vadd.f32 %v3369, %v3546
      %v3548 = vpop.f32.mrf.mxu0
      %3549 = vmatprep.mubr.f32.mxu0 0.0
      %v3550 = vand.u32 %v2984, 4294901760
      %v3551 = vsub.f32 %v2984, %v3550
      %3552 = vmatmul.mubr.f32.gmra.mxu0 %v3551
      %v3553 = vpop.f32.mrf.mxu0
      %v3554 = vadd.f32 %v3375, %v3553
      %v3555 = vpop.f32.mrf.mxu0
      %3556 = vmatprep.mubr.f32.mxu0 0.0
      %v3557 = vand.u32 %v2987, 4294901760
      %v3558 = vsub.f32 %v2987, %v3557
      %3559 = vmatmul.mubr.f32.gmra.mxu0 %v3558
      %v3560 = vpop.f32.mrf.mxu0
      %v3561 = vadd.f32 %v3381, %v3560
      %v3562 = vpop.f32.mrf.mxu0
      %3563 = vmatprep.mubr.f32.mxu0 0.0
      %v3564 = vand.u32 %v2990, 4294901760
      %v3565 = vsub.f32 %v2990, %v3564
      %3566 = vmatmul.mubr.f32.gmra.mxu0 %v3565
      %v3567 = vpop.f32.mrf.mxu0
      %v3568 = vadd.f32 %v3387, %v3567
      %v3569 = vpop.f32.mrf.mxu0
      %3570 = vmatprep.mubr.f32.mxu0 0.0
      %v3571 = vand.u32 %v2993, 4294901760
      %v3572 = vsub.f32 %v2993, %v3571
      %3573 = vmatmul.mubr.f32.gmra.mxu0 %v3572
      %v3574 = vpop.f32.mrf.mxu0
      %v3575 = vadd.f32 %v3393, %v3574
      %v3576 = vpop.f32.mrf.mxu0
      %3577 = vmatprep.mubr.f32.mxu0 0.0
      %v3578 = vand.u32 %v2996, 4294901760
      %v3579 = vsub.f32 %v2996, %v3578
      %3580 = vmatmul.mubr.f32.gmra.mxu0 %v3579
      %v3581 = vpop.f32.mrf.mxu0
      %v3582 = vadd.f32 %v3399, %v3581
      %v3583 = vpop.f32.mrf.mxu0
      %3584 = vdwg.mxu0
      %3585 = vmatprep.subr.mxu0 0.0
      %3586 = vmatpush1.msra.mxu0 0.0
      %3587 = vmatprep.subr.mxu0 0.0
      %3588 = vmatpush1.msra.mxu0 0.0
      %3589 = vmatprep.subr.mxu0 0.0
      %3590 = vmatpush1.msra.mxu0 0.0
      %3591 = vmatprep.subr.mxu0 0.0
      %3592 = vmatpush1.msra.mxu0 0.0
      %3593 = vmatprep.subr.mxu0 0.0
      %3594 = vmatpush1.msra.mxu0 0.0
      %3595 = vmatprep.subr.mxu0 0.0
      %3596 = vmatpush1.msra.mxu0 0.0
      %3597 = vmatprep.subr.mxu0 0.0
      %3598 = vmatpush1.msra.mxu0 0.0
      %3599 = vmatprep.subr.mxu0 0.0
      %3600 = vmatpush1.msra.mxu0 0.0
      %3601 = vmatprep.subr.mxu0 0.0
      %3602 = vmatpush1.msra.mxu0 0.0
      %3603 = vmatprep.subr.mxu0 0.0
      %3604 = vmatpush1.msra.mxu0 0.0
      %3605 = vmatprep.subr.mxu0 0.0
      %3606 = vmatpush1.msra.mxu0 0.0
      %3607 = vmatprep.subr.mxu0 0.0
      %3608 = vmatpush1.msra.mxu0 0.0
      %3609 = vmatprep.subr.mxu0 0.0
      %3610 = vmatpush1.msra.mxu0 0.0
      %3611 = vmatprep.subr.mxu0 0.0
      %v3612 = vand.u32 %v340, 4294901760
      %3613 = vmatpush1.msra.mxu0 %v3612
      %3614 = vmatprep.subr.mxu0 0.0
      %v3615 = vand.u32 %v171, 4294901760
      %3616 = vmatpush1.msra.mxu0 %v3615
      %3617 = vmatprep.subr.mxu0 0.0
      %v3618 = vand.u32 %v170, 4294901760
      %3619 = vmatpush1.msra.mxu0 %v3618
      %3620 = vmatprep.subr.mxu0 0.0
      %3621 = vmatpush2.msra.mxu0 0.0
      %3622 = vmatprep.subr.mxu0 0.0
      %3623 = vmatpush2.msra.mxu0 0.0
      %3624 = vmatprep.subr.mxu0 0.0
      %3625 = vmatpush2.msra.mxu0 0.0
      %3626 = vmatprep.subr.mxu0 0.0
      %3627 = vmatpush2.msra.mxu0 0.0
      %3628 = vmatprep.subr.mxu0 0.0
      %3629 = vmatpush2.msra.mxu0 0.0
      %3630 = vmatprep.subr.mxu0 0.0
      %3631 = vmatpush2.msra.mxu0 0.0
      %3632 = vmatprep.subr.mxu0 0.0
      %3633 = vmatpush2.msra.mxu0 0.0
      %3634 = vmatprep.subr.mxu0 0.0
      %3635 = vmatpush2.msra.mxu0 0.0
      %3636 = vmatprep.subr.mxu0 0.0
      %3637 = vmatpush2.msra.mxu0 0.0
      %3638 = vmatprep.subr.mxu0 0.0
      %3639 = vmatpush2.msra.mxu0 0.0
      %3640 = vmatprep.subr.mxu0 0.0
      %3641 = vmatpush2.msra.mxu0 0.0
      %3642 = vmatprep.subr.mxu0 0.0
      %3643 = vmatpush2.msra.mxu0 0.0
      %3644 = vmatprep.subr.mxu0 0.0
      %3645 = vmatpush2.msra.mxu0 0.0
      %3646 = vmatprep.subr.mxu0 0.0
      %3647 = vmatpush2.msra.mxu0 0.0
      %3648 = vmatprep.subr.mxu0 0.0
      %3649 = vmatpush2.msra.mxu0 0.0
      %3650 = vmatprep.subr.mxu0 0.0
      %3651 = vmatpush2.msra.mxu0 0.0
      %3652 = vmatprep.mubr.f32.mxu0 0.0
      %v3653 = vand.u32 %v2951, 4294901760
      %v3654 = vsub.f32 %v2951, %v3653
      %v3655 = vand.u32 %v3654, 4294901760
      %3656 = vmatmul.mubr.f32.gmra.mxu0 %v3655
      %v3657 = vpop.f32.mrf.mxu0
      %v3658 = vadd.f32 %v3477, %v3657
      %v3659 = vpop.f32.mrf.mxu0
      %3660 = vmatprep.mubr.f32.mxu0 0.0
      %v3661 = vand.u32 %v2954, 4294901760
      %v3662 = vsub.f32 %v2954, %v3661
      %v3663 = vand.u32 %v3662, 4294901760
      %3664 = vmatmul.mubr.f32.gmra.mxu0 %v3663
      %v3665 = vpop.f32.mrf.mxu0
      %v3666 = vadd.f32 %v3484, %v3665
      %v3667 = vpop.f32.mrf.mxu0
      %3668 = vmatprep.mubr.f32.mxu0 0.0
      %v3669 = vand.u32 %v2957, 4294901760
      %v3670 = vsub.f32 %v2957, %v3669
      %v3671 = vand.u32 %v3670, 4294901760
      %3672 = vmatmul.mubr.f32.gmra.mxu0 %v3671
      %v3673 = vpop.f32.mrf.mxu0
      %v3674 = vadd.f32 %v3491, %v3673
      %v3675 = vpop.f32.mrf.mxu0
      %3676 = vmatprep.mubr.f32.mxu0 0.0
      %v3677 = vand.u32 %v2960, 4294901760
      %v3678 = vsub.f32 %v2960, %v3677
      %v3679 = vand.u32 %v3678, 4294901760
      %3680 = vmatmul.mubr.f32.gmra.mxu0 %v3679
      %v3681 = vpop.f32.mrf.mxu0
      %v3682 = vadd.f32 %v3498, %v3681
      %v3683 = vpop.f32.mrf.mxu0
      %3684 = vmatprep.mubr.f32.mxu0 0.0
      %v3685 = vand.u32 %v2963, 4294901760
      %v3686 = vsub.f32 %v2963, %v3685
      %v3687 = vand.u32 %v3686, 4294901760
      %3688 = vmatmul.mubr.f32.gmra.mxu0 %v3687
      %v3689 = vpop.f32.mrf.mxu0
      %v3690 = vadd.f32 %v3505, %v3689
      %v3691 = vpop.f32.mrf.mxu0
      %3692 = vmatprep.mubr.f32.mxu0 0.0
      %v3693 = vand.u32 %v2966, 4294901760
      %v3694 = vsub.f32 %v2966, %v3693
      %v3695 = vand.u32 %v3694, 4294901760
      %3696 = vmatmul.mubr.f32.gmra.mxu0 %v3695
      %v3697 = vpop.f32.mrf.mxu0
      %v3698 = vadd.f32 %v3512, %v3697
      %v3699 = vpop.f32.mrf.mxu0
      %3700 = vmatprep.mubr.f32.mxu0 0.0
      %v3701 = vand.u32 %v2969, 4294901760
      %v3702 = vsub.f32 %v2969, %v3701
      %v3703 = vand.u32 %v3702, 4294901760
      %3704 = vmatmul.mubr.f32.gmra.mxu0 %v3703
      %v3705 = vpop.f32.mrf.mxu0
      %v3706 = vadd.f32 %v3519, %v3705
      %v3707 = vpop.f32.mrf.mxu0
      %3708 = vmatprep.mubr.f32.mxu0 0.0
      %v3709 = vand.u32 %v2972, 4294901760
      %v3710 = vsub.f32 %v2972, %v3709
      %v3711 = vand.u32 %v3710, 4294901760
      %3712 = vmatmul.mubr.f32.gmra.mxu0 %v3711
      %v3713 = vpop.f32.mrf.mxu0
      %v3714 = vadd.f32 %v3526, %v3713
      %v3715 = vpop.f32.mrf.mxu0
      %3716 = vmatprep.mubr.f32.mxu0 0.0
      %v3717 = vand.u32 %v2975, 4294901760
      %v3718 = vsub.f32 %v2975, %v3717
      %v3719 = vand.u32 %v3718, 4294901760
      %3720 = vmatmul.mubr.f32.gmra.mxu0 %v3719
      %v3721 = vpop.f32.mrf.mxu0
      %v3722 = vadd.f32 %v3533, %v3721
      %v3723 = vpop.f32.mrf.mxu0
      %3724 = vmatprep.mubr.f32.mxu0 0.0
      %v3725 = vand.u32 %v2978, 4294901760
      %v3726 = vsub.f32 %v2978, %v3725
      %v3727 = vand.u32 %v3726, 4294901760
      %3728 = vmatmul.mubr.f32.gmra.mxu0 %v3727
      %v3729 = vpop.f32.mrf.mxu0
      %v3730 = vadd.f32 %v3540, %v3729
      %v3731 = vpop.f32.mrf.mxu0
      %3732 = vmatprep.mubr.f32.mxu0 0.0
      %v3733 = vand.u32 %v2981, 4294901760
      %v3734 = vsub.f32 %v2981, %v3733
      %v3735 = vand.u32 %v3734, 4294901760
      %3736 = vmatmul.mubr.f32.gmra.mxu0 %v3735
      %v3737 = vpop.f32.mrf.mxu0
      %v3738 = vadd.f32 %v3547, %v3737
      %v3739 = vpop.f32.mrf.mxu0
      %3740 = vmatprep.mubr.f32.mxu0 0.0
      %v3741 = vand.u32 %v2984, 4294901760
      %v3742 = vsub.f32 %v2984, %v3741
      %v3743 = vand.u32 %v3742, 4294901760
      %3744 = vmatmul.mubr.f32.gmra.mxu0 %v3743
      %v3745 = vpop.f32.mrf.mxu0
      %v3746 = vadd.f32 %v3554, %v3745
      %v3747 = vpop.f32.mrf.mxu0
      %3748 = vmatprep.mubr.f32.mxu0 0.0
      %v3749 = vand.u32 %v2987, 4294901760
      %v3750 = vsub.f32 %v2987, %v3749
      %v3751 = vand.u32 %v3750, 4294901760
      %3752 = vmatmul.mubr.f32.gmra.mxu0 %v3751
      %v3753 = vpop.f32.mrf.mxu0
      %v3754 = vadd.f32 %v3561, %v3753
      %v3755 = vpop.f32.mrf.mxu0
      %3756 = vmatprep.mubr.f32.mxu0 0.0
      %v3757 = vand.u32 %v2990, 4294901760
      %v3758 = vsub.f32 %v2990, %v3757
      %v3759 = vand.u32 %v3758, 4294901760
      %3760 = vmatmul.mubr.f32.gmra.mxu0 %v3759
      %v3761 = vpop.f32.mrf.mxu0
      %v3762 = vadd.f32 %v3568, %v3761
      %v3763 = vpop.f32.mrf.mxu0
      %3764 = vmatprep.mubr.f32.mxu0 0.0
      %v3765 = vand.u32 %v2993, 4294901760
      %v3766 = vsub.f32 %v2993, %v3765
      %v3767 = vand.u32 %v3766, 4294901760
      %3768 = vmatmul.mubr.f32.gmra.mxu0 %v3767
      %v3769 = vpop.f32.mrf.mxu0
      %v3770 = vadd.f32 %v3575, %v3769
      %v3771 = vpop.f32.mrf.mxu0
      %3772 = vmatprep.mubr.f32.mxu0 0.0
      %v3773 = vand.u32 %v2996, 4294901760
      %v3774 = vsub.f32 %v2996, %v3773
      %v3775 = vand.u32 %v3774, 4294901760
      %3776 = vmatmul.mubr.f32.gmra.mxu0 %v3775
      %v3777 = vpop.f32.mrf.mxu0
      %v3778 = vadd.f32 %v3582, %v3777
      %v3779 = vpop.f32.mrf.mxu0
      %3780 = vdwg.mxu0
      %3781 = vmatprep.subr.mxu0 0.0
      %3782 = vmatpush1.msra.mxu0 0.0
      %3783 = vmatprep.subr.mxu0 0.0
      %3784 = vmatpush1.msra.mxu0 0.0
      %3785 = vmatprep.subr.mxu0 0.0
      %3786 = vmatpush1.msra.mxu0 0.0
      %3787 = vmatprep.subr.mxu0 0.0
      %3788 = vmatpush1.msra.mxu0 0.0
      %3789 = vmatprep.subr.mxu0 0.0
      %3790 = vmatpush1.msra.mxu0 0.0
      %3791 = vmatprep.subr.mxu0 0.0
      %3792 = vmatpush1.msra.mxu0 0.0
      %3793 = vmatprep.subr.mxu0 0.0
      %3794 = vmatpush1.msra.mxu0 0.0
      %3795 = vmatprep.subr.mxu0 0.0
      %3796 = vmatpush1.msra.mxu0 0.0
      %3797 = vmatprep.subr.mxu0 0.0
      %3798 = vmatpush1.msra.mxu0 0.0
      %3799 = vmatprep.subr.mxu0 0.0
      %3800 = vmatpush1.msra.mxu0 0.0
      %3801 = vmatprep.subr.mxu0 0.0
      %3802 = vmatpush1.msra.mxu0 0.0
      %3803 = vmatprep.subr.mxu0 0.0
      %3804 = vmatpush1.msra.mxu0 0.0
      %3805 = vmatprep.subr.mxu0 0.0
      %3806 = vmatpush1.msra.mxu0 0.0
      %3807 = vmatprep.subr.mxu0 0.0
      %v3808 = vand.u32 %v340, 4294901760
      %v3809 = vsub.f32 %v340, %v3808
      %v3810 = vand.u32 %v3809, 4294901760
      %3811 = vmatpush1.msra.mxu0 %v3810
      %3812 = vmatprep.subr.mxu0 0.0
      %v3813 = vand.u32 %v171, 4294901760
      %v3814 = vsub.f32 %v171, %v3813
      %v3815 = vand.u32 %v3814, 4294901760
      %3816 = vmatpush1.msra.mxu0 %v3815
      %3817 = vmatprep.subr.mxu0 0.0
      %v3818 = vand.u32 %v170, 4294901760
      %v3819 = vsub.f32 %v170, %v3818
      %v3820 = vand.u32 %v3819, 4294901760
      %3821 = vmatpush1.msra.mxu0 %v3820
      %3822 = vmatprep.subr.mxu0 0.0
      %3823 = vmatpush2.msra.mxu0 0.0
      %3824 = vmatprep.subr.mxu0 0.0
      %3825 = vmatpush2.msra.mxu0 0.0
      %3826 = vmatprep.subr.mxu0 0.0
      %3827 = vmatpush2.msra.mxu0 0.0
      %3828 = vmatprep.subr.mxu0 0.0
      %3829 = vmatpush2.msra.mxu0 0.0
      %3830 = vmatprep.subr.mxu0 0.0
      %3831 = vmatpush2.msra.mxu0 0.0
      %3832 = vmatprep.subr.mxu0 0.0
      %3833 = vmatpush2.msra.mxu0 0.0
      %3834 = vmatprep.subr.mxu0 0.0
      %3835 = vmatpush2.msra.mxu0 0.0
      %3836 = vmatprep.subr.mxu0 0.0
      %3837 = vmatpush2.msra.mxu0 0.0
      %3838 = vmatprep.subr.mxu0 0.0
      %3839 = vmatpush2.msra.mxu0 0.0
      %3840 = vmatprep.subr.mxu0 0.0
      %3841 = vmatpush2.msra.mxu0 0.0
      %3842 = vmatprep.subr.mxu0 0.0
      %3843 = vmatpush2.msra.mxu0 0.0
      %3844 = vmatprep.subr.mxu0 0.0
      %3845 = vmatpush2.msra.mxu0 0.0
      %3846 = vmatprep.subr.mxu0 0.0
      %3847 = vmatpush2.msra.mxu0 0.0
      %3848 = vmatprep.subr.mxu0 0.0
      %3849 = vmatpush2.msra.mxu0 0.0
      %3850 = vmatprep.subr.mxu0 0.0
      %3851 = vmatpush2.msra.mxu0 0.0
      %3852 = vmatprep.subr.mxu0 0.0
      %3853 = vmatpush2.msra.mxu0 0.0
      %3854 = vmatprep.mubr.f32.mxu0 0.0
      %v3855 = vand.u32 %v2951, 4294901760
      %3856 = vmatmul.mubr.f32.gmra.mxu0 %v3855
      %v3857 = vpop.f32.mrf.mxu0
      %v3858 = vadd.f32 %v3658, %v3857
      %v3859 = vpop.f32.mrf.mxu0
      %3860 = vmatprep.mubr.f32.mxu0 0.0
      %v3861 = vand.u32 %v2954, 4294901760
      %3862 = vmatmul.mubr.f32.gmra.mxu0 %v3861
      %v3863 = vpop.f32.mrf.mxu0
      %v3864 = vadd.f32 %v3666, %v3863
      %v3865 = vpop.f32.mrf.mxu0
      %3866 = vmatprep.mubr.f32.mxu0 0.0
      %v3867 = vand.u32 %v2957, 4294901760
      %3868 = vmatmul.mubr.f32.gmra.mxu0 %v3867
      %v3869 = vpop.f32.mrf.mxu0
      %v3870 = vadd.f32 %v3674, %v3869
      %v3871 = vpop.f32.mrf.mxu0
      %3872 = vmatprep.mubr.f32.mxu0 0.0
      %v3873 = vand.u32 %v2960, 4294901760
      %3874 = vmatmul.mubr.f32.gmra.mxu0 %v3873
      %v3875 = vpop.f32.mrf.mxu0
      %v3876 = vadd.f32 %v3682, %v3875
      %v3877 = vpop.f32.mrf.mxu0
      %3878 = vmatprep.mubr.f32.mxu0 0.0
      %v3879 = vand.u32 %v2963, 4294901760
      %3880 = vmatmul.mubr.f32.gmra.mxu0 %v3879
      %v3881 = vpop.f32.mrf.mxu0
      %v3882 = vadd.f32 %v3690, %v3881
      %v3883 = vpop.f32.mrf.mxu0
      %3884 = vmatprep.mubr.f32.mxu0 0.0
      %v3885 = vand.u32 %v2966, 4294901760
      %3886 = vmatmul.mubr.f32.gmra.mxu0 %v3885
      %v3887 = vpop.f32.mrf.mxu0
      %v3888 = vadd.f32 %v3698, %v3887
      %v3889 = vpop.f32.mrf.mxu0
      %3890 = vmatprep.mubr.f32.mxu0 0.0
      %v3891 = vand.u32 %v2969, 4294901760
      %3892 = vmatmul.mubr.f32.gmra.mxu0 %v3891
      %v3893 = vpop.f32.mrf.mxu0
      %v3894 = vadd.f32 %v3706, %v3893
      %v3895 = vpop.f32.mrf.mxu0
      %3896 = vmatprep.mubr.f32.mxu0 0.0
      %v3897 = vand.u32 %v2972, 4294901760
      %3898 = vmatmul.mubr.f32.gmra.mxu0 %v3897
      %v3899 = vpop.f32.mrf.mxu0
      %v3900 = vadd.f32 %v3714, %v3899
      %v3901 = vpop.f32.mrf.mxu0
      %3902 = vmatprep.mubr.f32.mxu0 0.0
      %v3903 = vand.u32 %v2975, 4294901760
      %3904 = vmatmul.mubr.f32.gmra.mxu0 %v3903
      %v3905 = vpop.f32.mrf.mxu0
      %v3906 = vadd.f32 %v3722, %v3905
      %v3907 = vpop.f32.mrf.mxu0
      %3908 = vmatprep.mubr.f32.mxu0 0.0
      %v3909 = vand.u32 %v2978, 4294901760
      %3910 = vmatmul.mubr.f32.gmra.mxu0 %v3909
      %v3911 = vpop.f32.mrf.mxu0
      %v3912 = vadd.f32 %v3730, %v3911
      %v3913 = vpop.f32.mrf.mxu0
      %3914 = vmatprep.mubr.f32.mxu0 0.0
      %v3915 = vand.u32 %v2981, 4294901760
      %3916 = vmatmul.mubr.f32.gmra.mxu0 %v3915
      %v3917 = vpop.f32.mrf.mxu0
      %v3918 = vadd.f32 %v3738, %v3917
      %v3919 = vpop.f32.mrf.mxu0
      %3920 = vmatprep.mubr.f32.mxu0 0.0
      %v3921 = vand.u32 %v2984, 4294901760
      %3922 = vmatmul.mubr.f32.gmra.mxu0 %v3921
      %v3923 = vpop.f32.mrf.mxu0
      %v3924 = vadd.f32 %v3746, %v3923
      %v3925 = vpop.f32.mrf.mxu0
      %3926 = vmatprep.mubr.f32.mxu0 0.0
      %v3927 = vand.u32 %v2987, 4294901760
      %3928 = vmatmul.mubr.f32.gmra.mxu0 %v3927
      %v3929 = vpop.f32.mrf.mxu0
      %v3930 = vadd.f32 %v3754, %v3929
      %v3931 = vpop.f32.mrf.mxu0
      %3932 = vmatprep.mubr.f32.mxu0 0.0
      %v3933 = vand.u32 %v2990, 4294901760
      %3934 = vmatmul.mubr.f32.gmra.mxu0 %v3933
      %v3935 = vpop.f32.mrf.mxu0
      %v3936 = vadd.f32 %v3762, %v3935
      %v3937 = vpop.f32.mrf.mxu0
      %3938 = vmatprep.mubr.f32.mxu0 0.0
      %v3939 = vand.u32 %v2993, 4294901760
      %3940 = vmatmul.mubr.f32.gmra.mxu0 %v3939
      %v3941 = vpop.f32.mrf.mxu0
      %v3942 = vadd.f32 %v3770, %v3941
      %v3943 = vpop.f32.mrf.mxu0
      %3944 = vmatprep.mubr.f32.mxu0 0.0
      %v3945 = vand.u32 %v2996, 4294901760
      %3946 = vmatmul.mubr.f32.gmra.mxu0 %v3945
      %v3947 = vpop.f32.mrf.mxu0
      %v3948 = vadd.f32 %v3778, %v3947
      %v3949 = vpop.f32.mrf.mxu0
      %3950 = vdwg.mxu0
      %3951 = vmatprep.subr.mxu0 0.0
      %3952 = vmatpush1.msra.mxu0 0.0
      %3953 = vmatprep.subr.mxu0 0.0
      %3954 = vmatpush1.msra.mxu0 0.0
      %3955 = vmatprep.subr.mxu0 0.0
      %3956 = vmatpush1.msra.mxu0 0.0
      %3957 = vmatprep.subr.mxu0 0.0
      %3958 = vmatpush1.msra.mxu0 0.0
      %3959 = vmatprep.subr.mxu0 0.0
      %3960 = vmatpush1.msra.mxu0 0.0
      %3961 = vmatprep.subr.mxu0 0.0
      %3962 = vmatpush1.msra.mxu0 0.0
      %3963 = vmatprep.subr.mxu0 0.0
      %3964 = vmatpush1.msra.mxu0 0.0
      %3965 = vmatprep.subr.mxu0 0.0
      %3966 = vmatpush1.msra.mxu0 0.0
      %3967 = vmatprep.subr.mxu0 0.0
      %3968 = vmatpush1.msra.mxu0 0.0
      %3969 = vmatprep.subr.mxu0 0.0
      %3970 = vmatpush1.msra.mxu0 0.0
      %3971 = vmatprep.subr.mxu0 0.0
      %3972 = vmatpush1.msra.mxu0 0.0
      %3973 = vmatprep.subr.mxu0 0.0
      %3974 = vmatpush1.msra.mxu0 0.0
      %3975 = vmatprep.subr.mxu0 0.0
      %3976 = vmatpush1.msra.mxu0 0.0
      %3977 = vmatprep.subr.mxu0 0.0
      %v3978 = vand.u32 %v340, 4294901760
      %3979 = vmatpush1.msra.mxu0 %v3978
      %3980 = vmatprep.subr.mxu0 0.0
      %v3981 = vand.u32 %v171, 4294901760
      %3982 = vmatpush1.msra.mxu0 %v3981
      %3983 = vmatprep.subr.mxu0 0.0
      %v3984 = vand.u32 %v170, 4294901760
      %3985 = vmatpush1.msra.mxu0 %v3984
      %3986 = vmatprep.subr.mxu0 0.0
      %3987 = vmatpush2.msra.mxu0 0.0
      %3988 = vmatprep.subr.mxu0 0.0
      %3989 = vmatpush2.msra.mxu0 0.0
      %3990 = vmatprep.subr.mxu0 0.0
      %3991 = vmatpush2.msra.mxu0 0.0
      %3992 = vmatprep.subr.mxu0 0.0
      %3993 = vmatpush2.msra.mxu0 0.0
      %3994 = vmatprep.subr.mxu0 0.0
      %3995 = vmatpush2.msra.mxu0 0.0
      %3996 = vmatprep.subr.mxu0 0.0
      %3997 = vmatpush2.msra.mxu0 0.0
      %3998 = vmatprep.subr.mxu0 0.0
      %3999 = vmatpush2.msra.mxu0 0.0
      %4000 = vmatprep.subr.mxu0 0.0
      %4001 = vmatpush2.msra.mxu0 0.0
      %4002 = vmatprep.subr.mxu0 0.0
      %4003 = vmatpush2.msra.mxu0 0.0
      %4004 = vmatprep.subr.mxu0 0.0
      %4005 = vmatpush2.msra.mxu0 0.0
      %4006 = vmatprep.subr.mxu0 0.0
      %4007 = vmatpush2.msra.mxu0 0.0
      %4008 = vmatprep.subr.mxu0 0.0
      %4009 = vmatpush2.msra.mxu0 0.0
      %4010 = vmatprep.subr.mxu0 0.0
      %4011 = vmatpush2.msra.mxu0 0.0
      %4012 = vmatprep.subr.mxu0 0.0
      %4013 = vmatpush2.msra.mxu0 0.0
      %4014 = vmatprep.subr.mxu0 0.0
      %4015 = vmatpush2.msra.mxu0 0.0
      %4016 = vmatprep.subr.mxu0 0.0
      %4017 = vmatpush2.msra.mxu0 0.0
      %4018 = vmatprep.mubr.f32.mxu0 0.0
      %v4019 = vand.u32 %v2951, 4294901760
      %4020 = vmatmul.mubr.f32.gmra.mxu0 %v4019
      %v4021 = vpop.f32.mrf.mxu0
      %v4022 = vadd.f32 %v3858, %v4021
      %v4023 = vpop.f32.mrf.mxu0
      %4024 = vmatprep.mubr.f32.mxu0 0.0
      %v4025 = vand.u32 %v2954, 4294901760
      %4026 = vmatmul.mubr.f32.gmra.mxu0 %v4025
      %v4027 = vpop.f32.mrf.mxu0
      %v4028 = vadd.f32 %v3864, %v4027
      %v4029 = vpop.f32.mrf.mxu0
      %4030 = vmatprep.mubr.f32.mxu0 0.0
      %v4031 = vand.u32 %v2957, 4294901760
      %4032 = vmatmul.mubr.f32.gmra.mxu0 %v4031
      %v4033 = vpop.f32.mrf.mxu0
      %v4034 = vadd.f32 %v3870, %v4033
      %v4035 = vpop.f32.mrf.mxu0
      %4036 = vmatprep.mubr.f32.mxu0 0.0
      %v4037 = vand.u32 %v2960, 4294901760
      %4038 = vmatmul.mubr.f32.gmra.mxu0 %v4037
      %v4039 = vpop.f32.mrf.mxu0
      %v4040 = vadd.f32 %v3876, %v4039
      %v4041 = vpop.f32.mrf.mxu0
      %4042 = vmatprep.mubr.f32.mxu0 0.0
      %v4043 = vand.u32 %v2963, 4294901760
      %4044 = vmatmul.mubr.f32.gmra.mxu0 %v4043
      %v4045 = vpop.f32.mrf.mxu0
      %v4046 = vadd.f32 %v3882, %v4045
      %v4047 = vpop.f32.mrf.mxu0
      %4048 = vmatprep.mubr.f32.mxu0 0.0
      %v4049 = vand.u32 %v2966, 4294901760
      %4050 = vmatmul.mubr.f32.gmra.mxu0 %v4049
      %v4051 = vpop.f32.mrf.mxu0
      %v4052 = vadd.f32 %v3888, %v4051
      %v4053 = vpop.f32.mrf.mxu0
      %4054 = vmatprep.mubr.f32.mxu0 0.0
      %v4055 = vand.u32 %v2969, 4294901760
      %4056 = vmatmul.mubr.f32.gmra.mxu0 %v4055
      %v4057 = vpop.f32.mrf.mxu0
      %v4058 = vadd.f32 %v3894, %v4057
      %v4059 = vpop.f32.mrf.mxu0
      %4060 = vmatprep.mubr.f32.mxu0 0.0
      %v4061 = vand.u32 %v2972, 4294901760
      %4062 = vmatmul.mubr.f32.gmra.mxu0 %v4061
      %v4063 = vpop.f32.mrf.mxu0
      %v4064 = vadd.f32 %v3900, %v4063
      %v4065 = vpop.f32.mrf.mxu0
      %4066 = vmatprep.mubr.f32.mxu0 0.0
      %v4067 = vand.u32 %v2975, 4294901760
      %4068 = vmatmul.mubr.f32.gmra.mxu0 %v4067
      %v4069 = vpop.f32.mrf.mxu0
      %v4070 = vadd.f32 %v3906, %v4069
      %v4071 = vpop.f32.mrf.mxu0
      %4072 = vmatprep.mubr.f32.mxu0 0.0
      %v4073 = vand.u32 %v2978, 4294901760
      %4074 = vmatmul.mubr.f32.gmra.mxu0 %v4073
      %v4075 = vpop.f32.mrf.mxu0
      %v4076 = vadd.f32 %v3912, %v4075
      %v4077 = vpop.f32.mrf.mxu0
      %4078 = vmatprep.mubr.f32.mxu0 0.0
      %v4079 = vand.u32 %v2981, 4294901760
      %4080 = vmatmul.mubr.f32.gmra.mxu0 %v4079
      %v4081 = vpop.f32.mrf.mxu0
      %v4082 = vadd.f32 %v3918, %v4081
      %v4083 = vpop.f32.mrf.mxu0
      %4084 = vmatprep.mubr.f32.mxu0 0.0
      %v4085 = vand.u32 %v2984, 4294901760
      %4086 = vmatmul.mubr.f32.gmra.mxu0 %v4085
      %v4087 = vpop.f32.mrf.mxu0
      %v4088 = vadd.f32 %v3924, %v4087
      %v4089 = vpop.f32.mrf.mxu0
      %4090 = vmatprep.mubr.f32.mxu0 0.0
      %v4091 = vand.u32 %v2987, 4294901760
      %4092 = vmatmul.mubr.f32.gmra.mxu0 %v4091
      %v4093 = vpop.f32.mrf.mxu0
      %v4094 = vadd.f32 %v3930, %v4093
      %v4095 = vpop.f32.mrf.mxu0
      %4096 = vmatprep.mubr.f32.mxu0 0.0
      %v4097 = vand.u32 %v2990, 4294901760
      %4098 = vmatmul.mubr.f32.gmra.mxu0 %v4097
      %v4099 = vpop.f32.mrf.mxu0
      %v4100 = vadd.f32 %v3936, %v4099
      %v4101 = vpop.f32.mrf.mxu0
      %4102 = vmatprep.mubr.f32.mxu0 0.0
      %v4103 = vand.u32 %v2993, 4294901760
      %4104 = vmatmul.mubr.f32.gmra.mxu0 %v4103
      %v4105 = vpop.f32.mrf.mxu0
      %v4106 = vadd.f32 %v3942, %v4105
      %v4107 = vpop.f32.mrf.mxu0
      %4108 = vmatprep.mubr.f32.mxu0 0.0
      %v4109 = vand.u32 %v2996, 4294901760
      %4110 = vmatmul.mubr.f32.gmra.mxu0 %v4109
      %v4111 = vpop.f32.mrf.mxu0
      %v4112 = vadd.f32 %v3948, %v4111
      %v4113 = vpop.f32.mrf.mxu0
      %4114 = vdwg.mxu0
      %4131 = vrot.lane.b32.xlu0 %v4022, 64
      %v4132 = vpop.permute.xlu0 %4131
      %4133 = vrot.lane.b32.xlu0 %v4028, 64
      %v4134 = vpop.permute.xlu0 %4133
      %4135 = vrot.lane.b32.xlu0 %v4034, 64
      %v4136 = vpop.permute.xlu0 %4135
      %4137 = vrot.lane.b32.xlu0 %v4040, 64
      %v4138 = vpop.permute.xlu0 %4137
      %4139 = vrot.lane.b32.xlu0 %v4046, 64
      %v4140 = vpop.permute.xlu0 %4139
      %4141 = vrot.lane.b32.xlu0 %v4052, 64
      %v4142 = vpop.permute.xlu0 %4141
      %4143 = vrot.lane.b32.xlu0 %v4058, 64
      %v4144 = vpop.permute.xlu0 %4143
      %4145 = vrot.lane.b32.xlu0 %v4064, 64
      %v4146 = vpop.permute.xlu0 %4145
      %4147 = vrot.lane.b32.xlu0 %v4070, 64
      %v4148 = vpop.permute.xlu0 %4147
      %4149 = vrot.lane.b32.xlu0 %v4076, 64
      %v4150 = vpop.permute.xlu0 %4149
      %4151 = vrot.lane.b32.xlu0 %v4082, 64
      %v4152 = vpop.permute.xlu0 %4151
      %4153 = vrot.lane.b32.xlu0 %v4088, 64
      %v4154 = vpop.permute.xlu0 %4153
      %4155 = vrot.lane.b32.xlu0 %v4094, 64
      %v4156 = vpop.permute.xlu0 %4155
      %4157 = vrot.lane.b32.xlu0 %v4100, 64
      %v4158 = vpop.permute.xlu0 %4157
      %4159 = vrot.lane.b32.xlu0 %v4106, 64
      %v4160 = vpop.permute.xlu0 %4159
      %4161 = vrot.lane.b32.xlu0 %v4112, 64
      %v4162 = vpop.permute.xlu0 %4161
      %vm4179 = vcmask 785920
      %4180 = vst.msk [vmem:[%s152] sm:$0xff] %vm4179, %v4132
      %4181 = vst.msk [vmem:[%s152 + $0x8] sm:$0xff] %vm4179, %v4134
      %4182 = vst.msk [vmem:[%s152 + $0x10] sm:$0xff] %vm4179, %v4136
      %4183 = vst.msk [vmem:[%s152 + $0x18] sm:$0xff] %vm4179, %v4138
      %4184 = vst.msk [vmem:[%s152 + $0x20] sm:$0xff] %vm4179, %v4140
      %4185 = vst.msk [vmem:[%s152 + $0x28] sm:$0xff] %vm4179, %v4142
      %4186 = vst.msk [vmem:[%s152 + $0x30] sm:$0xff] %vm4179, %v4144
      %4187 = vst.msk [vmem:[%s152 + $0x38] sm:$0xff] %vm4179, %v4146
      %4188 = vst.msk [vmem:[%s152 + $0x40] sm:$0xff] %vm4179, %v4148
      %4189 = vst.msk [vmem:[%s152 + $0x48] sm:$0xff] %vm4179, %v4150
      %4190 = vst.msk [vmem:[%s152 + $0x50] sm:$0xff] %vm4179, %v4152
      %4191 = vst.msk [vmem:[%s152 + $0x58] sm:$0xff] %vm4179, %v4154
      %4192 = vst.msk [vmem:[%s152 + $0x60] sm:$0xff] %vm4179, %v4156
      %4193 = vst.msk [vmem:[%s152 + $0x68] sm:$0xff] %vm4179, %v4158
      %4194 = vst.msk [vmem:[%s152 + $0x70] sm:$0xff] %vm4179, %v4160
      %4195 = vst.msk [vmem:[%s152 + $0x78] sm:$0xff] %vm4179, %v4162
      %s4196 = sld [smem:[#allocation3 + $0x3]]
      %v4197 = vstv %s4196
      %v4198 = vadd.s32 %v154, %v4197
      %v4199 = vadd.s32 %v155, %v4197
      %v4200 = vadd.s32 %v156, %v4197
      %v4201 = vadd.s32 %v157, %v4197
      %v4202 = vadd.s32 %v158, %v4197
      %v4203 = vadd.s32 %v159, %v4197
      %v4204 = vadd.s32 %v160, %v4197
      %v4205 = vadd.s32 %v161, %v4197
      %v4206 = vadd.s32 %v162, %v4197
      %v4207 = vadd.s32 %v163, %v4197
      %v4208 = vadd.s32 %v164, %v4197
      %v4209 = vadd.s32 %v165, %v4197
      %v4210 = vadd.s32 %v166, %v4197
      %v4211 = vadd.s32 %v167, %v4197
      %v4212 = vadd.s32 %v168, %v4197
      %v4213 = vadd.s32 %v169, %v4197
      %4214 = vset.pattern.permute.xlu0 3
      %4215 = vperm.xlu0 %4214, %v4198
      %v4216 = vpop.permute.xlu0 %4215
      %4217 = vset.pattern.permute.xlu0 3
      %4218 = vperm.xlu0 %4217, %v4199
      %v4219 = vpop.permute.xlu0 %4218
      %4220 = vset.pattern.permute.xlu0 3
      %4221 = vperm.xlu0 %4220, %v4200
      %v4222 = vpop.permute.xlu0 %4221
      %4223 = vset.pattern.permute.xlu0 3
      %4224 = vperm.xlu0 %4223, %v4201
      %v4225 = vpop.permute.xlu0 %4224
      %4226 = vset.pattern.permute.xlu0 3
      %4227 = vperm.xlu0 %4226, %v4202
      %v4228 = vpop.permute.xlu0 %4227
      %4229 = vset.pattern.permute.xlu0 3
      %4230 = vperm.xlu0 %4229, %v4203
      %v4231 = vpop.permute.xlu0 %4230
      %4232 = vset.pattern.permute.xlu0 3
      %4233 = vperm.xlu0 %4232, %v4204
      %v4234 = vpop.permute.xlu0 %4233
      %4235 = vset.pattern.permute.xlu0 3
      %4236 = vperm.xlu0 %4235, %v4205
      %v4237 = vpop.permute.xlu0 %4236
      %4238 = vset.pattern.permute.xlu0 3
      %4239 = vperm.xlu0 %4238, %v4206
      %v4240 = vpop.permute.xlu0 %4239
      %4241 = vset.pattern.permute.xlu0 3
      %4242 = vperm.xlu0 %4241, %v4207
      %v4243 = vpop.permute.xlu0 %4242
      %4244 = vset.pattern.permute.xlu0 3
      %4245 = vperm.xlu0 %4244, %v4208
      %v4246 = vpop.permute.xlu0 %4245
      %4247 = vset.pattern.permute.xlu0 3
      %4248 = vperm.xlu0 %4247, %v4209
      %v4249 = vpop.permute.xlu0 %4248
      %4250 = vset.pattern.permute.xlu0 3
      %4251 = vperm.xlu0 %4250, %v4210
      %v4252 = vpop.permute.xlu0 %4251
      %4253 = vset.pattern.permute.xlu0 3
      %4254 = vperm.xlu0 %4253, %v4211
      %v4255 = vpop.permute.xlu0 %4254
      %4256 = vset.pattern.permute.xlu0 3
      %4257 = vperm.xlu0 %4256, %v4212
      %v4258 = vpop.permute.xlu0 %4257
      %4259 = vset.pattern.permute.xlu0 3
      %4260 = vperm.xlu0 %4259, %v4213
      %v4261 = vpop.permute.xlu0 %4260
      %vm4262 = vcmp.eq.s32.totalorder %v174, %v4216
      %vm4263 = vcmp.eq.s32.totalorder %v174, %v4219
      %vm4264 = vcmp.eq.s32.totalorder %v174, %v4222
      %vm4265 = vcmp.eq.s32.totalorder %v174, %v4225
      %vm4266 = vcmp.eq.s32.totalorder %v174, %v4228
      %vm4267 = vcmp.eq.s32.totalorder %v174, %v4231
      %vm4268 = vcmp.eq.s32.totalorder %v174, %v4234
      %vm4269 = vcmp.eq.s32.totalorder %v174, %v4237
      %vm4270 = vcmp.eq.s32.totalorder %v174, %v4240
      %vm4271 = vcmp.eq.s32.totalorder %v174, %v4243
      %vm4272 = vcmp.eq.s32.totalorder %v174, %v4246
      %vm4273 = vcmp.eq.s32.totalorder %v174, %v4249
      %vm4274 = vcmp.eq.s32.totalorder %v174, %v4252
      %vm4275 = vcmp.eq.s32.totalorder %v174, %v4255
      %vm4276 = vcmp.eq.s32.totalorder %v174, %v4258
      %vm4277 = vcmp.eq.s32.totalorder %v174, %v4261
      %v4278 = vsel %vm4262, 1, 0
      %v4279 = vsel %vm4263, 1, 0
      %v4280 = vsel %vm4264, 1, 0
      %v4281 = vsel %vm4265, 1, 0
      %v4282 = vsel %vm4266, 1, 0
      %v4283 = vsel %vm4267, 1, 0
      %v4284 = vsel %vm4268, 1, 0
      %v4285 = vsel %vm4269, 1, 0
      %v4286 = vsel %vm4270, 1, 0
      %v4287 = vsel %vm4271, 1, 0
      %v4288 = vsel %vm4272, 1, 0
      %v4289 = vsel %vm4273, 1, 0
      %v4290 = vsel %vm4274, 1, 0
      %v4291 = vsel %vm4275, 1, 0
      %v4292 = vsel %vm4276, 1, 0
      %v4293 = vsel %vm4277, 1, 0
      %v4294 = vcvt.s32.f32 %v4278
      %v4295 = vcvt.s32.f32 %v4279
      %v4296 = vcvt.s32.f32 %v4280
      %v4297 = vcvt.s32.f32 %v4281
      %v4298 = vcvt.s32.f32 %v4282
      %v4299 = vcvt.s32.f32 %v4283
      %v4300 = vcvt.s32.f32 %v4284
      %v4301 = vcvt.s32.f32 %v4285
      %v4302 = vcvt.s32.f32 %v4286
      %v4303 = vcvt.s32.f32 %v4287
      %v4304 = vcvt.s32.f32 %v4288
      %v4305 = vcvt.s32.f32 %v4289
      %v4306 = vcvt.s32.f32 %v4290
      %v4307 = vcvt.s32.f32 %v4291
      %v4308 = vcvt.s32.f32 %v4292
      %v4309 = vcvt.s32.f32 %v4293
      %v4311 = vsel %vm289, %v4294, 0
      %v4314 = vsel %vm289, %v4295, 0
      %v4317 = vsel %vm289, %v4296, 0
      %v4320 = vsel %vm289, %v4297, 0
      %v4323 = vsel %vm289, %v4298, 0
      %v4326 = vsel %vm289, %v4299, 0
      %v4329 = vsel %vm289, %v4300, 0
      %v4332 = vsel %vm289, %v4301, 0
      %v4335 = vsel %vm289, %v4302, 0
      %v4338 = vsel %vm289, %v4303, 0
      %v4341 = vsel %vm289, %v4304, 0
      %v4344 = vsel %vm289, %v4305, 0
      %v4347 = vsel %vm289, %v4306, 0
      %v4350 = vsel %vm289, %v4307, 0
      %v4353 = vsel %vm289, %v4308, 0
      %v4356 = vsel %vm289, %v4309, 0
      %4358 = vmatprep.subr.mxu0 0.0
      %4359 = vmatpush1.msra.mxu0 0.0
      %4360 = vmatprep.subr.mxu0 0.0
      %4361 = vmatpush1.msra.mxu0 0.0
      %4362 = vmatprep.subr.mxu0 0.0
      %4363 = vmatpush1.msra.mxu0 0.0
      %4364 = vmatprep.subr.mxu0 0.0
      %4365 = vmatpush1.msra.mxu0 0.0
      %4366 = vmatprep.subr.mxu0 0.0
      %4367 = vmatpush1.msra.mxu0 0.0
      %4368 = vmatprep.subr.mxu0 0.0
      %4369 = vmatpush1.msra.mxu0 0.0
      %4370 = vmatprep.subr.mxu0 0.0
      %4371 = vmatpush1.msra.mxu0 0.0
      %4372 = vmatprep.subr.mxu0 0.0
      %4373 = vmatpush1.msra.mxu0 0.0
      %4374 = vmatprep.subr.mxu0 0.0
      %4375 = vmatpush1.msra.mxu0 0.0
      %4376 = vmatprep.subr.mxu0 0.0
      %4377 = vmatpush1.msra.mxu0 0.0
      %4378 = vmatprep.subr.mxu0 0.0
      %4379 = vmatpush1.msra.mxu0 0.0
      %4380 = vmatprep.subr.mxu0 0.0
      %4381 = vmatpush1.msra.mxu0 0.0
      %4382 = vmatprep.subr.mxu0 0.0
      %4383 = vmatpush1.msra.mxu0 0.0
      %4384 = vmatprep.subr.mxu0 0.0
      %v4385 = vand.u32 %v340, 4294901760
      %4386 = vmatpush1.msra.mxu0 %v4385
      %4387 = vmatprep.subr.mxu0 0.0
      %v4388 = vand.u32 %v171, 4294901760
      %4389 = vmatpush1.msra.mxu0 %v4388
      %4390 = vmatprep.subr.mxu0 0.0
      %v4391 = vand.u32 %v170, 4294901760
      %4392 = vmatpush1.msra.mxu0 %v4391
      %4393 = vmatprep.subr.mxu0 0.0
      %4394 = vmatpush2.msra.mxu0 0.0
      %4395 = vmatprep.subr.mxu0 0.0
      %4396 = vmatpush2.msra.mxu0 0.0
      %4397 = vmatprep.subr.mxu0 0.0
      %4398 = vmatpush2.msra.mxu0 0.0
      %4399 = vmatprep.subr.mxu0 0.0
      %4400 = vmatpush2.msra.mxu0 0.0
      %4401 = vmatprep.subr.mxu0 0.0
      %4402 = vmatpush2.msra.mxu0 0.0
      %4403 = vmatprep.subr.mxu0 0.0
      %4404 = vmatpush2.msra.mxu0 0.0
      %4405 = vmatprep.subr.mxu0 0.0
      %4406 = vmatpush2.msra.mxu0 0.0
      %4407 = vmatprep.subr.mxu0 0.0
      %4408 = vmatpush2.msra.mxu0 0.0
      %4409 = vmatprep.subr.mxu0 0.0
      %4410 = vmatpush2.msra.mxu0 0.0
      %4411 = vmatprep.subr.mxu0 0.0
      %4412 = vmatpush2.msra.mxu0 0.0
      %4413 = vmatprep.subr.mxu0 0.0
      %4414 = vmatpush2.msra.mxu0 0.0
      %4415 = vmatprep.subr.mxu0 0.0
      %4416 = vmatpush2.msra.mxu0 0.0
      %4417 = vmatprep.subr.mxu0 0.0
      %4418 = vmatpush2.msra.mxu0 0.0
      %4419 = vmatprep.subr.mxu0 0.0
      %4420 = vmatpush2.msra.mxu0 0.0
      %4421 = vmatprep.subr.mxu0 0.0
      %4422 = vmatpush2.msra.mxu0 0.0
      %4423 = vmatprep.subr.mxu0 0.0
      %4424 = vmatpush2.msra.mxu0 0.0
      %4425 = vmatprep.mubr.f32.mxu0 0.0
      %v4426 = vand.u32 %v4311, 4294901760
      %v4427 = vsub.f32 %v4311, %v4426
      %v4428 = vand.u32 %v4427, 4294901760
      %v4429 = vsub.f32 %v4427, %v4428
      %v4430 = vand.u32 %v4429, 4294901760
      %4431 = vmatmul.mubr.f32.gmra.mxu0 %v4430
      %v4432 = vpop.f32.mrf.mxu0
      %v4433 = vadd.f32 0.0, %v4432
      %v4434 = vpop.f32.mrf.mxu0
      %4435 = vmatprep.mubr.f32.mxu0 0.0
      %v4436 = vand.u32 %v4314, 4294901760
      %v4437 = vsub.f32 %v4314, %v4436
      %v4438 = vand.u32 %v4437, 4294901760
      %v4439 = vsub.f32 %v4437, %v4438
      %v4440 = vand.u32 %v4439, 4294901760
      %4441 = vmatmul.mubr.f32.gmra.mxu0 %v4440
      %v4442 = vpop.f32.mrf.mxu0
      %v4443 = vadd.f32 0.0, %v4442
      %v4444 = vpop.f32.mrf.mxu0
      %4445 = vmatprep.mubr.f32.mxu0 0.0
      %v4446 = vand.u32 %v4317, 4294901760
      %v4447 = vsub.f32 %v4317, %v4446
      %v4448 = vand.u32 %v4447, 4294901760
      %v4449 = vsub.f32 %v4447, %v4448
      %v4450 = vand.u32 %v4449, 4294901760
      %4451 = vmatmul.mubr.f32.gmra.mxu0 %v4450
      %v4452 = vpop.f32.mrf.mxu0
      %v4453 = vadd.f32 0.0, %v4452
      %v4454 = vpop.f32.mrf.mxu0
      %4455 = vmatprep.mubr.f32.mxu0 0.0
      %v4456 = vand.u32 %v4320, 4294901760
      %v4457 = vsub.f32 %v4320, %v4456
      %v4458 = vand.u32 %v4457, 4294901760
      %v4459 = vsub.f32 %v4457, %v4458
      %v4460 = vand.u32 %v4459, 4294901760
      %4461 = vmatmul.mubr.f32.gmra.mxu0 %v4460
      %v4462 = vpop.f32.mrf.mxu0
      %v4463 = vadd.f32 0.0, %v4462
      %v4464 = vpop.f32.mrf.mxu0
      %4465 = vmatprep.mubr.f32.mxu0 0.0
      %v4466 = vand.u32 %v4323, 4294901760
      %v4467 = vsub.f32 %v4323, %v4466
      %v4468 = vand.u32 %v4467, 4294901760
      %v4469 = vsub.f32 %v4467, %v4468
      %v4470 = vand.u32 %v4469, 4294901760
      %4471 = vmatmul.mubr.f32.gmra.mxu0 %v4470
      %v4472 = vpop.f32.mrf.mxu0
      %v4473 = vadd.f32 0.0, %v4472
      %v4474 = vpop.f32.mrf.mxu0
      %4475 = vmatprep.mubr.f32.mxu0 0.0
      %v4476 = vand.u32 %v4326, 4294901760
      %v4477 = vsub.f32 %v4326, %v4476
      %v4478 = vand.u32 %v4477, 4294901760
      %v4479 = vsub.f32 %v4477, %v4478
      %v4480 = vand.u32 %v4479, 4294901760
      %4481 = vmatmul.mubr.f32.gmra.mxu0 %v4480
      %v4482 = vpop.f32.mrf.mxu0
      %v4483 = vadd.f32 0.0, %v4482
      %v4484 = vpop.f32.mrf.mxu0
      %4485 = vmatprep.mubr.f32.mxu0 0.0
      %v4486 = vand.u32 %v4329, 4294901760
      %v4487 = vsub.f32 %v4329, %v4486
      %v4488 = vand.u32 %v4487, 4294901760
      %v4489 = vsub.f32 %v4487, %v4488
      %v4490 = vand.u32 %v4489, 4294901760
      %4491 = vmatmul.mubr.f32.gmra.mxu0 %v4490
      %v4492 = vpop.f32.mrf.mxu0
      %v4493 = vadd.f32 0.0, %v4492
      %v4494 = vpop.f32.mrf.mxu0
      %4495 = vmatprep.mubr.f32.mxu0 0.0
      %v4496 = vand.u32 %v4332, 4294901760
      %v4497 = vsub.f32 %v4332, %v4496
      %v4498 = vand.u32 %v4497, 4294901760
      %v4499 = vsub.f32 %v4497, %v4498
      %v4500 = vand.u32 %v4499, 4294901760
      %4501 = vmatmul.mubr.f32.gmra.mxu0 %v4500
      %v4502 = vpop.f32.mrf.mxu0
      %v4503 = vadd.f32 0.0, %v4502
      %v4504 = vpop.f32.mrf.mxu0
      %4505 = vmatprep.mubr.f32.mxu0 0.0
      %v4506 = vand.u32 %v4335, 4294901760
      %v4507 = vsub.f32 %v4335, %v4506
      %v4508 = vand.u32 %v4507, 4294901760
      %v4509 = vsub.f32 %v4507, %v4508
      %v4510 = vand.u32 %v4509, 4294901760
      %4511 = vmatmul.mubr.f32.gmra.mxu0 %v4510
      %v4512 = vpop.f32.mrf.mxu0
      %v4513 = vadd.f32 0.0, %v4512
      %v4514 = vpop.f32.mrf.mxu0
      %4515 = vmatprep.mubr.f32.mxu0 0.0
      %v4516 = vand.u32 %v4338, 4294901760
      %v4517 = vsub.f32 %v4338, %v4516
      %v4518 = vand.u32 %v4517, 4294901760
      %v4519 = vsub.f32 %v4517, %v4518
      %v4520 = vand.u32 %v4519, 4294901760
      %4521 = vmatmul.mubr.f32.gmra.mxu0 %v4520
      %v4522 = vpop.f32.mrf.mxu0
      %v4523 = vadd.f32 0.0, %v4522
      %v4524 = vpop.f32.mrf.mxu0
      %4525 = vmatprep.mubr.f32.mxu0 0.0
      %v4526 = vand.u32 %v4341, 4294901760
      %v4527 = vsub.f32 %v4341, %v4526
      %v4528 = vand.u32 %v4527, 4294901760
      %v4529 = vsub.f32 %v4527, %v4528
      %v4530 = vand.u32 %v4529, 4294901760
      %4531 = vmatmul.mubr.f32.gmra.mxu0 %v4530
      %v4532 = vpop.f32.mrf.mxu0
      %v4533 = vadd.f32 0.0, %v4532
      %v4534 = vpop.f32.mrf.mxu0
      %4535 = vmatprep.mubr.f32.mxu0 0.0
      %v4536 = vand.u32 %v4344, 4294901760
      %v4537 = vsub.f32 %v4344, %v4536
      %v4538 = vand.u32 %v4537, 4294901760
      %v4539 = vsub.f32 %v4537, %v4538
      %v4540 = vand.u32 %v4539, 4294901760
      %4541 = vmatmul.mubr.f32.gmra.mxu0 %v4540
      %v4542 = vpop.f32.mrf.mxu0
      %v4543 = vadd.f32 0.0, %v4542
      %v4544 = vpop.f32.mrf.mxu0
      %4545 = vmatprep.mubr.f32.mxu0 0.0
      %v4546 = vand.u32 %v4347, 4294901760
      %v4547 = vsub.f32 %v4347, %v4546
      %v4548 = vand.u32 %v4547, 4294901760
      %v4549 = vsub.f32 %v4547, %v4548
      %v4550 = vand.u32 %v4549, 4294901760
      %4551 = vmatmul.mubr.f32.gmra.mxu0 %v4550
      %v4552 = vpop.f32.mrf.mxu0
      %v4553 = vadd.f32 0.0, %v4552
      %v4554 = vpop.f32.mrf.mxu0
      %4555 = vmatprep.mubr.f32.mxu0 0.0
      %v4556 = vand.u32 %v4350, 4294901760
      %v4557 = vsub.f32 %v4350, %v4556
      %v4558 = vand.u32 %v4557, 4294901760
      %v4559 = vsub.f32 %v4557, %v4558
      %v4560 = vand.u32 %v4559, 4294901760
      %4561 = vmatmul.mubr.f32.gmra.mxu0 %v4560
      %v4562 = vpop.f32.mrf.mxu0
      %v4563 = vadd.f32 0.0, %v4562
      %v4564 = vpop.f32.mrf.mxu0
      %4565 = vmatprep.mubr.f32.mxu0 0.0
      %v4566 = vand.u32 %v4353, 4294901760
      %v4567 = vsub.f32 %v4353, %v4566
      %v4568 = vand.u32 %v4567, 4294901760
      %v4569 = vsub.f32 %v4567, %v4568
      %v4570 = vand.u32 %v4569, 4294901760
      %4571 = vmatmul.mubr.f32.gmra.mxu0 %v4570
      %v4572 = vpop.f32.mrf.mxu0
      %v4573 = vadd.f32 0.0, %v4572
      %v4574 = vpop.f32.mrf.mxu0
      %4575 = vmatprep.mubr.f32.mxu0 0.0
      %v4576 = vand.u32 %v4356, 4294901760
      %v4577 = vsub.f32 %v4356, %v4576
      %v4578 = vand.u32 %v4577, 4294901760
      %v4579 = vsub.f32 %v4577, %v4578
      %v4580 = vand.u32 %v4579, 4294901760
      %4581 = vmatmul.mubr.f32.gmra.mxu0 %v4580
      %v4582 = vpop.f32.mrf.mxu0
      %v4583 = vadd.f32 0.0, %v4582
      %v4584 = vpop.f32.mrf.mxu0
      %4585 = vdwg.mxu0
      %4586 = vmatprep.subr.mxu0 0.0
      %4587 = vmatpush1.msra.mxu0 0.0
      %4588 = vmatprep.subr.mxu0 0.0
      %4589 = vmatpush1.msra.mxu0 0.0
      %4590 = vmatprep.subr.mxu0 0.0
      %4591 = vmatpush1.msra.mxu0 0.0
      %4592 = vmatprep.subr.mxu0 0.0
      %4593 = vmatpush1.msra.mxu0 0.0
      %4594 = vmatprep.subr.mxu0 0.0
      %4595 = vmatpush1.msra.mxu0 0.0
      %4596 = vmatprep.subr.mxu0 0.0
      %4597 = vmatpush1.msra.mxu0 0.0
      %4598 = vmatprep.subr.mxu0 0.0
      %4599 = vmatpush1.msra.mxu0 0.0
      %4600 = vmatprep.subr.mxu0 0.0
      %4601 = vmatpush1.msra.mxu0 0.0
      %4602 = vmatprep.subr.mxu0 0.0
      %4603 = vmatpush1.msra.mxu0 0.0
      %4604 = vmatprep.subr.mxu0 0.0
      %4605 = vmatpush1.msra.mxu0 0.0
      %4606 = vmatprep.subr.mxu0 0.0
      %4607 = vmatpush1.msra.mxu0 0.0
      %4608 = vmatprep.subr.mxu0 0.0
      %4609 = vmatpush1.msra.mxu0 0.0
      %4610 = vmatprep.subr.mxu0 0.0
      %4611 = vmatpush1.msra.mxu0 0.0
      %4612 = vmatprep.subr.mxu0 0.0
      %v4613 = vand.u32 %v340, 4294901760
      %v4614 = vsub.f32 %v340, %v4613
      %v4615 = vand.u32 %v4614, 4294901760
      %v4616 = vsub.f32 %v4614, %v4615
      %v4617 = vand.u32 %v4616, 4294901760
      %4618 = vmatpush1.msra.mxu0 %v4617
      %4619 = vmatprep.subr.mxu0 0.0
      %v4620 = vand.u32 %v171, 4294901760
      %v4621 = vsub.f32 %v171, %v4620
      %v4622 = vand.u32 %v4621, 4294901760
      %v4623 = vsub.f32 %v4621, %v4622
      %v4624 = vand.u32 %v4623, 4294901760
      %4625 = vmatpush1.msra.mxu0 %v4624
      %4626 = vmatprep.subr.mxu0 0.0
      %v4627 = vand.u32 %v170, 4294901760
      %v4628 = vsub.f32 %v170, %v4627
      %v4629 = vand.u32 %v4628, 4294901760
      %v4630 = vsub.f32 %v4628, %v4629
      %v4631 = vand.u32 %v4630, 4294901760
      %4632 = vmatpush1.msra.mxu0 %v4631
      %4633 = vmatprep.subr.mxu0 0.0
      %4634 = vmatpush2.msra.mxu0 0.0
      %4635 = vmatprep.subr.mxu0 0.0
      %4636 = vmatpush2.msra.mxu0 0.0
      %4637 = vmatprep.subr.mxu0 0.0
      %4638 = vmatpush2.msra.mxu0 0.0
      %4639 = vmatprep.subr.mxu0 0.0
      %4640 = vmatpush2.msra.mxu0 0.0
      %4641 = vmatprep.subr.mxu0 0.0
      %4642 = vmatpush2.msra.mxu0 0.0
      %4643 = vmatprep.subr.mxu0 0.0
      %4644 = vmatpush2.msra.mxu0 0.0
      %4645 = vmatprep.subr.mxu0 0.0
      %4646 = vmatpush2.msra.mxu0 0.0
      %4647 = vmatprep.subr.mxu0 0.0
      %4648 = vmatpush2.msra.mxu0 0.0
      %4649 = vmatprep.subr.mxu0 0.0
      %4650 = vmatpush2.msra.mxu0 0.0
      %4651 = vmatprep.subr.mxu0 0.0
      %4652 = vmatpush2.msra.mxu0 0.0
      %4653 = vmatprep.subr.mxu0 0.0
      %4654 = vmatpush2.msra.mxu0 0.0
      %4655 = vmatprep.subr.mxu0 0.0
      %4656 = vmatpush2.msra.mxu0 0.0
      %4657 = vmatprep.subr.mxu0 0.0
      %4658 = vmatpush2.msra.mxu0 0.0
      %4659 = vmatprep.subr.mxu0 0.0
      %4660 = vmatpush2.msra.mxu0 0.0
      %4661 = vmatprep.subr.mxu0 0.0
      %4662 = vmatpush2.msra.mxu0 0.0
      %4663 = vmatprep.subr.mxu0 0.0
      %4664 = vmatpush2.msra.mxu0 0.0
      %4665 = vmatprep.mubr.f32.mxu0 0.0
      %v4666 = vand.u32 %v4311, 4294901760
      %4667 = vmatmul.mubr.f32.gmra.mxu0 %v4666
      %v4668 = vpop.f32.mrf.mxu0
      %v4669 = vadd.f32 %v4433, %v4668
      %v4670 = vpop.f32.mrf.mxu0
      %4671 = vmatprep.mubr.f32.mxu0 0.0
      %v4672 = vand.u32 %v4314, 4294901760
      %4673 = vmatmul.mubr.f32.gmra.mxu0 %v4672
      %v4674 = vpop.f32.mrf.mxu0
      %v4675 = vadd.f32 %v4443, %v4674
      %v4676 = vpop.f32.mrf.mxu0
      %4677 = vmatprep.mubr.f32.mxu0 0.0
      %v4678 = vand.u32 %v4317, 4294901760
      %4679 = vmatmul.mubr.f32.gmra.mxu0 %v4678
      %v4680 = vpop.f32.mrf.mxu0
      %v4681 = vadd.f32 %v4453, %v4680
      %v4682 = vpop.f32.mrf.mxu0
      %4683 = vmatprep.mubr.f32.mxu0 0.0
      %v4684 = vand.u32 %v4320, 4294901760
      %4685 = vmatmul.mubr.f32.gmra.mxu0 %v4684
      %v4686 = vpop.f32.mrf.mxu0
      %v4687 = vadd.f32 %v4463, %v4686
      %v4688 = vpop.f32.mrf.mxu0
      %4689 = vmatprep.mubr.f32.mxu0 0.0
      %v4690 = vand.u32 %v4323, 4294901760
      %4691 = vmatmul.mubr.f32.gmra.mxu0 %v4690
      %v4692 = vpop.f32.mrf.mxu0
      %v4693 = vadd.f32 %v4473, %v4692
      %v4694 = vpop.f32.mrf.mxu0
      %4695 = vmatprep.mubr.f32.mxu0 0.0
      %v4696 = vand.u32 %v4326, 4294901760
      %4697 = vmatmul.mubr.f32.gmra.mxu0 %v4696
      %v4698 = vpop.f32.mrf.mxu0
      %v4699 = vadd.f32 %v4483, %v4698
      %v4700 = vpop.f32.mrf.mxu0
      %4701 = vmatprep.mubr.f32.mxu0 0.0
      %v4702 = vand.u32 %v4329, 4294901760
      %4703 = vmatmul.mubr.f32.gmra.mxu0 %v4702
      %v4704 = vpop.f32.mrf.mxu0
      %v4705 = vadd.f32 %v4493, %v4704
      %v4706 = vpop.f32.mrf.mxu0
      %4707 = vmatprep.mubr.f32.mxu0 0.0
      %v4708 = vand.u32 %v4332, 4294901760
      %4709 = vmatmul.mubr.f32.gmra.mxu0 %v4708
      %v4710 = vpop.f32.mrf.mxu0
      %v4711 = vadd.f32 %v4503, %v4710
      %v4712 = vpop.f32.mrf.mxu0
      %4713 = vmatprep.mubr.f32.mxu0 0.0
      %v4714 = vand.u32 %v4335, 4294901760
      %4715 = vmatmul.mubr.f32.gmra.mxu0 %v4714
      %v4716 = vpop.f32.mrf.mxu0
      %v4717 = vadd.f32 %v4513, %v4716
      %v4718 = vpop.f32.mrf.mxu0
      %4719 = vmatprep.mubr.f32.mxu0 0.0
      %v4720 = vand.u32 %v4338, 4294901760
      %4721 = vmatmul.mubr.f32.gmra.mxu0 %v4720
      %v4722 = vpop.f32.mrf.mxu0
      %v4723 = vadd.f32 %v4523, %v4722
      %v4724 = vpop.f32.mrf.mxu0
      %4725 = vmatprep.mubr.f32.mxu0 0.0
      %v4726 = vand.u32 %v4341, 4294901760
      %4727 = vmatmul.mubr.f32.gmra.mxu0 %v4726
      %v4728 = vpop.f32.mrf.mxu0
      %v4729 = vadd.f32 %v4533, %v4728
      %v4730 = vpop.f32.mrf.mxu0
      %4731 = vmatprep.mubr.f32.mxu0 0.0
      %v4732 = vand.u32 %v4344, 4294901760
      %4733 = vmatmul.mubr.f32.gmra.mxu0 %v4732
      %v4734 = vpop.f32.mrf.mxu0
      %v4735 = vadd.f32 %v4543, %v4734
      %v4736 = vpop.f32.mrf.mxu0
      %4737 = vmatprep.mubr.f32.mxu0 0.0
      %v4738 = vand.u32 %v4347, 4294901760
      %4739 = vmatmul.mubr.f32.gmra.mxu0 %v4738
      %v4740 = vpop.f32.mrf.mxu0
      %v4741 = vadd.f32 %v4553, %v4740
      %v4742 = vpop.f32.mrf.mxu0
      %4743 = vmatprep.mubr.f32.mxu0 0.0
      %v4744 = vand.u32 %v4350, 4294901760
      %4745 = vmatmul.mubr.f32.gmra.mxu0 %v4744
      %v4746 = vpop.f32.mrf.mxu0
      %v4747 = vadd.f32 %v4563, %v4746
      %v4748 = vpop.f32.mrf.mxu0
      %4749 = vmatprep.mubr.f32.mxu0 0.0
      %v4750 = vand.u32 %v4353, 4294901760
      %4751 = vmatmul.mubr.f32.gmra.mxu0 %v4750
      %v4752 = vpop.f32.mrf.mxu0
      %v4753 = vadd.f32 %v4573, %v4752
      %v4754 = vpop.f32.mrf.mxu0
      %4755 = vmatprep.mubr.f32.mxu0 0.0
      %v4756 = vand.u32 %v4356, 4294901760
      %4757 = vmatmul.mubr.f32.gmra.mxu0 %v4756
      %v4758 = vpop.f32.mrf.mxu0
      %v4759 = vadd.f32 %v4583, %v4758
      %v4760 = vpop.f32.mrf.mxu0
      %4761 = vdwg.mxu0
      %4762 = vmatprep.subr.mxu0 0.0
      %4763 = vmatpush1.msra.mxu0 0.0
      %4764 = vmatprep.subr.mxu0 0.0
      %4765 = vmatpush1.msra.mxu0 0.0
      %4766 = vmatprep.subr.mxu0 0.0
      %4767 = vmatpush1.msra.mxu0 0.0
      %4768 = vmatprep.subr.mxu0 0.0
      %4769 = vmatpush1.msra.mxu0 0.0
      %4770 = vmatprep.subr.mxu0 0.0
      %4771 = vmatpush1.msra.mxu0 0.0
      %4772 = vmatprep.subr.mxu0 0.0
      %4773 = vmatpush1.msra.mxu0 0.0
      %4774 = vmatprep.subr.mxu0 0.0
      %4775 = vmatpush1.msra.mxu0 0.0
      %4776 = vmatprep.subr.mxu0 0.0
      %4777 = vmatpush1.msra.mxu0 0.0
      %4778 = vmatprep.subr.mxu0 0.0
      %4779 = vmatpush1.msra.mxu0 0.0
      %4780 = vmatprep.subr.mxu0 0.0
      %4781 = vmatpush1.msra.mxu0 0.0
      %4782 = vmatprep.subr.mxu0 0.0
      %4783 = vmatpush1.msra.mxu0 0.0
      %4784 = vmatprep.subr.mxu0 0.0
      %4785 = vmatpush1.msra.mxu0 0.0
      %4786 = vmatprep.subr.mxu0 0.0
      %4787 = vmatpush1.msra.mxu0 0.0
      %4788 = vmatprep.subr.mxu0 0.0
      %v4789 = vand.u32 %v340, 4294901760
      %v4790 = vsub.f32 %v340, %v4789
      %4791 = vmatpush1.msra.mxu0 %v4790
      %4792 = vmatprep.subr.mxu0 0.0
      %v4793 = vand.u32 %v171, 4294901760
      %v4794 = vsub.f32 %v171, %v4793
      %4795 = vmatpush1.msra.mxu0 %v4794
      %4796 = vmatprep.subr.mxu0 0.0
      %v4797 = vand.u32 %v170, 4294901760
      %v4798 = vsub.f32 %v170, %v4797
      %4799 = vmatpush1.msra.mxu0 %v4798
      %4800 = vmatprep.subr.mxu0 0.0
      %4801 = vmatpush2.msra.mxu0 0.0
      %4802 = vmatprep.subr.mxu0 0.0
      %4803 = vmatpush2.msra.mxu0 0.0
      %4804 = vmatprep.subr.mxu0 0.0
      %4805 = vmatpush2.msra.mxu0 0.0
      %4806 = vmatprep.subr.mxu0 0.0
      %4807 = vmatpush2.msra.mxu0 0.0
      %4808 = vmatprep.subr.mxu0 0.0
      %4809 = vmatpush2.msra.mxu0 0.0
      %4810 = vmatprep.subr.mxu0 0.0
      %4811 = vmatpush2.msra.mxu0 0.0
      %4812 = vmatprep.subr.mxu0 0.0
      %4813 = vmatpush2.msra.mxu0 0.0
      %4814 = vmatprep.subr.mxu0 0.0
      %4815 = vmatpush2.msra.mxu0 0.0
      %4816 = vmatprep.subr.mxu0 0.0
      %4817 = vmatpush2.msra.mxu0 0.0
      %4818 = vmatprep.subr.mxu0 0.0
      %4819 = vmatpush2.msra.mxu0 0.0
      %4820 = vmatprep.subr.mxu0 0.0
      %4821 = vmatpush2.msra.mxu0 0.0
      %4822 = vmatprep.subr.mxu0 0.0
      %4823 = vmatpush2.msra.mxu0 0.0
      %4824 = vmatprep.subr.mxu0 0.0
      %4825 = vmatpush2.msra.mxu0 0.0
      %4826 = vmatprep.subr.mxu0 0.0
      %4827 = vmatpush2.msra.mxu0 0.0
      %4828 = vmatprep.subr.mxu0 0.0
      %4829 = vmatpush2.msra.mxu0 0.0
      %4830 = vmatprep.subr.mxu0 0.0
      %4831 = vmatpush2.msra.mxu0 0.0
      %4832 = vmatprep.mubr.f32.mxu0 0.0
      %v4833 = vand.u32 %v4311, 4294901760
      %v4834 = vsub.f32 %v4311, %v4833
      %4835 = vmatmul.mubr.f32.gmra.mxu0 %v4834
      %v4836 = vpop.f32.mrf.mxu0
      %v4837 = vadd.f32 %v4669, %v4836
      %v4838 = vpop.f32.mrf.mxu0
      %4839 = vmatprep.mubr.f32.mxu0 0.0
      %v4840 = vand.u32 %v4314, 4294901760
      %v4841 = vsub.f32 %v4314, %v4840
      %4842 = vmatmul.mubr.f32.gmra.mxu0 %v4841
      %v4843 = vpop.f32.mrf.mxu0
      %v4844 = vadd.f32 %v4675, %v4843
      %v4845 = vpop.f32.mrf.mxu0
      %4846 = vmatprep.mubr.f32.mxu0 0.0
      %v4847 = vand.u32 %v4317, 4294901760
      %v4848 = vsub.f32 %v4317, %v4847
      %4849 = vmatmul.mubr.f32.gmra.mxu0 %v4848
      %v4850 = vpop.f32.mrf.mxu0
      %v4851 = vadd.f32 %v4681, %v4850
      %v4852 = vpop.f32.mrf.mxu0
      %4853 = vmatprep.mubr.f32.mxu0 0.0
      %v4854 = vand.u32 %v4320, 4294901760
      %v4855 = vsub.f32 %v4320, %v4854
      %4856 = vmatmul.mubr.f32.gmra.mxu0 %v4855
      %v4857 = vpop.f32.mrf.mxu0
      %v4858 = vadd.f32 %v4687, %v4857
      %v4859 = vpop.f32.mrf.mxu0
      %4860 = vmatprep.mubr.f32.mxu0 0.0
      %v4861 = vand.u32 %v4323, 4294901760
      %v4862 = vsub.f32 %v4323, %v4861
      %4863 = vmatmul.mubr.f32.gmra.mxu0 %v4862
      %v4864 = vpop.f32.mrf.mxu0
      %v4865 = vadd.f32 %v4693, %v4864
      %v4866 = vpop.f32.mrf.mxu0
      %4867 = vmatprep.mubr.f32.mxu0 0.0
      %v4868 = vand.u32 %v4326, 4294901760
      %v4869 = vsub.f32 %v4326, %v4868
      %4870 = vmatmul.mubr.f32.gmra.mxu0 %v4869
      %v4871 = vpop.f32.mrf.mxu0
      %v4872 = vadd.f32 %v4699, %v4871
      %v4873 = vpop.f32.mrf.mxu0
      %4874 = vmatprep.mubr.f32.mxu0 0.0
      %v4875 = vand.u32 %v4329, 4294901760
      %v4876 = vsub.f32 %v4329, %v4875
      %4877 = vmatmul.mubr.f32.gmra.mxu0 %v4876
      %v4878 = vpop.f32.mrf.mxu0
      %v4879 = vadd.f32 %v4705, %v4878
      %v4880 = vpop.f32.mrf.mxu0
      %4881 = vmatprep.mubr.f32.mxu0 0.0
      %v4882 = vand.u32 %v4332, 4294901760
      %v4883 = vsub.f32 %v4332, %v4882
      %4884 = vmatmul.mubr.f32.gmra.mxu0 %v4883
      %v4885 = vpop.f32.mrf.mxu0
      %v4886 = vadd.f32 %v4711, %v4885
      %v4887 = vpop.f32.mrf.mxu0
      %4888 = vmatprep.mubr.f32.mxu0 0.0
      %v4889 = vand.u32 %v4335, 4294901760
      %v4890 = vsub.f32 %v4335, %v4889
      %4891 = vmatmul.mubr.f32.gmra.mxu0 %v4890
      %v4892 = vpop.f32.mrf.mxu0
      %v4893 = vadd.f32 %v4717, %v4892
      %v4894 = vpop.f32.mrf.mxu0
      %4895 = vmatprep.mubr.f32.mxu0 0.0
      %v4896 = vand.u32 %v4338, 4294901760
      %v4897 = vsub.f32 %v4338, %v4896
      %4898 = vmatmul.mubr.f32.gmra.mxu0 %v4897
      %v4899 = vpop.f32.mrf.mxu0
      %v4900 = vadd.f32 %v4723, %v4899
      %v4901 = vpop.f32.mrf.mxu0
      %4902 = vmatprep.mubr.f32.mxu0 0.0
      %v4903 = vand.u32 %v4341, 4294901760
      %v4904 = vsub.f32 %v4341, %v4903
      %4905 = vmatmul.mubr.f32.gmra.mxu0 %v4904
      %v4906 = vpop.f32.mrf.mxu0
      %v4907 = vadd.f32 %v4729, %v4906
      %v4908 = vpop.f32.mrf.mxu0
      %4909 = vmatprep.mubr.f32.mxu0 0.0
      %v4910 = vand.u32 %v4344, 4294901760
      %v4911 = vsub.f32 %v4344, %v4910
      %4912 = vmatmul.mubr.f32.gmra.mxu0 %v4911
      %v4913 = vpop.f32.mrf.mxu0
      %v4914 = vadd.f32 %v4735, %v4913
      %v4915 = vpop.f32.mrf.mxu0
      %4916 = vmatprep.mubr.f32.mxu0 0.0
      %v4917 = vand.u32 %v4347, 4294901760
      %v4918 = vsub.f32 %v4347, %v4917
      %4919 = vmatmul.mubr.f32.gmra.mxu0 %v4918
      %v4920 = vpop.f32.mrf.mxu0
      %v4921 = vadd.f32 %v4741, %v4920
      %v4922 = vpop.f32.mrf.mxu0
      %4923 = vmatprep.mubr.f32.mxu0 0.0
      %v4924 = vand.u32 %v4350, 4294901760
      %v4925 = vsub.f32 %v4350, %v4924
      %4926 = vmatmul.mubr.f32.gmra.mxu0 %v4925
      %v4927 = vpop.f32.mrf.mxu0
      %v4928 = vadd.f32 %v4747, %v4927
      %v4929 = vpop.f32.mrf.mxu0
      %4930 = vmatprep.mubr.f32.mxu0 0.0
      %v4931 = vand.u32 %v4353, 4294901760
      %v4932 = vsub.f32 %v4353, %v4931
      %4933 = vmatmul.mubr.f32.gmra.mxu0 %v4932
      %v4934 = vpop.f32.mrf.mxu0
      %v4935 = vadd.f32 %v4753, %v4934
      %v4936 = vpop.f32.mrf.mxu0
      %4937 = vmatprep.mubr.f32.mxu0 0.0
      %v4938 = vand.u32 %v4356, 4294901760
      %v4939 = vsub.f32 %v4356, %v4938
      %4940 = vmatmul.mubr.f32.gmra.mxu0 %v4939
      %v4941 = vpop.f32.mrf.mxu0
      %v4942 = vadd.f32 %v4759, %v4941
      %v4943 = vpop.f32.mrf.mxu0
      %4944 = vdwg.mxu0
      %4945 = vmatprep.subr.mxu0 0.0
      %4946 = vmatpush1.msra.mxu0 0.0
      %4947 = vmatprep.subr.mxu0 0.0
      %4948 = vmatpush1.msra.mxu0 0.0
      %4949 = vmatprep.subr.mxu0 0.0
      %4950 = vmatpush1.msra.mxu0 0.0
      %4951 = vmatprep.subr.mxu0 0.0
      %4952 = vmatpush1.msra.mxu0 0.0
      %4953 = vmatprep.subr.mxu0 0.0
      %4954 = vmatpush1.msra.mxu0 0.0
      %4955 = vmatprep.subr.mxu0 0.0
      %4956 = vmatpush1.msra.mxu0 0.0
      %4957 = vmatprep.subr.mxu0 0.0
      %4958 = vmatpush1.msra.mxu0 0.0
      %4959 = vmatprep.subr.mxu0 0.0
      %4960 = vmatpush1.msra.mxu0 0.0
      %4961 = vmatprep.subr.mxu0 0.0
      %4962 = vmatpush1.msra.mxu0 0.0
      %4963 = vmatprep.subr.mxu0 0.0
      %4964 = vmatpush1.msra.mxu0 0.0
      %4965 = vmatprep.subr.mxu0 0.0
      %4966 = vmatpush1.msra.mxu0 0.0
      %4967 = vmatprep.subr.mxu0 0.0
      %4968 = vmatpush1.msra.mxu0 0.0
      %4969 = vmatprep.subr.mxu0 0.0
      %4970 = vmatpush1.msra.mxu0 0.0
      %4971 = vmatprep.subr.mxu0 0.0
      %v4972 = vand.u32 %v340, 4294901760
      %4973 = vmatpush1.msra.mxu0 %v4972
      %4974 = vmatprep.subr.mxu0 0.0
      %v4975 = vand.u32 %v171, 4294901760
      %4976 = vmatpush1.msra.mxu0 %v4975
      %4977 = vmatprep.subr.mxu0 0.0
      %v4978 = vand.u32 %v170, 4294901760
      %4979 = vmatpush1.msra.mxu0 %v4978
      %4980 = vmatprep.subr.mxu0 0.0
      %4981 = vmatpush2.msra.mxu0 0.0
      %4982 = vmatprep.subr.mxu0 0.0
      %4983 = vmatpush2.msra.mxu0 0.0
      %4984 = vmatprep.subr.mxu0 0.0
      %4985 = vmatpush2.msra.mxu0 0.0
      %4986 = vmatprep.subr.mxu0 0.0
      %4987 = vmatpush2.msra.mxu0 0.0
      %4988 = vmatprep.subr.mxu0 0.0
      %4989 = vmatpush2.msra.mxu0 0.0
      %4990 = vmatprep.subr.mxu0 0.0
      %4991 = vmatpush2.msra.mxu0 0.0
      %4992 = vmatprep.subr.mxu0 0.0
      %4993 = vmatpush2.msra.mxu0 0.0
      %4994 = vmatprep.subr.mxu0 0.0
      %4995 = vmatpush2.msra.mxu0 0.0
      %4996 = vmatprep.subr.mxu0 0.0
      %4997 = vmatpush2.msra.mxu0 0.0
      %4998 = vmatprep.subr.mxu0 0.0
      %4999 = vmatpush2.msra.mxu0 0.0
      %5000 = vmatprep.subr.mxu0 0.0
      %5001 = vmatpush2.msra.mxu0 0.0
      %5002 = vmatprep.subr.mxu0 0.0
      %5003 = vmatpush2.msra.mxu0 0.0
      %5004 = vmatprep.subr.mxu0 0.0
      %5005 = vmatpush2.msra.mxu0 0.0
      %5006 = vmatprep.subr.mxu0 0.0
      %5007 = vmatpush2.msra.mxu0 0.0
      %5008 = vmatprep.subr.mxu0 0.0
      %5009 = vmatpush2.msra.mxu0 0.0
      %5010 = vmatprep.subr.mxu0 0.0
      %5011 = vmatpush2.msra.mxu0 0.0
      %5012 = vmatprep.mubr.f32.mxu0 0.0
      %v5013 = vand.u32 %v4311, 4294901760
      %v5014 = vsub.f32 %v4311, %v5013
      %v5015 = vand.u32 %v5014, 4294901760
      %5016 = vmatmul.mubr.f32.gmra.mxu0 %v5015
      %v5017 = vpop.f32.mrf.mxu0
      %v5018 = vadd.f32 %v4837, %v5017
      %v5019 = vpop.f32.mrf.mxu0
      %5020 = vmatprep.mubr.f32.mxu0 0.0
      %v5021 = vand.u32 %v4314, 4294901760
      %v5022 = vsub.f32 %v4314, %v5021
      %v5023 = vand.u32 %v5022, 4294901760
      %5024 = vmatmul.mubr.f32.gmra.mxu0 %v5023
      %v5025 = vpop.f32.mrf.mxu0
      %v5026 = vadd.f32 %v4844, %v5025
      %v5027 = vpop.f32.mrf.mxu0
      %5028 = vmatprep.mubr.f32.mxu0 0.0
      %v5029 = vand.u32 %v4317, 4294901760
      %v5030 = vsub.f32 %v4317, %v5029
      %v5031 = vand.u32 %v5030, 4294901760
      %5032 = vmatmul.mubr.f32.gmra.mxu0 %v5031
      %v5033 = vpop.f32.mrf.mxu0
      %v5034 = vadd.f32 %v4851, %v5033
      %v5035 = vpop.f32.mrf.mxu0
      %5036 = vmatprep.mubr.f32.mxu0 0.0
      %v5037 = vand.u32 %v4320, 4294901760
      %v5038 = vsub.f32 %v4320, %v5037
      %v5039 = vand.u32 %v5038, 4294901760
      %5040 = vmatmul.mubr.f32.gmra.mxu0 %v5039
      %v5041 = vpop.f32.mrf.mxu0
      %v5042 = vadd.f32 %v4858, %v5041
      %v5043 = vpop.f32.mrf.mxu0
      %5044 = vmatprep.mubr.f32.mxu0 0.0
      %v5045 = vand.u32 %v4323, 4294901760
      %v5046 = vsub.f32 %v4323, %v5045
      %v5047 = vand.u32 %v5046, 4294901760
      %5048 = vmatmul.mubr.f32.gmra.mxu0 %v5047
      %v5049 = vpop.f32.mrf.mxu0
      %v5050 = vadd.f32 %v4865, %v5049
      %v5051 = vpop.f32.mrf.mxu0
      %5052 = vmatprep.mubr.f32.mxu0 0.0
      %v5053 = vand.u32 %v4326, 4294901760
      %v5054 = vsub.f32 %v4326, %v5053
      %v5055 = vand.u32 %v5054, 4294901760
      %5056 = vmatmul.mubr.f32.gmra.mxu0 %v5055
      %v5057 = vpop.f32.mrf.mxu0
      %v5058 = vadd.f32 %v4872, %v5057
      %v5059 = vpop.f32.mrf.mxu0
      %5060 = vmatprep.mubr.f32.mxu0 0.0
      %v5061 = vand.u32 %v4329, 4294901760
      %v5062 = vsub.f32 %v4329, %v5061
      %v5063 = vand.u32 %v5062, 4294901760
      %5064 = vmatmul.mubr.f32.gmra.mxu0 %v5063
      %v5065 = vpop.f32.mrf.mxu0
      %v5066 = vadd.f32 %v4879, %v5065
      %v5067 = vpop.f32.mrf.mxu0
      %5068 = vmatprep.mubr.f32.mxu0 0.0
      %v5069 = vand.u32 %v4332, 4294901760
      %v5070 = vsub.f32 %v4332, %v5069
      %v5071 = vand.u32 %v5070, 4294901760
      %5072 = vmatmul.mubr.f32.gmra.mxu0 %v5071
      %v5073 = vpop.f32.mrf.mxu0
      %v5074 = vadd.f32 %v4886, %v5073
      %v5075 = vpop.f32.mrf.mxu0
      %5076 = vmatprep.mubr.f32.mxu0 0.0
      %v5077 = vand.u32 %v4335, 4294901760
      %v5078 = vsub.f32 %v4335, %v5077
      %v5079 = vand.u32 %v5078, 4294901760
      %5080 = vmatmul.mubr.f32.gmra.mxu0 %v5079
      %v5081 = vpop.f32.mrf.mxu0
      %v5082 = vadd.f32 %v4893, %v5081
      %v5083 = vpop.f32.mrf.mxu0
      %5084 = vmatprep.mubr.f32.mxu0 0.0
      %v5085 = vand.u32 %v4338, 4294901760
      %v5086 = vsub.f32 %v4338, %v5085
      %v5087 = vand.u32 %v5086, 4294901760
      %5088 = vmatmul.mubr.f32.gmra.mxu0 %v5087
      %v5089 = vpop.f32.mrf.mxu0
      %v5090 = vadd.f32 %v4900, %v5089
      %v5091 = vpop.f32.mrf.mxu0
      %5092 = vmatprep.mubr.f32.mxu0 0.0
      %v5093 = vand.u32 %v4341, 4294901760
      %v5094 = vsub.f32 %v4341, %v5093
      %v5095 = vand.u32 %v5094, 4294901760
      %5096 = vmatmul.mubr.f32.gmra.mxu0 %v5095
      %v5097 = vpop.f32.mrf.mxu0
      %v5098 = vadd.f32 %v4907, %v5097
      %v5099 = vpop.f32.mrf.mxu0
      %5100 = vmatprep.mubr.f32.mxu0 0.0
      %v5101 = vand.u32 %v4344, 4294901760
      %v5102 = vsub.f32 %v4344, %v5101
      %v5103 = vand.u32 %v5102, 4294901760
      %5104 = vmatmul.mubr.f32.gmra.mxu0 %v5103
      %v5105 = vpop.f32.mrf.mxu0
      %v5106 = vadd.f32 %v4914, %v5105
      %v5107 = vpop.f32.mrf.mxu0
      %5108 = vmatprep.mubr.f32.mxu0 0.0
      %v5109 = vand.u32 %v4347, 4294901760
      %v5110 = vsub.f32 %v4347, %v5109
      %v5111 = vand.u32 %v5110, 4294901760
      %5112 = vmatmul.mubr.f32.gmra.mxu0 %v5111
      %v5113 = vpop.f32.mrf.mxu0
      %v5114 = vadd.f32 %v4921, %v5113
      %v5115 = vpop.f32.mrf.mxu0
      %5116 = vmatprep.mubr.f32.mxu0 0.0
      %v5117 = vand.u32 %v4350, 4294901760
      %v5118 = vsub.f32 %v4350, %v5117
      %v5119 = vand.u32 %v5118, 4294901760
      %5120 = vmatmul.mubr.f32.gmra.mxu0 %v5119
      %v5121 = vpop.f32.mrf.mxu0
      %v5122 = vadd.f32 %v4928, %v5121
      %v5123 = vpop.f32.mrf.mxu0
      %5124 = vmatprep.mubr.f32.mxu0 0.0
      %v5125 = vand.u32 %v4353, 4294901760
      %v5126 = vsub.f32 %v4353, %v5125
      %v5127 = vand.u32 %v5126, 4294901760
      %5128 = vmatmul.mubr.f32.gmra.mxu0 %v5127
      %v5129 = vpop.f32.mrf.mxu0
      %v5130 = vadd.f32 %v4935, %v5129
      %v5131 = vpop.f32.mrf.mxu0
      %5132 = vmatprep.mubr.f32.mxu0 0.0
      %v5133 = vand.u32 %v4356, 4294901760
      %v5134 = vsub.f32 %v4356, %v5133
      %v5135 = vand.u32 %v5134, 4294901760
      %5136 = vmatmul.mubr.f32.gmra.mxu0 %v5135
      %v5137 = vpop.f32.mrf.mxu0
      %v5138 = vadd.f32 %v4942, %v5137
      %v5139 = vpop.f32.mrf.mxu0
      %5140 = vdwg.mxu0
      %5141 = vmatprep.subr.mxu0 0.0
      %5142 = vmatpush1.msra.mxu0 0.0
      %5143 = vmatprep.subr.mxu0 0.0
      %5144 = vmatpush1.msra.mxu0 0.0
      %5145 = vmatprep.subr.mxu0 0.0
      %5146 = vmatpush1.msra.mxu0 0.0
      %5147 = vmatprep.subr.mxu0 0.0
      %5148 = vmatpush1.msra.mxu0 0.0
      %5149 = vmatprep.subr.mxu0 0.0
      %5150 = vmatpush1.msra.mxu0 0.0
      %5151 = vmatprep.subr.mxu0 0.0
      %5152 = vmatpush1.msra.mxu0 0.0
      %5153 = vmatprep.subr.mxu0 0.0
      %5154 = vmatpush1.msra.mxu0 0.0
      %5155 = vmatprep.subr.mxu0 0.0
      %5156 = vmatpush1.msra.mxu0 0.0
      %5157 = vmatprep.subr.mxu0 0.0
      %5158 = vmatpush1.msra.mxu0 0.0
      %5159 = vmatprep.subr.mxu0 0.0
      %5160 = vmatpush1.msra.mxu0 0.0
      %5161 = vmatprep.subr.mxu0 0.0
      %5162 = vmatpush1.msra.mxu0 0.0
      %5163 = vmatprep.subr.mxu0 0.0
      %5164 = vmatpush1.msra.mxu0 0.0
      %5165 = vmatprep.subr.mxu0 0.0
      %5166 = vmatpush1.msra.mxu0 0.0
      %5167 = vmatprep.subr.mxu0 0.0
      %v5168 = vand.u32 %v340, 4294901760
      %v5169 = vsub.f32 %v340, %v5168
      %v5170 = vand.u32 %v5169, 4294901760
      %5171 = vmatpush1.msra.mxu0 %v5170
      %5172 = vmatprep.subr.mxu0 0.0
      %v5173 = vand.u32 %v171, 4294901760
      %v5174 = vsub.f32 %v171, %v5173
      %v5175 = vand.u32 %v5174, 4294901760
      %5176 = vmatpush1.msra.mxu0 %v5175
      %5177 = vmatprep.subr.mxu0 0.0
      %v5178 = vand.u32 %v170, 4294901760
      %v5179 = vsub.f32 %v170, %v5178
      %v5180 = vand.u32 %v5179, 4294901760
      %5181 = vmatpush1.msra.mxu0 %v5180
      %5182 = vmatprep.subr.mxu0 0.0
      %5183 = vmatpush2.msra.mxu0 0.0
      %5184 = vmatprep.subr.mxu0 0.0
      %5185 = vmatpush2.msra.mxu0 0.0
      %5186 = vmatprep.subr.mxu0 0.0
      %5187 = vmatpush2.msra.mxu0 0.0
      %5188 = vmatprep.subr.mxu0 0.0
      %5189 = vmatpush2.msra.mxu0 0.0
      %5190 = vmatprep.subr.mxu0 0.0
      %5191 = vmatpush2.msra.mxu0 0.0
      %5192 = vmatprep.subr.mxu0 0.0
      %5193 = vmatpush2.msra.mxu0 0.0
      %5194 = vmatprep.subr.mxu0 0.0
      %5195 = vmatpush2.msra.mxu0 0.0
      %5196 = vmatprep.subr.mxu0 0.0
      %5197 = vmatpush2.msra.mxu0 0.0
      %5198 = vmatprep.subr.mxu0 0.0
      %5199 = vmatpush2.msra.mxu0 0.0
      %5200 = vmatprep.subr.mxu0 0.0
      %5201 = vmatpush2.msra.mxu0 0.0
      %5202 = vmatprep.subr.mxu0 0.0
      %5203 = vmatpush2.msra.mxu0 0.0
      %5204 = vmatprep.subr.mxu0 0.0
      %5205 = vmatpush2.msra.mxu0 0.0
      %5206 = vmatprep.subr.mxu0 0.0
      %5207 = vmatpush2.msra.mxu0 0.0
      %5208 = vmatprep.subr.mxu0 0.0
      %5209 = vmatpush2.msra.mxu0 0.0
      %5210 = vmatprep.subr.mxu0 0.0
      %5211 = vmatpush2.msra.mxu0 0.0
      %5212 = vmatprep.subr.mxu0 0.0
      %5213 = vmatpush2.msra.mxu0 0.0
      %5214 = vmatprep.mubr.f32.mxu0 0.0
      %v5215 = vand.u32 %v4311, 4294901760
      %5216 = vmatmul.mubr.f32.gmra.mxu0 %v5215
      %v5217 = vpop.f32.mrf.mxu0
      %v5218 = vadd.f32 %v5018, %v5217
      %v5219 = vpop.f32.mrf.mxu0
      %5220 = vmatprep.mubr.f32.mxu0 0.0
      %v5221 = vand.u32 %v4314, 4294901760
      %5222 = vmatmul.mubr.f32.gmra.mxu0 %v5221
      %v5223 = vpop.f32.mrf.mxu0
      %v5224 = vadd.f32 %v5026, %v5223
      %v5225 = vpop.f32.mrf.mxu0
      %5226 = vmatprep.mubr.f32.mxu0 0.0
      %v5227 = vand.u32 %v4317, 4294901760
      %5228 = vmatmul.mubr.f32.gmra.mxu0 %v5227
      %v5229 = vpop.f32.mrf.mxu0
      %v5230 = vadd.f32 %v5034, %v5229
      %v5231 = vpop.f32.mrf.mxu0
      %5232 = vmatprep.mubr.f32.mxu0 0.0
      %v5233 = vand.u32 %v4320, 4294901760
      %5234 = vmatmul.mubr.f32.gmra.mxu0 %v5233
      %v5235 = vpop.f32.mrf.mxu0
      %v5236 = vadd.f32 %v5042, %v5235
      %v5237 = vpop.f32.mrf.mxu0
      %5238 = vmatprep.mubr.f32.mxu0 0.0
      %v5239 = vand.u32 %v4323, 4294901760
      %5240 = vmatmul.mubr.f32.gmra.mxu0 %v5239
      %v5241 = vpop.f32.mrf.mxu0
      %v5242 = vadd.f32 %v5050, %v5241
      %v5243 = vpop.f32.mrf.mxu0
      %5244 = vmatprep.mubr.f32.mxu0 0.0
      %v5245 = vand.u32 %v4326, 4294901760
      %5246 = vmatmul.mubr.f32.gmra.mxu0 %v5245
      %v5247 = vpop.f32.mrf.mxu0
      %v5248 = vadd.f32 %v5058, %v5247
      %v5249 = vpop.f32.mrf.mxu0
      %5250 = vmatprep.mubr.f32.mxu0 0.0
      %v5251 = vand.u32 %v4329, 4294901760
      %5252 = vmatmul.mubr.f32.gmra.mxu0 %v5251
      %v5253 = vpop.f32.mrf.mxu0
      %v5254 = vadd.f32 %v5066, %v5253
      %v5255 = vpop.f32.mrf.mxu0
      %5256 = vmatprep.mubr.f32.mxu0 0.0
      %v5257 = vand.u32 %v4332, 4294901760
      %5258 = vmatmul.mubr.f32.gmra.mxu0 %v5257
      %v5259 = vpop.f32.mrf.mxu0
      %v5260 = vadd.f32 %v5074, %v5259
      %v5261 = vpop.f32.mrf.mxu0
      %5262 = vmatprep.mubr.f32.mxu0 0.0
      %v5263 = vand.u32 %v4335, 4294901760
      %5264 = vmatmul.mubr.f32.gmra.mxu0 %v5263
      %v5265 = vpop.f32.mrf.mxu0
      %v5266 = vadd.f32 %v5082, %v5265
      %v5267 = vpop.f32.mrf.mxu0
      %5268 = vmatprep.mubr.f32.mxu0 0.0
      %v5269 = vand.u32 %v4338, 4294901760
      %5270 = vmatmul.mubr.f32.gmra.mxu0 %v5269
      %v5271 = vpop.f32.mrf.mxu0
      %v5272 = vadd.f32 %v5090, %v5271
      %v5273 = vpop.f32.mrf.mxu0
      %5274 = vmatprep.mubr.f32.mxu0 0.0
      %v5275 = vand.u32 %v4341, 4294901760
      %5276 = vmatmul.mubr.f32.gmra.mxu0 %v5275
      %v5277 = vpop.f32.mrf.mxu0
      %v5278 = vadd.f32 %v5098, %v5277
      %v5279 = vpop.f32.mrf.mxu0
      %5280 = vmatprep.mubr.f32.mxu0 0.0
      %v5281 = vand.u32 %v4344, 4294901760
      %5282 = vmatmul.mubr.f32.gmra.mxu0 %v5281
      %v5283 = vpop.f32.mrf.mxu0
      %v5284 = vadd.f32 %v5106, %v5283
      %v5285 = vpop.f32.mrf.mxu0
      %5286 = vmatprep.mubr.f32.mxu0 0.0
      %v5287 = vand.u32 %v4347, 4294901760
      %5288 = vmatmul.mubr.f32.gmra.mxu0 %v5287
      %v5289 = vpop.f32.mrf.mxu0
      %v5290 = vadd.f32 %v5114, %v5289
      %v5291 = vpop.f32.mrf.mxu0
      %5292 = vmatprep.mubr.f32.mxu0 0.0
      %v5293 = vand.u32 %v4350, 4294901760
      %5294 = vmatmul.mubr.f32.gmra.mxu0 %v5293
      %v5295 = vpop.f32.mrf.mxu0
      %v5296 = vadd.f32 %v5122, %v5295
      %v5297 = vpop.f32.mrf.mxu0
      %5298 = vmatprep.mubr.f32.mxu0 0.0
      %v5299 = vand.u32 %v4353, 4294901760
      %5300 = vmatmul.mubr.f32.gmra.mxu0 %v5299
      %v5301 = vpop.f32.mrf.mxu0
      %v5302 = vadd.f32 %v5130, %v5301
      %v5303 = vpop.f32.mrf.mxu0
      %5304 = vmatprep.mubr.f32.mxu0 0.0
      %v5305 = vand.u32 %v4356, 4294901760
      %5306 = vmatmul.mubr.f32.gmra.mxu0 %v5305
      %v5307 = vpop.f32.mrf.mxu0
      %v5308 = vadd.f32 %v5138, %v5307
      %v5309 = vpop.f32.mrf.mxu0
      %5310 = vdwg.mxu0
      %5311 = vmatprep.subr.mxu0 0.0
      %5312 = vmatpush1.msra.mxu0 0.0
      %5313 = vmatprep.subr.mxu0 0.0
      %5314 = vmatpush1.msra.mxu0 0.0
      %5315 = vmatprep.subr.mxu0 0.0
      %5316 = vmatpush1.msra.mxu0 0.0
      %5317 = vmatprep.subr.mxu0 0.0
      %5318 = vmatpush1.msra.mxu0 0.0
      %5319 = vmatprep.subr.mxu0 0.0
      %5320 = vmatpush1.msra.mxu0 0.0
      %5321 = vmatprep.subr.mxu0 0.0
      %5322 = vmatpush1.msra.mxu0 0.0
      %5323 = vmatprep.subr.mxu0 0.0
      %5324 = vmatpush1.msra.mxu0 0.0
      %5325 = vmatprep.subr.mxu0 0.0
      %5326 = vmatpush1.msra.mxu0 0.0
      %5327 = vmatprep.subr.mxu0 0.0
      %5328 = vmatpush1.msra.mxu0 0.0
      %5329 = vmatprep.subr.mxu0 0.0
      %5330 = vmatpush1.msra.mxu0 0.0
      %5331 = vmatprep.subr.mxu0 0.0
      %5332 = vmatpush1.msra.mxu0 0.0
      %5333 = vmatprep.subr.mxu0 0.0
      %5334 = vmatpush1.msra.mxu0 0.0
      %5335 = vmatprep.subr.mxu0 0.0
      %5336 = vmatpush1.msra.mxu0 0.0
      %5337 = vmatprep.subr.mxu0 0.0
      %v5338 = vand.u32 %v340, 4294901760
      %5339 = vmatpush1.msra.mxu0 %v5338
      %5340 = vmatprep.subr.mxu0 0.0
      %v5341 = vand.u32 %v171, 4294901760
      %5342 = vmatpush1.msra.mxu0 %v5341
      %5343 = vmatprep.subr.mxu0 0.0
      %v5344 = vand.u32 %v170, 4294901760
      %5345 = vmatpush1.msra.mxu0 %v5344
      %5346 = vmatprep.subr.mxu0 0.0
      %5347 = vmatpush2.msra.mxu0 0.0
      %5348 = vmatprep.subr.mxu0 0.0
      %5349 = vmatpush2.msra.mxu0 0.0
      %5350 = vmatprep.subr.mxu0 0.0
      %5351 = vmatpush2.msra.mxu0 0.0
      %5352 = vmatprep.subr.mxu0 0.0
      %5353 = vmatpush2.msra.mxu0 0.0
      %5354 = vmatprep.subr.mxu0 0.0
      %5355 = vmatpush2.msra.mxu0 0.0
      %5356 = vmatprep.subr.mxu0 0.0
      %5357 = vmatpush2.msra.mxu0 0.0
      %5358 = vmatprep.subr.mxu0 0.0
      %5359 = vmatpush2.msra.mxu0 0.0
      %5360 = vmatprep.subr.mxu0 0.0
      %5361 = vmatpush2.msra.mxu0 0.0
      %5362 = vmatprep.subr.mxu0 0.0
      %5363 = vmatpush2.msra.mxu0 0.0
      %5364 = vmatprep.subr.mxu0 0.0
      %5365 = vmatpush2.msra.mxu0 0.0
      %5366 = vmatprep.subr.mxu0 0.0
      %5367 = vmatpush2.msra.mxu0 0.0
      %5368 = vmatprep.subr.mxu0 0.0
      %5369 = vmatpush2.msra.mxu0 0.0
      %5370 = vmatprep.subr.mxu0 0.0
      %5371 = vmatpush2.msra.mxu0 0.0
      %5372 = vmatprep.subr.mxu0 0.0
      %5373 = vmatpush2.msra.mxu0 0.0
      %5374 = vmatprep.subr.mxu0 0.0
      %5375 = vmatpush2.msra.mxu0 0.0
      %5376 = vmatprep.subr.mxu0 0.0
      %5377 = vmatpush2.msra.mxu0 0.0
      %5378 = vmatprep.mubr.f32.mxu0 0.0
      %v5379 = vand.u32 %v4311, 4294901760
      %5380 = vmatmul.mubr.f32.gmra.mxu0 %v5379
      %v5381 = vpop.f32.mrf.mxu0
      %v5382 = vadd.f32 %v5218, %v5381
      %v5383 = vpop.f32.mrf.mxu0
      %5384 = vmatprep.mubr.f32.mxu0 0.0
      %v5385 = vand.u32 %v4314, 4294901760
      %5386 = vmatmul.mubr.f32.gmra.mxu0 %v5385
      %v5387 = vpop.f32.mrf.mxu0
      %v5388 = vadd.f32 %v5224, %v5387
      %v5389 = vpop.f32.mrf.mxu0
      %5390 = vmatprep.mubr.f32.mxu0 0.0
      %v5391 = vand.u32 %v4317, 4294901760
      %5392 = vmatmul.mubr.f32.gmra.mxu0 %v5391
      %v5393 = vpop.f32.mrf.mxu0
      %v5394 = vadd.f32 %v5230, %v5393
      %v5395 = vpop.f32.mrf.mxu0
      %5396 = vmatprep.mubr.f32.mxu0 0.0
      %v5397 = vand.u32 %v4320, 4294901760
      %5398 = vmatmul.mubr.f32.gmra.mxu0 %v5397
      %v5399 = vpop.f32.mrf.mxu0
      %v5400 = vadd.f32 %v5236, %v5399
      %v5401 = vpop.f32.mrf.mxu0
      %5402 = vmatprep.mubr.f32.mxu0 0.0
      %v5403 = vand.u32 %v4323, 4294901760
      %5404 = vmatmul.mubr.f32.gmra.mxu0 %v5403
      %v5405 = vpop.f32.mrf.mxu0
      %v5406 = vadd.f32 %v5242, %v5405
      %v5407 = vpop.f32.mrf.mxu0
      %5408 = vmatprep.mubr.f32.mxu0 0.0
      %v5409 = vand.u32 %v4326, 4294901760
      %5410 = vmatmul.mubr.f32.gmra.mxu0 %v5409
      %v5411 = vpop.f32.mrf.mxu0
      %v5412 = vadd.f32 %v5248, %v5411
      %v5413 = vpop.f32.mrf.mxu0
      %5414 = vmatprep.mubr.f32.mxu0 0.0
      %v5415 = vand.u32 %v4329, 4294901760
      %5416 = vmatmul.mubr.f32.gmra.mxu0 %v5415
      %v5417 = vpop.f32.mrf.mxu0
      %v5418 = vadd.f32 %v5254, %v5417
      %v5419 = vpop.f32.mrf.mxu0
      %5420 = vmatprep.mubr.f32.mxu0 0.0
      %v5421 = vand.u32 %v4332, 4294901760
      %5422 = vmatmul.mubr.f32.gmra.mxu0 %v5421
      %v5423 = vpop.f32.mrf.mxu0
      %v5424 = vadd.f32 %v5260, %v5423
      %v5425 = vpop.f32.mrf.mxu0
      %5426 = vmatprep.mubr.f32.mxu0 0.0
      %v5427 = vand.u32 %v4335, 4294901760
      %5428 = vmatmul.mubr.f32.gmra.mxu0 %v5427
      %v5429 = vpop.f32.mrf.mxu0
      %v5430 = vadd.f32 %v5266, %v5429
      %v5431 = vpop.f32.mrf.mxu0
      %5432 = vmatprep.mubr.f32.mxu0 0.0
      %v5433 = vand.u32 %v4338, 4294901760
      %5434 = vmatmul.mubr.f32.gmra.mxu0 %v5433
      %v5435 = vpop.f32.mrf.mxu0
      %v5436 = vadd.f32 %v5272, %v5435
      %v5437 = vpop.f32.mrf.mxu0
      %5438 = vmatprep.mubr.f32.mxu0 0.0
      %v5439 = vand.u32 %v4341, 4294901760
      %5440 = vmatmul.mubr.f32.gmra.mxu0 %v5439
      %v5441 = vpop.f32.mrf.mxu0
      %v5442 = vadd.f32 %v5278, %v5441
      %v5443 = vpop.f32.mrf.mxu0
      %5444 = vmatprep.mubr.f32.mxu0 0.0
      %v5445 = vand.u32 %v4344, 4294901760
      %5446 = vmatmul.mubr.f32.gmra.mxu0 %v5445
      %v5447 = vpop.f32.mrf.mxu0
      %v5448 = vadd.f32 %v5284, %v5447
      %v5449 = vpop.f32.mrf.mxu0
      %5450 = vmatprep.mubr.f32.mxu0 0.0
      %v5451 = vand.u32 %v4347, 4294901760
      %5452 = vmatmul.mubr.f32.gmra.mxu0 %v5451
      %v5453 = vpop.f32.mrf.mxu0
      %v5454 = vadd.f32 %v5290, %v5453
      %v5455 = vpop.f32.mrf.mxu0
      %5456 = vmatprep.mubr.f32.mxu0 0.0
      %v5457 = vand.u32 %v4350, 4294901760
      %5458 = vmatmul.mubr.f32.gmra.mxu0 %v5457
      %v5459 = vpop.f32.mrf.mxu0
      %v5460 = vadd.f32 %v5296, %v5459
      %v5461 = vpop.f32.mrf.mxu0
      %5462 = vmatprep.mubr.f32.mxu0 0.0
      %v5463 = vand.u32 %v4353, 4294901760
      %5464 = vmatmul.mubr.f32.gmra.mxu0 %v5463
      %v5465 = vpop.f32.mrf.mxu0
      %v5466 = vadd.f32 %v5302, %v5465
      %v5467 = vpop.f32.mrf.mxu0
      %5468 = vmatprep.mubr.f32.mxu0 0.0
      %v5469 = vand.u32 %v4356, 4294901760
      %5470 = vmatmul.mubr.f32.gmra.mxu0 %v5469
      %v5471 = vpop.f32.mrf.mxu0
      %v5472 = vadd.f32 %v5308, %v5471
      %v5473 = vpop.f32.mrf.mxu0
      %5474 = vdwg.mxu0
      %5491 = vrot.lane.b32.xlu0 %v5382, 96
      %v5492 = vpop.permute.xlu0 %5491
      %5493 = vrot.lane.b32.xlu0 %v5388, 96
      %v5494 = vpop.permute.xlu0 %5493
      %5495 = vrot.lane.b32.xlu0 %v5394, 96
      %v5496 = vpop.permute.xlu0 %5495
      %5497 = vrot.lane.b32.xlu0 %v5400, 96
      %v5498 = vpop.permute.xlu0 %5497
      %5499 = vrot.lane.b32.xlu0 %v5406, 96
      %v5500 = vpop.permute.xlu0 %5499
      %5501 = vrot.lane.b32.xlu0 %v5412, 96
      %v5502 = vpop.permute.xlu0 %5501
      %5503 = vrot.lane.b32.xlu0 %v5418, 96
      %v5504 = vpop.permute.xlu0 %5503
      %5505 = vrot.lane.b32.xlu0 %v5424, 96
      %v5506 = vpop.permute.xlu0 %5505
      %5507 = vrot.lane.b32.xlu0 %v5430, 96
      %v5508 = vpop.permute.xlu0 %5507
      %5509 = vrot.lane.b32.xlu0 %v5436, 96
      %v5510 = vpop.permute.xlu0 %5509
      %5511 = vrot.lane.b32.xlu0 %v5442, 96
      %v5512 = vpop.permute.xlu0 %5511
      %5513 = vrot.lane.b32.xlu0 %v5448, 96
      %v5514 = vpop.permute.xlu0 %5513
      %5515 = vrot.lane.b32.xlu0 %v5454, 96
      %v5516 = vpop.permute.xlu0 %5515
      %5517 = vrot.lane.b32.xlu0 %v5460, 96
      %v5518 = vpop.permute.xlu0 %5517
      %5519 = vrot.lane.b32.xlu0 %v5466, 96
      %v5520 = vpop.permute.xlu0 %5519
      %5521 = vrot.lane.b32.xlu0 %v5472, 96
      %v5522 = vpop.permute.xlu0 %5521
      %vm5539 = vcmask 1048320
      %5540 = vst.msk [vmem:[%s152] sm:$0xff] %vm5539, %v5492
      %5541 = vst.msk [vmem:[%s152 + $0x8] sm:$0xff] %vm5539, %v5494
      %5542 = vst.msk [vmem:[%s152 + $0x10] sm:$0xff] %vm5539, %v5496
      %5543 = vst.msk [vmem:[%s152 + $0x18] sm:$0xff] %vm5539, %v5498
      %5544 = vst.msk [vmem:[%s152 + $0x20] sm:$0xff] %vm5539, %v5500
      %5545 = vst.msk [vmem:[%s152 + $0x28] sm:$0xff] %vm5539, %v5502
      %5546 = vst.msk [vmem:[%s152 + $0x30] sm:$0xff] %vm5539, %v5504
      %5547 = vst.msk [vmem:[%s152 + $0x38] sm:$0xff] %vm5539, %v5506
      %5548 = vst.msk [vmem:[%s152 + $0x40] sm:$0xff] %vm5539, %v5508
      %5549 = vst.msk [vmem:[%s152 + $0x48] sm:$0xff] %vm5539, %v5510
      %5550 = vst.msk [vmem:[%s152 + $0x50] sm:$0xff] %vm5539, %v5512
      %5551 = vst.msk [vmem:[%s152 + $0x58] sm:$0xff] %vm5539, %v5514
      %5552 = vst.msk [vmem:[%s152 + $0x60] sm:$0xff] %vm5539, %v5516
      %5553 = vst.msk [vmem:[%s152 + $0x68] sm:$0xff] %vm5539, %v5518
      %5554 = vst.msk [vmem:[%s152 + $0x70] sm:$0xff] %vm5539, %v5520
      %5555 = vst.msk [vmem:[%s152 + $0x78] sm:$0xff] %vm5539, %v5522
      %s5556 = smul.u32 16, %s20
      %p5557 = scmp.lt.s32.totalorder %s5556, 63
      %s5558 = scalar_select %p5557, %s5556, 63
      %s5559 = smul.addr %s5558, 8
      %s5560 = scalar_lea.vmem %s3, %s5559
      // Predicated region
      $region29: #{features_embedding.1} parent=27 // pred_check
        %p5561 = pneg %p85
      $region30: #{features_embedding.1} parent=27 // pred_check_branch
        %5563 = sbr.rel (%p5561) target = $region32
      $region31: #{features_embedding.1} parent=27 // pred_region
        %s5564 = smul.u32 16, %s20
      $region32: #{features_embedding.1} parent=27 // pred_fallthru
        _
    $region28: #{features_embedding.1} parent=5 // pred_fallthru
      _
    %p5565 = scmp.le.s32.totalorder 2, %s15
    // Predicated region
    $region33: #{features_embedding.1} parent=5 // pred_check
      %p5566 = pneg %p5565
    $region34: #{features_embedding.1} parent=5 // pred_check_branch
      %5568 = sbr.rel (%p5566) target = $region36
    $region35: #{features_embedding.1} parent=5 // pred_region
      %s5569 = ssub.s32 %s15, 2
      // Predicated region
      $region37: #{features_embedding.1} parent=35 // pred_check
        %p5570 = pneg %p91
      $region38: #{features_embedding.1} parent=35 // pred_check_branch
        %5572 = sbr.rel (%p5570) target = $region40
      $region39: #{features_embedding.1} parent=35 // pred_region
        %s5573 = smul.u32 16, %s21
        %p5574 = scmp.lt.s32.totalorder %s5573, 63
        %s5575 = scalar_select %p5574, %s5573, 63
        %s5576 = smul.addr %s5575, 8
        %s5577 = scalar_lea.vmem %s3, %s5576
      $region40: #{features_embedding.1} parent=35 // pred_fallthru
        _
    $region36: #{features_embedding.1} parent=5 // pred_fallthru
      _
  $region6: #{features_embedding.1} parent=0 // loop_footer
    %s19 = sadd.s32 1, %s15
  $region7: #{features_embedding.1} parent=0 // loop_footer_branch
    %14 = sbr.rel target = $region3
  $region8: #{features_embedding.1} parent=0 // loop_exit
    _

</llo_original>
